<compile_context>
chip_gen: v7x
topology: tpu7x:2x2x1
jax: 0.10.0
libtpu: 0.0.40
codegen_flags: <defaults>
</compile_context>

<pallas_src>
import functools

import jax
import jax.numpy as jnp
from jax.experimental import pallas as pl
from jax.experimental.pallas import tpu as pltpu

_LANE = 128


def _round_up(v, m):
    return (v + m - 1) // m * m


def _pick_tm(np_nodes):
    """Row-block size: big tiles for efficiency, >=2 blocks for v7x megacore,
    capped at 128 for very large graphs (v7x 64 MiB VMEM)."""
    tm = 256 if np_nodes % 256 == 0 else 128
    tm = min(tm, np_nodes)
    if np_nodes // tm < 2:          # give both v7x TensorCores work on small graphs
        tm = max(tm // 2, 8)
    if np_nodes >= 2048:            # keep per-step live set well under 64 MiB
        tm = min(tm, 128)
    return tm


def _gatv2_relu_kernel(heads, chan, ga_ref, gat_ref, gm_ref, a_ref, d_ref,
                       bias_ref, wep_ref, kap_ref, linwe_ref, o_ref):
    """One block of tm target rows of GATv2Conv(heads, chan, edge_dim=1,
    share_weights=True) + ReLU against all Np source nodes.

      ga_ref   [tm, hp+heads] f32 : target-row block of a.g (+ per-head 0.6*sum columns)
      gat_ref  [hp+heads, Np] f32 : transpose of the same (source side), hoisted
      gm_ref   [heads, Np, out_w] bf16 : g placed in each head's compact out columns
      a_ref/d_ref [tm, Np] bf16  : adjacency mask / distances (row block)
      bias_ref [1, out_w] f32    : output bias (zero-padded)
      wep/kap/linwe (SMEM f32)   : a_c*we_c, 0.4*sign(a_c), 0.6*sum_c a_c*we_c
    """
    f32 = jnp.float32
    hp = heads * chan
    mask = a_ref[...].astype(f32) > 0.0          # [tm, Np]
    dist = d_ref[...].astype(f32)                # [tm, Np]

    out_acc = None
    for h in range(heads):
        b = h * chan
        s_col = hp + h                           # pre-summed linear column (0.6*sum_c ga)

        # logit_ij = sum_c a_c * LeakyReLU(g_i + g_j + we_c*D_ij)
        #          = [rank-1 linear part] + sum_c kap_c * |ga_i + ga_j + wep_c*D_ij|
        logit = (ga_ref[:, s_col:s_col + 1] + gat_ref[s_col:s_col + 1, :]
                 + linwe_ref[h] * dist)
        # static unroll (chan <= 20): per-iteration live set is one accumulator plus
        # thin slices; switch to lax.fori_loop(unroll=8) if a bundle dump shows spills.
        for c in range(chan):
            i = b + c
            t = ga_ref[:, i:i + 1] + gat_ref[i:i + 1, :] + wep_ref[i] * dist
            logit = logit + kap_ref[i] * jnp.abs(t)

        # masked softmax over incoming edges (source axis j)
        logit = jnp.where(mask, logit, -1e30)
        m = jnp.max(logit, axis=1, keepdims=True)
        e = jnp.where(mask, jnp.exp(logit - m), 0.0)
        den = jnp.sum(e, axis=1, keepdims=True)
        alpha = e * pl.reciprocal(jnp.where(den > 0.0, den, 1.0), approx=True)

        # MXU aggregation; head h's result lands directly in its compact columns.
        part = jnp.dot(alpha.astype(jnp.bfloat16), gm_ref[h],
                       preferred_element_type=f32)
        out_acc = part if out_acc is None else out_acc + part

    o_ref[...] = jnp.maximum(out_acc + bias_ref[...], 0.0).astype(o_ref.dtype)


def gatv2_relu(g, A, D, att, w_edge, bias, *, heads, out_ch, n_real):
    """g: [Np, heads*out_ch] f32 shared transform (x @ W + b_lin, share_weights=True).
    Returns compact bf16 [Np, round_up(heads*out_ch, 128)]; real cols are [:, :heads*out_ch]."""
    np_nodes = g.shape[0]
    hp = heads * out_ch
    out_w = _round_up(hp, _LANE)

    pad2 = ((0, np_nodes - n_real), (0, np_nodes - n_real))
    a_p = jnp.pad(A.astype(jnp.float32), pad2).astype(jnp.bfloat16)
    d_p = jnp.pad(D.astype(jnp.float32), pad2).astype(jnp.bfloat16)

    att = att.astype(jnp.float32).reshape(hp)
    wed = w_edge.astype(jnp.float32).reshape(hp)

    # --- hoisted out of the kernel (perf review): transform products & transpose ---
    ga = g.astype(jnp.float32) * att[None, :]                       # a_c * g (per column)
    row_lin = 0.6 * jnp.sum(ga.reshape(np_nodes, heads, out_ch), axis=2)   # [Np, heads]
    ga_ext = jnp.concatenate([ga, row_lin], axis=1)                 # [Np, hp+heads]  (f32:
    gat_ext = ga_ext.T                                              #  avoids per-channel casts)
    g3 = g.astype(jnp.float32).reshape(np_nodes, heads, out_ch)
    gm = jnp.stack([jnp.pad(g3[:, h, :],
                            ((0, 0), (h * out_ch, out_w - (h + 1) * out_ch)))
                    for h in range(heads)]).astype(jnp.bfloat16)    # [heads, Np, out_w]

    wep = att * wed                                                 # a_c * we_c
    kap = 0.4 * jnp.sign(att)                                       # 0.4*sign(a_c)
    linwe = 0.6 * jnp.sum(wep.reshape(heads, out_ch), axis=1)       # [heads]
    bias_p = jnp.pad(bias.astype(jnp.float32).reshape(1, hp),
                     ((0, 0), (0, out_w - hp)))

    tm = _pick_tm(np_nodes)
    grid = (np_nodes // tm,)

    rows = lambda w: pl.BlockSpec((tm, w), lambda i: (i, 0))
    smem = pl.BlockSpec(memory_space=pltpu.MemorySpace.SMEM)

    cost = pl.CostEstimate(
        flops=int(np_nodes * np_nodes * (7 * hp + 2 * heads * out_w)),
        transcendentals=int(heads * np_nodes * np_nodes),
        bytes_accessed=int(2 * 2 * np_nodes * np_nodes            # A + D (bf16)
                           + 2 * heads * np_nodes * out_w         # gm (bf16)
                           + 2 * 4 * np_nodes * (hp + heads)      # ga + ga^T (f32)
                           + 2 * np_nodes * out_w))               # out (bf16)

    return pl.pallas_call(
        functools.partial(_gatv2_relu_kernel, heads, out_ch),
        out_shape=jax.ShapeDtypeStruct((np_nodes, out_w), jnp.bfloat16),
        grid_spec=pltpu.PrefetchScalarGridSpec(
            num_scalar_prefetch=0,
            grid=grid,
            in_specs=[
                rows(hp + heads),                                          # ga (row block)
                pl.BlockSpec((hp + heads, np_nodes), lambda i: (0, 0)),    # ga^T (full)
                pl.BlockSpec((heads, np_nodes, out_w), lambda i: (0, 0, 0)),  # gm (full)
                rows(np_nodes),                                            # A row block
                rows(np_nodes),                                            # D row block
                pl.BlockSpec((1, out_w), lambda i: (0, 0)),                # output bias
                smem, smem, smem,                                          # wep, kap, linwe
            ],
            out_specs=rows(out_w),
        ),
        compiler_params=pltpu.CompilerParams(
            dimension_semantics=("parallel",),
            vmem_limit_bytes=56 * 1024 * 1024),
        cost_estimate=cost,
    )(ga_ext, gat_ext, gm, a_p, d_p, bias_p, wep, kap, linwe)


def guided_graph_conv_forward(x, graphs, params):
    """edges = ['same_residue', 'same_protein']; one GATv2Conv+ReLU per edge type.
    The shared transform (and the inter-layer concat([h, x_orig]) via row-split
    weights) is computed in XLA; only the attention+aggregation runs in Pallas."""
    n, f = x.shape
    np_nodes = _round_up(n, _LANE)
    x32 = x.astype(jnp.float32)
    xp = jnp.pad(x32, ((0, np_nodes - n), (0, 0)))

    # --- edge type 'same_residue' ---
    p0 = params[0]
    g1 = xp @ p0["W"] + p0["b_lin"][None, :]
    h1 = gatv2_relu(g1, graphs[0][0], graphs[0][1], p0["att"], p0["w_edge"],
                    p0["bias"], heads=p0["heads"], out_ch=p0["out_ch"], n_real=n)

    # --- edge type 'same_protein' : input = concat([h1, x_orig]) via split weights ---
    p1 = params[1]
    fout0 = p0["heads"] * p0["out_ch"]
    w2 = p1["W"]
    g2 = (h1[:, :fout0].astype(jnp.float32) @ w2[:fout0]
          + xp @ w2[fout0:] + p1["b_lin"][None, :])
    h2 = gatv2_relu(g2, graphs[1][0], graphs[1][1], p1["att"], p1["w_edge"],
                    p1["bias"], heads=p1["heads"], out_ch=p1["out_ch"], n_real=n)

    fout1 = p1["heads"] * p1["out_ch"]
    return jnp.concatenate([h2[:n, :fout1].astype(jnp.float32), x32], axis=1)


# ----------------------------- pure-JAX reference -----------------------------
def _gatv2_dense_ref(x, A, D, W, b_lin, att, w_edge, bias, heads, out_ch):
    n = x.shape[0]
    g = x @ W + b_lin[None, :]
    gh = g.reshape(n, heads, out_ch)
    a = att.reshape(heads, out_ch)
    we = w_edge.reshape(heads, out_ch)
    s = gh[:, None, :, :] + gh[None, :, :, :] + we[None, None] * D[:, :, None, None]
    lrelu = jnp.where(s >= 0, s, 0.2 * s)
    logit = jnp.einsum("ijhc,hc->ijh", lrelu, a)
    adj = A[:, :, None] > 0
    logit = jnp.where(adj, logit, -1e30)
    m = jnp.max(logit, axis=1, keepdims=True)
    e = jnp.where(adj, jnp.exp(logit - m), 0.0)
    den = jnp.sum(e, axis=1, keepdims=True)
    alpha = e / jnp.maximum(den, 1e-30)
    out = jnp.einsum("ijh,jhc->ihc", alpha, gh).reshape(n, heads * out_ch) + bias[None, :]
    return jnp.maximum(out, 0.0)


def guided_graph_conv_reference(x, graphs, params):
    x32 = x.astype(jnp.float32)
    x_orig = x32
    cur = x32
    for (A, D), p in zip(graphs, params):
        h = _gatv2_dense_ref(cur, A, D, p["W"], p["b_lin"], p["att"],
                             p["w_edge"], p["bias"], p["heads"], p["out_ch"])
        cur = jnp.concatenate([h, x_orig], axis=1)
    return cur


# ----------------------------- demo setup helpers -----------------------------
def init_params(key, node_feat_dim, heads, channel_halving=True):
    params = []
    in_dim = 0
    for _ in range(2):                       # two edge types, one GATv2 layer each
        in_dim += node_feat_dim
        out_dim = max(in_dim // 2, 1) if channel_halving else in_dim
        fout = heads * out_dim
        key, k0, k1, k2, k3, k4 = jax.random.split(key, 6)
        params.append(dict(
            W=jax.random.normal(k0, (in_dim, fout), jnp.float32) * 0.2,
            b_lin=jax.random.normal(k1, (fout,), jnp.float32) * 0.1,
            w_edge=jax.random.normal(k2, (fout,), jnp.float32) * 0.2,
            att=jax.random.normal(k3, (fout,), jnp.float32) * 0.2,
            bias=jax.random.normal(k4, (fout,), jnp.float32) * 0.1,
            heads=heads, out_ch=out_dim,
        ))
        in_dim = heads * out_dim
    return params


def build_dense_graph(pos, same_group_mask, max_dist=None):
    """Dense edge mask/attrs: A[i,j]=1 iff edge j->i; D = pairwise distance.
    Self-loops get the mean incoming edge_attr (PyG add_self_loops(fill_value='mean'))."""
    N = pos.shape[0]
    diff = pos[:, None, :] - pos[None, :, :]
    dist = jnp.sqrt(jnp.sum(diff * diff, axis=-1) + 1e-12)
    A = same_group_mask & (~jnp.eye(N, dtype=bool))
    if max_dist is not None:
        A = A & (dist < max_dist)
    A = A.astype(jnp.float32)
    D = dist * A
    cnt = A.sum(axis=1, keepdims=True)
    mean = jnp.where(cnt > 0, D.sum(axis=1, keepdims=True) / jnp.maximum(cnt, 1.0), 0.0)
    A = A + jnp.eye(N, dtype=jnp.float32)
    D = D + jnp.eye(N, dtype=jnp.float32) * mean
    return A, D


if __name__ == "__main__":
    key = jax.random.PRNGKey(0)
    N, F, HEADS = 32, 16, 3
    k_x, k_pos, k_p = jax.random.split(key, 3)

    x = jax.random.normal(k_x, (N, F), jnp.float32)              # data['node'].x
    pos = jax.random.uniform(k_pos, (N, 3), jnp.float32) * 4.0

    res_id = jnp.arange(N) // 4                                  # 4 atoms / residue
    prot_id = jnp.arange(N) // (N // 2)                          # 2 proteins
    same_res = res_id[:, None] == res_id[None, :]
    same_prot = prot_id[:, None] == prot_id[None, :]

    g_same_residue = build_dense_graph(pos, same_res)                  # 'same_residue'
    g_same_protein = build_dense_graph(pos, same_prot, max_dist=2.0)   # 'same_protein' (<2A)

    params = init_params(k_p, F, HEADS)
    graphs = [g_same_residue, g_same_protein]

    out = guided_graph_conv_forward(x, graphs, params)
    out = jax.block_until_ready(out)

    embedding_dim = params[-1]["heads"] * params[-1]["out_ch"] + F     # 3*20 + 16 = 76
    assert out.shape == (N, embedding_dim), out.shape
    assert bool(jnp.all(jnp.isfinite(out)))

    # loose tolerance vs the pure-JAX f32 reference (bf16 transport of D / h1 / alpha / g
    # plus approx-reciprocal softmax normalization in the kernel)
    ref = guided_graph_conv_reference(x, graphs, params)
    err = float(jnp.max(jnp.abs(out - ref)))
    assert err < 0.25, err

    print("KERNEL_OK")
</pallas_src>

<mosaic_0001>
module attributes {stable_mosaic.version = 11 : i64} {
  func.func @_gatv2_relu_kernel(%arg0: i32, %arg1: memref<64x27xf32, #tpu.memory_space<vmem>>, %arg2: memref<27x128xf32, #tpu.memory_space<vmem>>, %arg3: memref<3x128x128xbf16, #tpu.memory_space<vmem>>, %arg4: memref<64x128xbf16, #tpu.memory_space<vmem>>, %arg5: memref<64x128xbf16, #tpu.memory_space<vmem>>, %arg6: memref<1x128xf32, #tpu.memory_space<vmem>>, %arg7: memref<24xf32, #tpu.memory_space<smem>>, %arg8: memref<24xf32, #tpu.memory_space<smem>>, %arg9: memref<3xf32, #tpu.memory_space<smem>>, %arg10: memref<64x128xbf16, #tpu.memory_space<vmem>>) attributes {dimension_semantics = [#tpu.dimension_semantics<parallel>], iteration_bounds = array<i64: 2>, scalar_prefetch = 0 : i64, scratch_operands = 0 : i64, tpu.core_type = #tpu.core_type<tc>, window_params = [{transform_indices = @transform_0, window_bounds = array<i64: 64, 27>}, {pipeline_mode = #tpu.pipeline_mode<synchronous>, transform_indices = @transform_1, window_bounds = array<i64: 27, 128>}, {pipeline_mode = #tpu.pipeline_mode<synchronous>, transform_indices = @transform_2, window_bounds = array<i64: 3, 128, 128>}, {transform_indices = @transform_3, window_bounds = array<i64: 64, 128>}, {transform_indices = @transform_4, window_bounds = array<i64: 64, 128>}, {pipeline_mode = #tpu.pipeline_mode<synchronous>, transform_indices = @transform_5, window_bounds = array<i64: 1, 128>}, {transform_indices = @transform_6, window_bounds = array<i64: 24>}, {transform_indices = @transform_7, window_bounds = array<i64: 24>}, {transform_indices = @transform_8, window_bounds = array<i64: 3>}, {transform_indices = @transform_9, window_bounds = array<i64: 64, 128>}]} {
    %c0 = arith.constant 0 : index
    %c0_0 = arith.constant 0 : index
    %0 = vector.load %arg4[%c0, %c0_0] : memref<64x128xbf16, #tpu.memory_space<vmem>>, vector<64x128xbf16>
    %1 = arith.extf %0 : vector<64x128xbf16> to vector<64x128xf32>
    %cst = arith.constant 0.000000e+00 : f32
    %2 = vector.broadcast %cst : f32 to vector<64x128xf32>
    %3 = arith.cmpf ogt, %1, %2 : vector<64x128xf32>
    %c0_1 = arith.constant 0 : index
    %c0_2 = arith.constant 0 : index
    %4 = vector.load %arg5[%c0_1, %c0_2] : memref<64x128xbf16, #tpu.memory_space<vmem>>, vector<64x128xbf16>
    %5 = arith.extf %4 : vector<64x128xbf16> to vector<64x128xf32>
    %c0_3 = arith.constant 0 : index
    %c24 = arith.constant 24 : index
    %6 = vector.load %arg1[%c0_3, %c24] : memref<64x27xf32, #tpu.memory_space<vmem>>, vector<64x1xf32>
    %c24_4 = arith.constant 24 : index
    %c0_5 = arith.constant 0 : index
    %7 = vector.load %arg2[%c24_4, %c0_5] : memref<27x128xf32, #tpu.memory_space<vmem>>, vector<1x128xf32>
    %8 = vector.broadcast %6 : vector<64x1xf32> to vector<64x128xf32>
    %9 = vector.broadcast %7 : vector<1x128xf32> to vector<64x128xf32>
    %10 = arith.addf %8, %9 : vector<64x128xf32>
    %c0_6 = arith.constant 0 : index
    %11 = memref.load %arg9[%c0_6] : memref<3xf32, #tpu.memory_space<smem>>
    %12 = vector.broadcast %11 : f32 to vector<64x128xf32>
    %13 = arith.mulf %12, %5 : vector<64x128xf32>
    %14 = arith.addf %10, %13 : vector<64x128xf32>
    %c0_7 = arith.constant 0 : index
    %c0_8 = arith.constant 0 : index
    %15 = vector.load %arg1[%c0_7, %c0_8] : memref<64x27xf32, #tpu.memory_space<vmem>>, vector<64x1xf32>
    %c0_9 = arith.constant 0 : index
    %c0_10 = arith.constant 0 : index
    %16 = vector.load %arg2[%c0_9, %c0_10] : memref<27x128xf32, #tpu.memory_space<vmem>>, vector<1x128xf32>
    %17 = vector.broadcast %15 : vector<64x1xf32> to vector<64x128xf32>
    %18 = vector.broadcast %16 : vector<1x128xf32> to vector<64x128xf32>
    %19 = arith.addf %17, %18 : vector<64x128xf32>
    %c0_11 = arith.constant 0 : index
    %20 = memref.load %arg7[%c0_11] : memref<24xf32, #tpu.memory_space<smem>>
    %21 = vector.broadcast %20 : f32 to vector<64x128xf32>
    %22 = arith.mulf %21, %5 : vector<64x128xf32>
    %23 = arith.addf %19, %22 : vector<64x128xf32>
    %c0_12 = arith.constant 0 : index
    %24 = memref.load %arg8[%c0_12] : memref<24xf32, #tpu.memory_space<smem>>
    %25 = math.absf %23 : vector<64x128xf32>
    %26 = vector.broadcast %24 : f32 to vector<64x128xf32>
    %27 = arith.mulf %26, %25 : vector<64x128xf32>
    %28 = arith.addf %14, %27 : vector<64x128xf32>
    %c0_13 = arith.constant 0 : index
    %c1 = arith.constant 1 : index
    %29 = vector.load %arg1[%c0_13, %c1] : memref<64x27xf32, #tpu.memory_space<vmem>>, vector<64x1xf32>
    %c1_14 = arith.constant 1 : index
    %c0_15 = arith.constant 0 : index
    %30 = vector.load %arg2[%c1_14, %c0_15] : memref<27x128xf32, #tpu.memory_space<vmem>>, vector<1x128xf32>
    %31 = vector.broadcast %29 : vector<64x1xf32> to vector<64x128xf32>
    %32 = vector.broadcast %30 : vector<1x128xf32> to vector<64x128xf32>
    %33 = arith.addf %31, %32 : vector<64x128xf32>
    %c1_16 = arith.constant 1 : index
    %34 = memref.load %arg7[%c1_16] : memref<24xf32, #tpu.memory_space<smem>>
    %35 = vector.broadcast %34 : f32 to vector<64x128xf32>
    %36 = arith.mulf %35, %5 : vector<64x128xf32>
    %37 = arith.addf %33, %36 : vector<64x128xf32>
    %c1_17 = arith.constant 1 : index
    %38 = memref.load %arg8[%c1_17] : memref<24xf32, #tpu.memory_space<smem>>
    %39 = math.absf %37 : vector<64x128xf32>
    %40 = vector.broadcast %38 : f32 to vector<64x128xf32>
    %41 = arith.mulf %40, %39 : vector<64x128xf32>
    %42 = arith.addf %28, %41 : vector<64x128xf32>
    %c0_18 = arith.constant 0 : index
    %c2 = arith.constant 2 : index
    %43 = vector.load %arg1[%c0_18, %c2] : memref<64x27xf32, #tpu.memory_space<vmem>>, vector<64x1xf32>
    %c2_19 = arith.constant 2 : index
    %c0_20 = arith.constant 0 : index
    %44 = vector.load %arg2[%c2_19, %c0_20] : memref<27x128xf32, #tpu.memory_space<vmem>>, vector<1x128xf32>
    %45 = vector.broadcast %43 : vector<64x1xf32> to vector<64x128xf32>
    %46 = vector.broadcast %44 : vector<1x128xf32> to vector<64x128xf32>
    %47 = arith.addf %45, %46 : vector<64x128xf32>
    %c2_21 = arith.constant 2 : index
    %48 = memref.load %arg7[%c2_21] : memref<24xf32, #tpu.memory_space<smem>>
    %49 = vector.broadcast %48 : f32 to vector<64x128xf32>
    %50 = arith.mulf %49, %5 : vector<64x128xf32>
    %51 = arith.addf %47, %50 : vector<64x128xf32>
    %c2_22 = arith.constant 2 : index
    %52 = memref.load %arg8[%c2_22] : memref<24xf32, #tpu.memory_space<smem>>
    %53 = math.absf %51 : vector<64x128xf32>
    %54 = vector.broadcast %52 : f32 to vector<64x128xf32>
    %55 = arith.mulf %54, %53 : vector<64x128xf32>
    %56 = arith.addf %42, %55 : vector<64x128xf32>
    %c0_23 = arith.constant 0 : index
    %c3 = arith.constant 3 : index
    %57 = vector.load %arg1[%c0_23, %c3] : memref<64x27xf32, #tpu.memory_space<vmem>>, vector<64x1xf32>
    %c3_24 = arith.constant 3 : index
    %c0_25 = arith.constant 0 : index
    %58 = vector.load %arg2[%c3_24, %c0_25] : memref<27x128xf32, #tpu.memory_space<vmem>>, vector<1x128xf32>
    %59 = vector.broadcast %57 : vector<64x1xf32> to vector<64x128xf32>
    %60 = vector.broadcast %58 : vector<1x128xf32> to vector<64x128xf32>
    %61 = arith.addf %59, %60 : vector<64x128xf32>
    %c3_26 = arith.constant 3 : index
    %62 = memref.load %arg7[%c3_26] : memref<24xf32, #tpu.memory_space<smem>>
    %63 = vector.broadcast %62 : f32 to vector<64x128xf32>
    %64 = arith.mulf %63, %5 : vector<64x128xf32>
    %65 = arith.addf %61, %64 : vector<64x128xf32>
    %c3_27 = arith.constant 3 : index
    %66 = memref.load %arg8[%c3_27] : memref<24xf32, #tpu.memory_space<smem>>
    %67 = math.absf %65 : vector<64x128xf32>
    %68 = vector.broadcast %66 : f32 to vector<64x128xf32>
    %69 = arith.mulf %68, %67 : vector<64x128xf32>
    %70 = arith.addf %56, %69 : vector<64x128xf32>
    %c0_28 = arith.constant 0 : index
    %c4 = arith.constant 4 : index
    %71 = vector.load %arg1[%c0_28, %c4] : memref<64x27xf32, #tpu.memory_space<vmem>>, vector<64x1xf32>
    %c4_29 = arith.constant 4 : index
    %c0_30 = arith.constant 0 : index
    %72 = vector.load %arg2[%c4_29, %c0_30] : memref<27x128xf32, #tpu.memory_space<vmem>>, vector<1x128xf32>
    %73 = vector.broadcast %71 : vector<64x1xf32> to vector<64x128xf32>
    %74 = vector.broadcast %72 : vector<1x128xf32> to vector<64x128xf32>
    %75 = arith.addf %73, %74 : vector<64x128xf32>
    %c4_31 = arith.constant 4 : index
    %76 = memref.load %arg7[%c4_31] : memref<24xf32, #tpu.memory_space<smem>>
    %77 = vector.broadcast %76 : f32 to vector<64x128xf32>
    %78 = arith.mulf %77, %5 : vector<64x128xf32>
    %79 = arith.addf %75, %78 : vector<64x128xf32>
    %c4_32 = arith.constant 4 : index
    %80 = memref.load %arg8[%c4_32] : memref<24xf32, #tpu.memory_space<smem>>
    %81 = math.absf %79 : vector<64x128xf32>
    %82 = vector.broadcast %80 : f32 to vector<64x128xf32>
    %83 = arith.mulf %82, %81 : vector<64x128xf32>
    %84 = arith.addf %70, %83 : vector<64x128xf32>
    %c0_33 = arith.constant 0 : index
    %c5 = arith.constant 5 : index
    %85 = vector.load %arg1[%c0_33, %c5] : memref<64x27xf32, #tpu.memory_space<vmem>>, vector<64x1xf32>
    %c5_34 = arith.constant 5 : index
    %c0_35 = arith.constant 0 : index
    %86 = vector.load %arg2[%c5_34, %c0_35] : memref<27x128xf32, #tpu.memory_space<vmem>>, vector<1x128xf32>
    %87 = vector.broadcast %85 : vector<64x1xf32> to vector<64x128xf32>
    %88 = vector.broadcast %86 : vector<1x128xf32> to vector<64x128xf32>
    %89 = arith.addf %87, %88 : vector<64x128xf32>
    %c5_36 = arith.constant 5 : index
    %90 = memref.load %arg7[%c5_36] : memref<24xf32, #tpu.memory_space<smem>>
    %91 = vector.broadcast %90 : f32 to vector<64x128xf32>
    %92 = arith.mulf %91, %5 : vector<64x128xf32>
    %93 = arith.addf %89, %92 : vector<64x128xf32>
    %c5_37 = arith.constant 5 : index
    %94 = memref.load %arg8[%c5_37] : memref<24xf32, #tpu.memory_space<smem>>
    %95 = math.absf %93 : vector<64x128xf32>
    %96 = vector.broadcast %94 : f32 to vector<64x128xf32>
    %97 = arith.mulf %96, %95 : vector<64x128xf32>
    %98 = arith.addf %84, %97 : vector<64x128xf32>
    %c0_38 = arith.constant 0 : index
    %c6 = arith.constant 6 : index
    %99 = vector.load %arg1[%c0_38, %c6] : memref<64x27xf32, #tpu.memory_space<vmem>>, vector<64x1xf32>
    %c6_39 = arith.constant 6 : index
    %c0_40 = arith.constant 0 : index
    %100 = vector.load %arg2[%c6_39, %c0_40] : memref<27x128xf32, #tpu.memory_space<vmem>>, vector<1x128xf32>
    %101 = vector.broadcast %99 : vector<64x1xf32> to vector<64x128xf32>
    %102 = vector.broadcast %100 : vector<1x128xf32> to vector<64x128xf32>
    %103 = arith.addf %101, %102 : vector<64x128xf32>
    %c6_41 = arith.constant 6 : index
    %104 = memref.load %arg7[%c6_41] : memref<24xf32, #tpu.memory_space<smem>>
    %105 = vector.broadcast %104 : f32 to vector<64x128xf32>
    %106 = arith.mulf %105, %5 : vector<64x128xf32>
    %107 = arith.addf %103, %106 : vector<64x128xf32>
    %c6_42 = arith.constant 6 : index
    %108 = memref.load %arg8[%c6_42] : memref<24xf32, #tpu.memory_space<smem>>
    %109 = math.absf %107 : vector<64x128xf32>
    %110 = vector.broadcast %108 : f32 to vector<64x128xf32>
    %111 = arith.mulf %110, %109 : vector<64x128xf32>
    %112 = arith.addf %98, %111 : vector<64x128xf32>
    %c0_43 = arith.constant 0 : index
    %c7 = arith.constant 7 : index
    %113 = vector.load %arg1[%c0_43, %c7] : memref<64x27xf32, #tpu.memory_space<vmem>>, vector<64x1xf32>
    %c7_44 = arith.constant 7 : index
    %c0_45 = arith.constant 0 : index
    %114 = vector.load %arg2[%c7_44, %c0_45] : memref<27x128xf32, #tpu.memory_space<vmem>>, vector<1x128xf32>
    %115 = vector.broadcast %113 : vector<64x1xf32> to vector<64x128xf32>
    %116 = vector.broadcast %114 : vector<1x128xf32> to vector<64x128xf32>
    %117 = arith.addf %115, %116 : vector<64x128xf32>
    %c7_46 = arith.constant 7 : index
    %118 = memref.load %arg7[%c7_46] : memref<24xf32, #tpu.memory_space<smem>>
    %119 = vector.broadcast %118 : f32 to vector<64x128xf32>
    %120 = arith.mulf %119, %5 : vector<64x128xf32>
    %121 = arith.addf %117, %120 : vector<64x128xf32>
    %c7_47 = arith.constant 7 : index
    %122 = memref.load %arg8[%c7_47] : memref<24xf32, #tpu.memory_space<smem>>
    %123 = math.absf %121 : vector<64x128xf32>
    %124 = vector.broadcast %122 : f32 to vector<64x128xf32>
    %125 = arith.mulf %124, %123 : vector<64x128xf32>
    %126 = arith.addf %112, %125 : vector<64x128xf32>
    %cst_48 = arith.constant -1.000000e+30 : f32
    %127 = vector.broadcast %cst_48 : f32 to vector<64x128xf32>
    %128 = arith.select %3, %126, %127 : vector<64x128xi1>, vector<64x128xf32>
    %cst_49 = arith.constant dense<0xFF800000> : vector<64xf32>
    %129 = vector.multi_reduction <maximumf>, %128, %cst_49 [1] : vector<64x128xf32> to vector<64xf32>
    %130 = vector.shape_cast %129 : vector<64xf32> to vector<64x1xf32>
    %131 = vector.broadcast %130 : vector<64x1xf32> to vector<64x128xf32>
    %132 = arith.subf %128, %131 : vector<64x128xf32>
    %133 = math.exp %132 : vector<64x128xf32>
    %cst_50 = arith.constant 0.000000e+00 : f32
    %134 = vector.broadcast %cst_50 : f32 to vector<64x128xf32>
    %135 = arith.select %3, %133, %134 : vector<64x128xi1>, vector<64x128xf32>
    %cst_51 = arith.constant dense<0.000000e+00> : vector<64xf32>
    %136 = vector.multi_reduction <add>, %135, %cst_51 [1] : vector<64x128xf32> to vector<64xf32>
    %137 = vector.shape_cast %136 : vector<64xf32> to vector<64x1xf32>
    %cst_52 = arith.constant 0.000000e+00 : f32
    %138 = vector.broadcast %cst_52 : f32 to vector<64x1xf32>
    %139 = arith.cmpf ogt, %137, %138 : vector<64x1xf32>
    %cst_53 = arith.constant 1.000000e+00 : f32
    %140 = vector.broadcast %cst_53 : f32 to vector<64x1xf32>
    %141 = arith.select %139, %137, %140 : vector<64x1xi1>, vector<64x1xf32>
    %142 = tpu.reciprocal %141 {approx = true} : vector<64x1xf32> -> vector<64x1xf32>
    %143 = vector.broadcast %142 : vector<64x1xf32> to vector<64x128xf32>
    %144 = arith.mulf %135, %143 : vector<64x128xf32>
    %145 = arith.truncf %144 : vector<64x128xf32> to vector<64x128xbf16>
    %c0_54 = arith.constant 0 : index
    %c0_55 = arith.constant 0 : index
    %c0_56 = arith.constant 0 : index
    %146 = vector.load %arg3[%c0_54, %c0_55, %c0_56] : memref<3x128x128xbf16, #tpu.memory_space<vmem>>, vector<1x128x128xbf16>
    %147 = vector.shape_cast %146 : vector<1x128x128xbf16> to vector<128x128xbf16>
    %cst_57 = arith.constant dense<0.000000e+00> : vector<64x128xf32>
    %148 = tpu.matmul %145, %147, %cst_57 {dimension_numbers = #tpu.dot_dimension_numbers<[1], [0], [0], [1], [0, 0, 1, 1], [], []>} : vector<64x128xbf16>, vector<128x128xbf16>, vector<64x128xf32> -> vector<64x128xf32>
    %c0_58 = arith.constant 0 : index
    %c25 = arith.constant 25 : index
    %149 = vector.load %arg1[%c0_58, %c25] : memref<64x27xf32, #tpu.memory_space<vmem>>, vector<64x1xf32>
    %c25_59 = arith.constant 25 : index
    %c0_60 = arith.constant 0 : index
    %150 = vector.load %arg2[%c25_59, %c0_60] : memref<27x128xf32, #tpu.memory_space<vmem>>, vector<1x128xf32>
    %151 = vector.broadcast %149 : vector<64x1xf32> to vector<64x128xf32>
    %152 = vector.broadcast %150 : vector<1x128xf32> to vector<64x128xf32>
    %153 = arith.addf %151, %152 : vector<64x128xf32>
    %c1_61 = arith.constant 1 : index
    %154 = memref.load %arg9[%c1_61] : memref<3xf32, #tpu.memory_space<smem>>
    %155 = vector.broadcast %154 : f32 to vector<64x128xf32>
    %156 = arith.mulf %155, %5 : vector<64x128xf32>
    %157 = arith.addf %153, %156 : vector<64x128xf32>
    %c0_62 = arith.constant 0 : index
    %c8 = arith.constant 8 : index
    %158 = vector.load %arg1[%c0_62, %c8] : memref<64x27xf32, #tpu.memory_space<vmem>>, vector<64x1xf32>
    %c8_63 = arith.constant 8 : index
    %c0_64 = arith.constant 0 : index
    %159 = vector.load %arg2[%c8_63, %c0_64] : memref<27x128xf32, #tpu.memory_space<vmem>>, vector<1x128xf32>
    %160 = vector.broadcast %158 : vector<64x1xf32> to vector<64x128xf32>
    %161 = vector.broadcast %159 : vector<1x128xf32> to vector<64x128xf32>
    %162 = arith.addf %160, %161 : vector<64x128xf32>
    %c8_65 = arith.constant 8 : index
    %163 = memref.load %arg7[%c8_65] : memref<24xf32, #tpu.memory_space<smem>>
    %164 = vector.broadcast %163 : f32 to vector<64x128xf32>
    %165 = arith.mulf %164, %5 : vector<64x128xf32>
    %166 = arith.addf %162, %165 : vector<64x128xf32>
    %c8_66 = arith.constant 8 : index
    %167 = memref.load %arg8[%c8_66] : memref<24xf32, #tpu.memory_space<smem>>
    %168 = math.absf %166 : vector<64x128xf32>
    %169 = vector.broadcast %167 : f32 to vector<64x128xf32>
    %170 = arith.mulf %169, %168 : vector<64x128xf32>
    %171 = arith.addf %157, %170 : vector<64x128xf32>
    %c0_67 = arith.constant 0 : index
    %c9 = arith.constant 9 : index
    %172 = vector.load %arg1[%c0_67, %c9] : memref<64x27xf32, #tpu.memory_space<vmem>>, vector<64x1xf32>
    %c9_68 = arith.constant 9 : index
    %c0_69 = arith.constant 0 : index
    %173 = vector.load %arg2[%c9_68, %c0_69] : memref<27x128xf32, #tpu.memory_space<vmem>>, vector<1x128xf32>
    %174 = vector.broadcast %172 : vector<64x1xf32> to vector<64x128xf32>
    %175 = vector.broadcast %173 : vector<1x128xf32> to vector<64x128xf32>
    %176 = arith.addf %174, %175 : vector<64x128xf32>
    %c9_70 = arith.constant 9 : index
    %177 = memref.load %arg7[%c9_70] : memref<24xf32, #tpu.memory_space<smem>>
    %178 = vector.broadcast %177 : f32 to vector<64x128xf32>
    %179 = arith.mulf %178, %5 : vector<64x128xf32>
    %180 = arith.addf %176, %179 : vector<64x128xf32>
    %c9_71 = arith.constant 9 : index
    %181 = memref.load %arg8[%c9_71] : memref<24xf32, #tpu.memory_space<smem>>
    %182 = math.absf %180 : vector<64x128xf32>
    %183 = vector.broadcast %181 : f32 to vector<64x128xf32>
    %184 = arith.mulf %183, %182 : vector<64x128xf32>
    %185 = arith.addf %171, %184 : vector<64x128xf32>
    %c0_72 = arith.constant 0 : index
    %c10 = arith.constant 10 : index
    %186 = vector.load %arg1[%c0_72, %c10] : memref<64x27xf32, #tpu.memory_space<vmem>>, vector<64x1xf32>
    %c10_73 = arith.constant 10 : index
    %c0_74 = arith.constant 0 : index
    %187 = vector.load %arg2[%c10_73, %c0_74] : memref<27x128xf32, #tpu.memory_space<vmem>>, vector<1x128xf32>
    %188 = vector.broadcast %186 : vector<64x1xf32> to vector<64x128xf32>
    %189 = vector.broadcast %187 : vector<1x128xf32> to vector<64x128xf32>
    %190 = arith.addf %188, %189 : vector<64x128xf32>
    %c10_75 = arith.constant 10 : index
    %191 = memref.load %arg7[%c10_75] : memref<24xf32, #tpu.memory_space<smem>>
    %192 = vector.broadcast %191 : f32 to vector<64x128xf32>
    %193 = arith.mulf %192, %5 : vector<64x128xf32>
    %194 = arith.addf %190, %193 : vector<64x128xf32>
    %c10_76 = arith.constant 10 : index
    %195 = memref.load %arg8[%c10_76] : memref<24xf32, #tpu.memory_space<smem>>
    %196 = math.absf %194 : vector<64x128xf32>
    %197 = vector.broadcast %195 : f32 to vector<64x128xf32>
    %198 = arith.mulf %197, %196 : vector<64x128xf32>
    %199 = arith.addf %185, %198 : vector<64x128xf32>
    %c0_77 = arith.constant 0 : index
    %c11 = arith.constant 11 : index
    %200 = vector.load %arg1[%c0_77, %c11] : memref<64x27xf32, #tpu.memory_space<vmem>>, vector<64x1xf32>
    %c11_78 = arith.constant 11 : index
    %c0_79 = arith.constant 0 : index
    %201 = vector.load %arg2[%c11_78, %c0_79] : memref<27x128xf32, #tpu.memory_space<vmem>>, vector<1x128xf32>
    %202 = vector.broadcast %200 : vector<64x1xf32> to vector<64x128xf32>
    %203 = vector.broadcast %201 : vector<1x128xf32> to vector<64x128xf32>
    %204 = arith.addf %202, %203 : vector<64x128xf32>
    %c11_80 = arith.constant 11 : index
    %205 = memref.load %arg7[%c11_80] : memref<24xf32, #tpu.memory_space<smem>>
    %206 = vector.broadcast %205 : f32 to vector<64x128xf32>
    %207 = arith.mulf %206, %5 : vector<64x128xf32>
    %208 = arith.addf %204, %207 : vector<64x128xf32>
    %c11_81 = arith.constant 11 : index
    %209 = memref.load %arg8[%c11_81] : memref<24xf32, #tpu.memory_space<smem>>
    %210 = math.absf %208 : vector<64x128xf32>
    %211 = vector.broadcast %209 : f32 to vector<64x128xf32>
    %212 = arith.mulf %211, %210 : vector<64x128xf32>
    %213 = arith.addf %199, %212 : vector<64x128xf32>
    %c0_82 = arith.constant 0 : index
    %c12 = arith.constant 12 : index
    %214 = vector.load %arg1[%c0_82, %c12] : memref<64x27xf32, #tpu.memory_space<vmem>>, vector<64x1xf32>
    %c12_83 = arith.constant 12 : index
    %c0_84 = arith.constant 0 : index
    %215 = vector.load %arg2[%c12_83, %c0_84] : memref<27x128xf32, #tpu.memory_space<vmem>>, vector<1x128xf32>
    %216 = vector.broadcast %214 : vector<64x1xf32> to vector<64x128xf32>
    %217 = vector.broadcast %215 : vector<1x128xf32> to vector<64x128xf32>
    %218 = arith.addf %216, %217 : vector<64x128xf32>
    %c12_85 = arith.constant 12 : index
    %219 = memref.load %arg7[%c12_85] : memref<24xf32, #tpu.memory_space<smem>>
    %220 = vector.broadcast %219 : f32 to vector<64x128xf32>
    %221 = arith.mulf %220, %5 : vector<64x128xf32>
    %222 = arith.addf %218, %221 : vector<64x128xf32>
    %c12_86 = arith.constant 12 : index
    %223 = memref.load %arg8[%c12_86] : memref<24xf32, #tpu.memory_space<smem>>
    %224 = math.absf %222 : vector<64x128xf32>
    %225 = vector.broadcast %223 : f32 to vector<64x128xf32>
    %226 = arith.mulf %225, %224 : vector<64x128xf32>
    %227 = arith.addf %213, %226 : vector<64x128xf32>
    %c0_87 = arith.constant 0 : index
    %c13 = arith.constant 13 : index
    %228 = vector.load %arg1[%c0_87, %c13] : memref<64x27xf32, #tpu.memory_space<vmem>>, vector<64x1xf32>
    %c13_88 = arith.constant 13 : index
    %c0_89 = arith.constant 0 : index
    %229 = vector.load %arg2[%c13_88, %c0_89] : memref<27x128xf32, #tpu.memory_space<vmem>>, vector<1x128xf32>
    %230 = vector.broadcast %228 : vector<64x1xf32> to vector<64x128xf32>
    %231 = vector.broadcast %229 : vector<1x128xf32> to vector<64x128xf32>
    %232 = arith.addf %230, %231 : vector<64x128xf32>
    %c13_90 = arith.constant 13 : index
    %233 = memref.load %arg7[%c13_90] : memref<24xf32, #tpu.memory_space<smem>>
    %234 = vector.broadcast %233 : f32 to vector<64x128xf32>
    %235 = arith.mulf %234, %5 : vector<64x128xf32>
    %236 = arith.addf %232, %235 : vector<64x128xf32>
    %c13_91 = arith.constant 13 : index
    %237 = memref.load %arg8[%c13_91] : memref<24xf32, #tpu.memory_space<smem>>
    %238 = math.absf %236 : vector<64x128xf32>
    %239 = vector.broadcast %237 : f32 to vector<64x128xf32>
    %240 = arith.mulf %239, %238 : vector<64x128xf32>
    %241 = arith.addf %227, %240 : vector<64x128xf32>
    %c0_92 = arith.constant 0 : index
    %c14 = arith.constant 14 : index
    %242 = vector.load %arg1[%c0_92, %c14] : memref<64x27xf32, #tpu.memory_space<vmem>>, vector<64x1xf32>
    %c14_93 = arith.constant 14 : index
    %c0_94 = arith.constant 0 : index
    %243 = vector.load %arg2[%c14_93, %c0_94] : memref<27x128xf32, #tpu.memory_space<vmem>>, vector<1x128xf32>
    %244 = vector.broadcast %242 : vector<64x1xf32> to vector<64x128xf32>
    %245 = vector.broadcast %243 : vector<1x128xf32> to vector<64x128xf32>
    %246 = arith.addf %244, %245 : vector<64x128xf32>
    %c14_95 = arith.constant 14 : index
    %247 = memref.load %arg7[%c14_95] : memref<24xf32, #tpu.memory_space<smem>>
    %248 = vector.broadcast %247 : f32 to vector<64x128xf32>
    %249 = arith.mulf %248, %5 : vector<64x128xf32>
    %250 = arith.addf %246, %249 : vector<64x128xf32>
    %c14_96 = arith.constant 14 : index
    %251 = memref.load %arg8[%c14_96] : memref<24xf32, #tpu.memory_space<smem>>
    %252 = math.absf %250 : vector<64x128xf32>
    %253 = vector.broadcast %251 : f32 to vector<64x128xf32>
    %254 = arith.mulf %253, %252 : vector<64x128xf32>
    %255 = arith.addf %241, %254 : vector<64x128xf32>
    %c0_97 = arith.constant 0 : index
    %c15 = arith.constant 15 : index
    %256 = vector.load %arg1[%c0_97, %c15] : memref<64x27xf32, #tpu.memory_space<vmem>>, vector<64x1xf32>
    %c15_98 = arith.constant 15 : index
    %c0_99 = arith.constant 0 : index
    %257 = vector.load %arg2[%c15_98, %c0_99] : memref<27x128xf32, #tpu.memory_space<vmem>>, vector<1x128xf32>
    %258 = vector.broadcast %256 : vector<64x1xf32> to vector<64x128xf32>
    %259 = vector.broadcast %257 : vector<1x128xf32> to vector<64x128xf32>
    %260 = arith.addf %258, %259 : vector<64x128xf32>
    %c15_100 = arith.constant 15 : index
    %261 = memref.load %arg7[%c15_100] : memref<24xf32, #tpu.memory_space<smem>>
    %262 = vector.broadcast %261 : f32 to vector<64x128xf32>
    %263 = arith.mulf %262, %5 : vector<64x128xf32>
    %264 = arith.addf %260, %263 : vector<64x128xf32>
    %c15_101 = arith.constant 15 : index
    %265 = memref.load %arg8[%c15_101] : memref<24xf32, #tpu.memory_space<smem>>
    %266 = math.absf %264 : vector<64x128xf32>
    %267 = vector.broadcast %265 : f32 to vector<64x128xf32>
    %268 = arith.mulf %267, %266 : vector<64x128xf32>
    %269 = arith.addf %255, %268 : vector<64x128xf32>
    %cst_102 = arith.constant -1.000000e+30 : f32
    %270 = vector.broadcast %cst_102 : f32 to vector<64x128xf32>
    %271 = arith.select %3, %269, %270 : vector<64x128xi1>, vector<64x128xf32>
    %cst_103 = arith.constant dense<0xFF800000> : vector<64xf32>
    %272 = vector.multi_reduction <maximumf>, %271, %cst_103 [1] : vector<64x128xf32> to vector<64xf32>
    %273 = vector.shape_cast %272 : vector<64xf32> to vector<64x1xf32>
    %274 = vector.broadcast %273 : vector<64x1xf32> to vector<64x128xf32>
    %275 = arith.subf %271, %274 : vector<64x128xf32>
    %276 = math.exp %275 : vector<64x128xf32>
    %cst_104 = arith.constant 0.000000e+00 : f32
    %277 = vector.broadcast %cst_104 : f32 to vector<64x128xf32>
    %278 = arith.select %3, %276, %277 : vector<64x128xi1>, vector<64x128xf32>
    %cst_105 = arith.constant dense<0.000000e+00> : vector<64xf32>
    %279 = vector.multi_reduction <add>, %278, %cst_105 [1] : vector<64x128xf32> to vector<64xf32>
    %280 = vector.shape_cast %279 : vector<64xf32> to vector<64x1xf32>
    %cst_106 = arith.constant 0.000000e+00 : f32
    %281 = vector.broadcast %cst_106 : f32 to vector<64x1xf32>
    %282 = arith.cmpf ogt, %280, %281 : vector<64x1xf32>
    %cst_107 = arith.constant 1.000000e+00 : f32
    %283 = vector.broadcast %cst_107 : f32 to vector<64x1xf32>
    %284 = arith.select %282, %280, %283 : vector<64x1xi1>, vector<64x1xf32>
    %285 = tpu.reciprocal %284 {approx = true} : vector<64x1xf32> -> vector<64x1xf32>
    %286 = vector.broadcast %285 : vector<64x1xf32> to vector<64x128xf32>
    %287 = arith.mulf %278, %286 : vector<64x128xf32>
    %288 = arith.truncf %287 : vector<64x128xf32> to vector<64x128xbf16>
    %c1_108 = arith.constant 1 : index
    %c0_109 = arith.constant 0 : index
    %c0_110 = arith.constant 0 : index
    %289 = vector.load %arg3[%c1_108, %c0_109, %c0_110] : memref<3x128x128xbf16, #tpu.memory_space<vmem>>, vector<1x128x128xbf16>
    %290 = vector.shape_cast %289 : vector<1x128x128xbf16> to vector<128x128xbf16>
    %cst_111 = arith.constant dense<0.000000e+00> : vector<64x128xf32>
    %291 = tpu.matmul %288, %290, %cst_111 {dimension_numbers = #tpu.dot_dimension_numbers<[1], [0], [0], [1], [0, 0, 1, 1], [], []>} : vector<64x128xbf16>, vector<128x128xbf16>, vector<64x128xf32> -> vector<64x128xf32>
    %292 = arith.addf %148, %291 : vector<64x128xf32>
    %c0_112 = arith.constant 0 : index
    %c26 = arith.constant 26 : index
    %293 = vector.load %arg1[%c0_112, %c26] : memref<64x27xf32, #tpu.memory_space<vmem>>, vector<64x1xf32>
    %c26_113 = arith.constant 26 : index
    %c0_114 = arith.constant 0 : index
    %294 = vector.load %arg2[%c26_113, %c0_114] : memref<27x128xf32, #tpu.memory_space<vmem>>, vector<1x128xf32>
    %295 = vector.broadcast %293 : vector<64x1xf32> to vector<64x128xf32>
    %296 = vector.broadcast %294 : vector<1x128xf32> to vector<64x128xf32>
    %297 = arith.addf %295, %296 : vector<64x128xf32>
    %c2_115 = arith.constant 2 : index
    %298 = memref.load %arg9[%c2_115] : memref<3xf32, #tpu.memory_space<smem>>
    %299 = vector.broadcast %298 : f32 to vector<64x128xf32>
    %300 = arith.mulf %299, %5 : vector<64x128xf32>
    %301 = arith.addf %297, %300 : vector<64x128xf32>
    %c0_116 = arith.constant 0 : index
    %c16 = arith.constant 16 : index
    %302 = vector.load %arg1[%c0_116, %c16] : memref<64x27xf32, #tpu.memory_space<vmem>>, vector<64x1xf32>
    %c16_117 = arith.constant 16 : index
    %c0_118 = arith.constant 0 : index
    %303 = vector.load %arg2[%c16_117, %c0_118] : memref<27x128xf32, #tpu.memory_space<vmem>>, vector<1x128xf32>
    %304 = vector.broadcast %302 : vector<64x1xf32> to vector<64x128xf32>
    %305 = vector.broadcast %303 : vector<1x128xf32> to vector<64x128xf32>
    %306 = arith.addf %304, %305 : vector<64x128xf32>
    %c16_119 = arith.constant 16 : index
    %307 = memref.load %arg7[%c16_119] : memref<24xf32, #tpu.memory_space<smem>>
    %308 = vector.broadcast %307 : f32 to vector<64x128xf32>
    %309 = arith.mulf %308, %5 : vector<64x128xf32>
    %310 = arith.addf %306, %309 : vector<64x128xf32>
    %c16_120 = arith.constant 16 : index
    %311 = memref.load %arg8[%c16_120] : memref<24xf32, #tpu.memory_space<smem>>
    %312 = math.absf %310 : vector<64x128xf32>
    %313 = vector.broadcast %311 : f32 to vector<64x128xf32>
    %314 = arith.mulf %313, %312 : vector<64x128xf32>
    %315 = arith.addf %301, %314 : vector<64x128xf32>
    %c0_121 = arith.constant 0 : index
    %c17 = arith.constant 17 : index
    %316 = vector.load %arg1[%c0_121, %c17] : memref<64x27xf32, #tpu.memory_space<vmem>>, vector<64x1xf32>
    %c17_122 = arith.constant 17 : index
    %c0_123 = arith.constant 0 : index
    %317 = vector.load %arg2[%c17_122, %c0_123] : memref<27x128xf32, #tpu.memory_space<vmem>>, vector<1x128xf32>
    %318 = vector.broadcast %316 : vector<64x1xf32> to vector<64x128xf32>
    %319 = vector.broadcast %317 : vector<1x128xf32> to vector<64x128xf32>
    %320 = arith.addf %318, %319 : vector<64x128xf32>
    %c17_124 = arith.constant 17 : index
    %321 = memref.load %arg7[%c17_124] : memref<24xf32, #tpu.memory_space<smem>>
    %322 = vector.broadcast %321 : f32 to vector<64x128xf32>
    %323 = arith.mulf %322, %5 : vector<64x128xf32>
    %324 = arith.addf %320, %323 : vector<64x128xf32>
    %c17_125 = arith.constant 17 : index
    %325 = memref.load %arg8[%c17_125] : memref<24xf32, #tpu.memory_space<smem>>
    %326 = math.absf %324 : vector<64x128xf32>
    %327 = vector.broadcast %325 : f32 to vector<64x128xf32>
    %328 = arith.mulf %327, %326 : vector<64x128xf32>
    %329 = arith.addf %315, %328 : vector<64x128xf32>
    %c0_126 = arith.constant 0 : index
    %c18 = arith.constant 18 : index
    %330 = vector.load %arg1[%c0_126, %c18] : memref<64x27xf32, #tpu.memory_space<vmem>>, vector<64x1xf32>
    %c18_127 = arith.constant 18 : index
    %c0_128 = arith.constant 0 : index
    %331 = vector.load %arg2[%c18_127, %c0_128] : memref<27x128xf32, #tpu.memory_space<vmem>>, vector<1x128xf32>
    %332 = vector.broadcast %330 : vector<64x1xf32> to vector<64x128xf32>
    %333 = vector.broadcast %331 : vector<1x128xf32> to vector<64x128xf32>
    %334 = arith.addf %332, %333 : vector<64x128xf32>
    %c18_129 = arith.constant 18 : index
    %335 = memref.load %arg7[%c18_129] : memref<24xf32, #tpu.memory_space<smem>>
    %336 = vector.broadcast %335 : f32 to vector<64x128xf32>
    %337 = arith.mulf %336, %5 : vector<64x128xf32>
    %338 = arith.addf %334, %337 : vector<64x128xf32>
    %c18_130 = arith.constant 18 : index
    %339 = memref.load %arg8[%c18_130] : memref<24xf32, #tpu.memory_space<smem>>
    %340 = math.absf %338 : vector<64x128xf32>
    %341 = vector.broadcast %339 : f32 to vector<64x128xf32>
    %342 = arith.mulf %341, %340 : vector<64x128xf32>
    %343 = arith.addf %329, %342 : vector<64x128xf32>
    %c0_131 = arith.constant 0 : index
    %c19 = arith.constant 19 : index
    %344 = vector.load %arg1[%c0_131, %c19] : memref<64x27xf32, #tpu.memory_space<vmem>>, vector<64x1xf32>
    %c19_132 = arith.constant 19 : index
    %c0_133 = arith.constant 0 : index
    %345 = vector.load %arg2[%c19_132, %c0_133] : memref<27x128xf32, #tpu.memory_space<vmem>>, vector<1x128xf32>
    %346 = vector.broadcast %344 : vector<64x1xf32> to vector<64x128xf32>
    %347 = vector.broadcast %345 : vector<1x128xf32> to vector<64x128xf32>
    %348 = arith.addf %346, %347 : vector<64x128xf32>
    %c19_134 = arith.constant 19 : index
    %349 = memref.load %arg7[%c19_134] : memref<24xf32, #tpu.memory_space<smem>>
    %350 = vector.broadcast %349 : f32 to vector<64x128xf32>
    %351 = arith.mulf %350, %5 : vector<64x128xf32>
    %352 = arith.addf %348, %351 : vector<64x128xf32>
    %c19_135 = arith.constant 19 : index
    %353 = memref.load %arg8[%c19_135] : memref<24xf32, #tpu.memory_space<smem>>
    %354 = math.absf %352 : vector<64x128xf32>
    %355 = vector.broadcast %353 : f32 to vector<64x128xf32>
    %356 = arith.mulf %355, %354 : vector<64x128xf32>
    %357 = arith.addf %343, %356 : vector<64x128xf32>
    %c0_136 = arith.constant 0 : index
    %c20 = arith.constant 20 : index
    %358 = vector.load %arg1[%c0_136, %c20] : memref<64x27xf32, #tpu.memory_space<vmem>>, vector<64x1xf32>
    %c20_137 = arith.constant 20 : index
    %c0_138 = arith.constant 0 : index
    %359 = vector.load %arg2[%c20_137, %c0_138] : memref<27x128xf32, #tpu.memory_space<vmem>>, vector<1x128xf32>
    %360 = vector.broadcast %358 : vector<64x1xf32> to vector<64x128xf32>
    %361 = vector.broadcast %359 : vector<1x128xf32> to vector<64x128xf32>
    %362 = arith.addf %360, %361 : vector<64x128xf32>
    %c20_139 = arith.constant 20 : index
    %363 = memref.load %arg7[%c20_139] : memref<24xf32, #tpu.memory_space<smem>>
    %364 = vector.broadcast %363 : f32 to vector<64x128xf32>
    %365 = arith.mulf %364, %5 : vector<64x128xf32>
    %366 = arith.addf %362, %365 : vector<64x128xf32>
    %c20_140 = arith.constant 20 : index
    %367 = memref.load %arg8[%c20_140] : memref<24xf32, #tpu.memory_space<smem>>
    %368 = math.absf %366 : vector<64x128xf32>
    %369 = vector.broadcast %367 : f32 to vector<64x128xf32>
    %370 = arith.mulf %369, %368 : vector<64x128xf32>
    %371 = arith.addf %357, %370 : vector<64x128xf32>
    %c0_141 = arith.constant 0 : index
    %c21 = arith.constant 21 : index
    %372 = vector.load %arg1[%c0_141, %c21] : memref<64x27xf32, #tpu.memory_space<vmem>>, vector<64x1xf32>
    %c21_142 = arith.constant 21 : index
    %c0_143 = arith.constant 0 : index
    %373 = vector.load %arg2[%c21_142, %c0_143] : memref<27x128xf32, #tpu.memory_space<vmem>>, vector<1x128xf32>
    %374 = vector.broadcast %372 : vector<64x1xf32> to vector<64x128xf32>
    %375 = vector.broadcast %373 : vector<1x128xf32> to vector<64x128xf32>
    %376 = arith.addf %374, %375 : vector<64x128xf32>
    %c21_144 = arith.constant 21 : index
    %377 = memref.load %arg7[%c21_144] : memref<24xf32, #tpu.memory_space<smem>>
    %378 = vector.broadcast %377 : f32 to vector<64x128xf32>
    %379 = arith.mulf %378, %5 : vector<64x128xf32>
    %380 = arith.addf %376, %379 : vector<64x128xf32>
    %c21_145 = arith.constant 21 : index
    %381 = memref.load %arg8[%c21_145] : memref<24xf32, #tpu.memory_space<smem>>
    %382 = math.absf %380 : vector<64x128xf32>
    %383 = vector.broadcast %381 : f32 to vector<64x128xf32>
    %384 = arith.mulf %383, %382 : vector<64x128xf32>
    %385 = arith.addf %371, %384 : vector<64x128xf32>
    %c0_146 = arith.constant 0 : index
    %c22 = arith.constant 22 : index
    %386 = vector.load %arg1[%c0_146, %c22] : memref<64x27xf32, #tpu.memory_space<vmem>>, vector<64x1xf32>
    %c22_147 = arith.constant 22 : index
    %c0_148 = arith.constant 0 : index
    %387 = vector.load %arg2[%c22_147, %c0_148] : memref<27x128xf32, #tpu.memory_space<vmem>>, vector<1x128xf32>
    %388 = vector.broadcast %386 : vector<64x1xf32> to vector<64x128xf32>
    %389 = vector.broadcast %387 : vector<1x128xf32> to vector<64x128xf32>
    %390 = arith.addf %388, %389 : vector<64x128xf32>
    %c22_149 = arith.constant 22 : index
    %391 = memref.load %arg7[%c22_149] : memref<24xf32, #tpu.memory_space<smem>>
    %392 = vector.broadcast %391 : f32 to vector<64x128xf32>
    %393 = arith.mulf %392, %5 : vector<64x128xf32>
    %394 = arith.addf %390, %393 : vector<64x128xf32>
    %c22_150 = arith.constant 22 : index
    %395 = memref.load %arg8[%c22_150] : memref<24xf32, #tpu.memory_space<smem>>
    %396 = math.absf %394 : vector<64x128xf32>
    %397 = vector.broadcast %395 : f32 to vector<64x128xf32>
    %398 = arith.mulf %397, %396 : vector<64x128xf32>
    %399 = arith.addf %385, %398 : vector<64x128xf32>
    %c0_151 = arith.constant 0 : index
    %c23 = arith.constant 23 : index
    %400 = vector.load %arg1[%c0_151, %c23] : memref<64x27xf32, #tpu.memory_space<vmem>>, vector<64x1xf32>
    %c23_152 = arith.constant 23 : index
    %c0_153 = arith.constant 0 : index
    %401 = vector.load %arg2[%c23_152, %c0_153] : memref<27x128xf32, #tpu.memory_space<vmem>>, vector<1x128xf32>
    %402 = vector.broadcast %400 : vector<64x1xf32> to vector<64x128xf32>
    %403 = vector.broadcast %401 : vector<1x128xf32> to vector<64x128xf32>
    %404 = arith.addf %402, %403 : vector<64x128xf32>
    %c23_154 = arith.constant 23 : index
    %405 = memref.load %arg7[%c23_154] : memref<24xf32, #tpu.memory_space<smem>>
    %406 = vector.broadcast %405 : f32 to vector<64x128xf32>
    %407 = arith.mulf %406, %5 : vector<64x128xf32>
    %408 = arith.addf %404, %407 : vector<64x128xf32>
    %c23_155 = arith.constant 23 : index
    %409 = memref.load %arg8[%c23_155] : memref<24xf32, #tpu.memory_space<smem>>
    %410 = math.absf %408 : vector<64x128xf32>
    %411 = vector.broadcast %409 : f32 to vector<64x128xf32>
    %412 = arith.mulf %411, %410 : vector<64x128xf32>
    %413 = arith.addf %399, %412 : vector<64x128xf32>
    %cst_156 = arith.constant -1.000000e+30 : f32
    %414 = vector.broadcast %cst_156 : f32 to vector<64x128xf32>
    %415 = arith.select %3, %413, %414 : vector<64x128xi1>, vector<64x128xf32>
    %cst_157 = arith.constant dense<0xFF800000> : vector<64xf32>
    %416 = vector.multi_reduction <maximumf>, %415, %cst_157 [1] : vector<64x128xf32> to vector<64xf32>
    %417 = vector.shape_cast %416 : vector<64xf32> to vector<64x1xf32>
    %418 = vector.broadcast %417 : vector<64x1xf32> to vector<64x128xf32>
    %419 = arith.subf %415, %418 : vector<64x128xf32>
    %420 = math.exp %419 : vector<64x128xf32>
    %cst_158 = arith.constant 0.000000e+00 : f32
    %421 = vector.broadcast %cst_158 : f32 to vector<64x128xf32>
    %422 = arith.select %3, %420, %421 : vector<64x128xi1>, vector<64x128xf32>
    %cst_159 = arith.constant dense<0.000000e+00> : vector<64xf32>
    %423 = vector.multi_reduction <add>, %422, %cst_159 [1] : vector<64x128xf32> to vector<64xf32>
    %424 = vector.shape_cast %423 : vector<64xf32> to vector<64x1xf32>
    %cst_160 = arith.constant 0.000000e+00 : f32
    %425 = vector.broadcast %cst_160 : f32 to vector<64x1xf32>
    %426 = arith.cmpf ogt, %424, %425 : vector<64x1xf32>
    %cst_161 = arith.constant 1.000000e+00 : f32
    %427 = vector.broadcast %cst_161 : f32 to vector<64x1xf32>
    %428 = arith.select %426, %424, %427 : vector<64x1xi1>, vector<64x1xf32>
    %429 = tpu.reciprocal %428 {approx = true} : vector<64x1xf32> -> vector<64x1xf32>
    %430 = vector.broadcast %429 : vector<64x1xf32> to vector<64x128xf32>
    %431 = arith.mulf %422, %430 : vector<64x128xf32>
    %432 = arith.truncf %431 : vector<64x128xf32> to vector<64x128xbf16>
    %c2_162 = arith.constant 2 : index
    %c0_163 = arith.constant 0 : index
    %c0_164 = arith.constant 0 : index
    %433 = vector.load %arg3[%c2_162, %c0_163, %c0_164] : memref<3x128x128xbf16, #tpu.memory_space<vmem>>, vector<1x128x128xbf16>
    %434 = vector.shape_cast %433 : vector<1x128x128xbf16> to vector<128x128xbf16>
    %cst_165 = arith.constant dense<0.000000e+00> : vector<64x128xf32>
    %435 = tpu.matmul %432, %434, %cst_165 {dimension_numbers = #tpu.dot_dimension_numbers<[1], [0], [0], [1], [0, 0, 1, 1], [], []>} : vector<64x128xbf16>, vector<128x128xbf16>, vector<64x128xf32> -> vector<64x128xf32>
    %436 = arith.addf %292, %435 : vector<64x128xf32>
    %c0_166 = arith.constant 0 : index
    %c0_167 = arith.constant 0 : index
    %437 = vector.load %arg6[%c0_166, %c0_167] : memref<1x128xf32, #tpu.memory_space<vmem>>, vector<1x128xf32>
    %438 = vector.broadcast %437 : vector<1x128xf32> to vector<64x128xf32>
    %439 = arith.addf %436, %438 : vector<64x128xf32>
    %cst_168 = arith.constant 0.000000e+00 : f32
    %440 = vector.broadcast %cst_168 : f32 to vector<64x128xf32>
    %441 = arith.maximumf %439, %440 : vector<64x128xf32>
    %442 = arith.truncf %441 : vector<64x128xf32> to vector<64x128xbf16>
    %c0_169 = arith.constant 0 : index
    %c0_170 = arith.constant 0 : index
    %443 = vector.load %arg10[%c0_169, %c0_170] : memref<64x128xbf16, #tpu.memory_space<vmem>>, vector<64x128xbf16>
    tpu.vector_store %arg10[%c0_169, %c0_170], %442 {strides = array<i32>} : memref<64x128xbf16, #tpu.memory_space<vmem>>, vector<64x128xbf16>,
    return
  }
  func.func @transform_0(%arg0: i32) -> (i32, i32) {
    %c0_i32 = arith.constant 0 : i32
    %c0_i32_0 = arith.constant 0 : i32
    return %arg0, %c0_i32 : i32, i32
  }
  func.func @transform_1(%arg0: i32) -> (i32, i32) {
    %c0_i32 = arith.constant 0 : i32
    %c0_i32_0 = arith.constant 0 : i32
    %c0_i32_1 = arith.constant 0 : i32
    return %c0_i32, %c0_i32_0 : i32, i32
  }
  func.func @transform_2(%arg0: i32) -> (i32, i32, i32) {
    %c0_i32 = arith.constant 0 : i32
    %c0_i32_0 = arith.constant 0 : i32
    %c0_i32_1 = arith.constant 0 : i32
    %c0_i32_2 = arith.constant 0 : i32
    return %c0_i32, %c0_i32_0, %c0_i32_1 : i32, i32, i32
  }
  func.func @transform_3(%arg0: i32) -> (i32, i32) {
    %c0_i32 = arith.constant 0 : i32
    %c0_i32_0 = arith.constant 0 : i32
    return %arg0, %c0_i32 : i32, i32
  }
  func.func @transform_4(%arg0: i32) -> (i32, i32) {
    %c0_i32 = arith.constant 0 : i32
    %c0_i32_0 = arith.constant 0 : i32
    return %arg0, %c0_i32 : i32, i32
  }
  func.func @transform_5(%arg0: i32) -> (i32, i32) {
    %c0_i32 = arith.constant 0 : i32
    %c0_i32_0 = arith.constant 0 : i32
    %c0_i32_1 = arith.constant 0 : i32
    return %c0_i32, %c0_i32_0 : i32, i32
  }
  func.func @transform_6(%arg0: i32) -> i32 {
    %c0_i32 = arith.constant 0 : i32
    %c0_i32_0 = arith.constant 0 : i32
    return %c0_i32 : i32
  }
  func.func @transform_7(%arg0: i32) -> i32 {
    %c0_i32 = arith.constant 0 : i32
    %c0_i32_0 = arith.constant 0 : i32
    return %c0_i32 : i32
  }
  func.func @transform_8(%arg0: i32) -> i32 {
    %c0_i32 = arith.constant 0 : i32
    %c0_i32_0 = arith.constant 0 : i32
    return %c0_i32 : i32
  }
  func.func @transform_9(%arg0: i32) -> (i32, i32) {
    %c0_i32 = arith.constant 0 : i32
    %c0_i32_0 = arith.constant 0 : i32
    return %arg0, %c0_i32 : i32, i32
  }
}

</mosaic_0001>

<llo_original>
// kernel: tpu_custom_call.1
$region0: #{tpu_custom_call.1}
  #allocation0 [shape = 'u32[]', space=smem, size = 0x4, offset = 0x4, fixed_abs, tag = 'smem constant byte address 0x4 - core index']
  #allocation1 [shape = 'u32[144,128]{1,0:T(1,128)}', space=vmem, size = 0x12000, scoped, tag = 'internal scratch']
  %s0 = inlined_call_operand.vmem [shape: f32[128,27], index: 0, kind: input, shape index: {}]
  %s1 = inlined_call_operand.vmem [shape: f32[27,128], index: 1, kind: input, shape index: {}]
  %s2 = inlined_call_operand.hbm [shape: bf16[3,128,128], index: 2, kind: input, shape index: {}]
  %s3 = inlined_call_operand.vmem [shape: bf16[128,128], index: 3, kind: input, shape index: {}]
  %s4 = inlined_call_operand.vmem [shape: bf16[128,128], index: 4, kind: input, shape index: {}]
  %s5 = inlined_call_operand.vmem [shape: f32[1,128], index: 5, kind: input, shape index: {}]
  %s6 = inlined_call_operand.vmem [shape: f32[24], index: 6, kind: input, shape index: {}]
  %s7 = inlined_call_operand.vmem [shape: f32[24], index: 7, kind: input, shape index: {}]
  %s8 = inlined_call_operand.vmem [shape: f32[3], index: 8, kind: input, shape index: {}]
  %s9 = inlined_call_operand.hbm [shape: bf16[128,128], index: 9, kind: output, shape index: {}]
  %s10 = sld [smem:[#allocation0]]
  $region85: #{tpu_custom_call.1} parent=0
    _
  %s12 = ssub.s32 1, %s10
  %s13 = scalar_select 0, %s12, %s10
  $region1: #{tpu_custom_call.1} parent=0
    #allocation2 [shape = 'u8[98304]{0}', space=vmem, size = 0x18000, scoped, tag = 'input window, operand 2, single buffered']
    #allocation3 [shape = 's32[2]{0}', space=sflag, size = 0x8, scoped, tag = 'scoped memory for tpu_custom_call.1']
    #allocation4 [shape = 's32[2]{0}', space=sflag, size = 0x8, scoped, tag = 'scoped memory for tpu_custom_call.1']
    #allocation5 [shape = 's32[2]{0}', space=sflag, size = 0x8, scoped, tag = 'scoped memory for tpu_custom_call.1']
    #allocation6 [shape = 'u8[512]{0}', space=smem, size = 0x200, scoped, tag = 'input window, operand 6, single buffered']
    #allocation7 [shape = 'u8[512]{0}', space=smem, size = 0x200, scoped, tag = 'input window, operand 7, single buffered']
    #allocation8 [shape = 's32[1]{0}', space=sflag, size = 0x4, scoped, tag = 'scoped memory for tpu_custom_call.1']
    #allocation9 [shape = 'u8[512]{0}', space=smem, size = 0x200, scoped, tag = 'input window, operand 8, single buffered']
    #allocation10 [shape = 'u8[32768]{0}', space=vmem, size = 0x8000, scoped, tag = 'output window, operand 0']
    %14 = vsyncpa [#allocation3], 0
    %15 = vsyncpa [#allocation5], 0
    %16 = vsyncpa [#allocation8], 0
    %17 = vsyncpa [#allocation4], 0
    %s18 = scalar_lea.sflag [#allocation4], 1
    %19 = vsyncpa %s18, 0
    loop: start=0, step=1, limit=4
    $region2: #{tpu_custom_call.1} parent=1 // loop_pre_header
      _
    $region3: #{tpu_custom_call.1} parent=1 // loop_header
      %s21 = sphi 0, %s25
      %p22 = scmp.ge.s32.totalorder %s21, 4
      %s31 = sphi 0, %s33
      %s34 = sphi 0, %s31
      %s35 = sphi 0, %s34
      %s51 = sphi 0, %s35
      %s55 = sphi 0, %s55
      %s57 = sphi 0, %s55
      %s58 = sphi 0, %s57
      %s72 = sphi 0, %s58
      %s76 = sphi 0, %s76
      %s78 = sphi 0, %s76
      %s79 = sphi 0, %s78
      %s93 = sphi 0, %s79
      %s99 = sphi 0, %s101
      %s102 = sphi 0, %s99
      %s103 = sphi 0, %s102
      %s119 = sphi 0, %s103
      %s125 = sphi 0, %s127
      %s128 = sphi 0, %s125
      %s129 = sphi 0, %s128
      %s145 = sphi 0, %s129
      %s149 = sphi 0, %s149
      %s151 = sphi 0, %s149
      %s152 = sphi 0, %s151
      %s166 = sphi 0, %s152
      %s170 = sphi 0, %s170
      %s172 = sphi 0, %s170
      %s173 = sphi 0, %s172
      %s187 = sphi 0, %s173
      %s191 = sphi 0, %s191
      %s193 = sphi 0, %s191
      %s194 = sphi 0, %s193
      %s208 = sphi 0, %s194
      %s212 = sphi 0, %s212
      %s214 = sphi 0, %s212
      %s215 = sphi 0, %s214
      %s229 = sphi 0, %s215
      %s235 = sphi 0, %s237
      %s238 = sphi 0, %s235
      %s239 = sphi 0, %s238
      %s255 = sphi 0, %s239
    $region4: #{tpu_custom_call.1} parent=1 // loop_header_branch
      %24 = sbr.rel (%p22) target = $region8
    $region5: #{tpu_custom_call.1} parent=1 // loop_body
      %s26 = ssub.s32 %s21, 1
      %s27 = ssub.s32 %s21, 2
      %s28 = sadd.s32 %s21, 1
      %s29 = ssub.s32 %s21, %s28
      %p30 = scmp.eq.s32.totalorder %s29, 0
      %s32 = sadd.s32 %s31, 1
      %s33 = scalar_select %p30, %s31, %s32
      %p36 = pneg %p30
      %p37 = scmp.eq.s32.totalorder %s21, 1
      %p38 = por %p36, %p37
      %p39 = scmp.ne.s32.totalorder %s31, %s34
      %p40 = scmp.eq.s32.totalorder %s21, 0
      %p41 = por %p39, %p40
      %p42 = scmp.ne.s32.totalorder %s31, %s34
      %p43 = scmp.eq.s32.totalorder %s26, 1
      %p44 = por %p42, %p43
      %p45 = scmp.ne.s32.totalorder %s34, %s35
      %p46 = scmp.eq.s32.totalorder %s26, 0
      %p47 = por %p45, %p46
      %p48 = scmp.ne.s32.totalorder %s34, %s35
      %p49 = scmp.eq.s32.totalorder %s27, 1
      %p50 = por %p48, %p49
      %p52 = scmp.ne.s32.totalorder %s35, %s51
      %p53 = scmp.eq.s32.totalorder %s27, 0
      %p54 = por %p52, %p53
      %s56 = sadd.s32 %s55, 1
      %p59 = scmp.eq.s32.totalorder %s21, 1
      %p60 = scmp.ne.s32.totalorder %s55, %s57
      %p61 = scmp.eq.s32.totalorder %s21, 0
      %p62 = por %p60, %p61
      %p63 = scmp.ne.s32.totalorder %s55, %s57
      %p64 = scmp.eq.s32.totalorder %s26, 1
      %p65 = por %p63, %p64
      %p66 = scmp.ne.s32.totalorder %s57, %s58
      %p67 = scmp.eq.s32.totalorder %s26, 0
      %p68 = por %p66, %p67
      %p69 = scmp.ne.s32.totalorder %s57, %s58
      %p70 = scmp.eq.s32.totalorder %s27, 1
      %p71 = por %p69, %p70
      %p73 = scmp.ne.s32.totalorder %s58, %s72
      %p74 = scmp.eq.s32.totalorder %s27, 0
      %p75 = por %p73, %p74
      %s77 = sadd.s32 %s76, 1
      %p80 = scmp.eq.s32.totalorder %s21, 1
      %p81 = scmp.ne.s32.totalorder %s76, %s78
      %p82 = scmp.eq.s32.totalorder %s21, 0
      %p83 = por %p81, %p82
      %p84 = scmp.ne.s32.totalorder %s76, %s78
      %p85 = scmp.eq.s32.totalorder %s26, 1
      %p86 = por %p84, %p85
      %p87 = scmp.ne.s32.totalorder %s78, %s79
      %p88 = scmp.eq.s32.totalorder %s26, 0
      %p89 = por %p87, %p88
      %p90 = scmp.ne.s32.totalorder %s78, %s79
      %p91 = scmp.eq.s32.totalorder %s27, 1
      %p92 = por %p90, %p91
      %p94 = scmp.ne.s32.totalorder %s79, %s93
      %p95 = scmp.eq.s32.totalorder %s27, 0
      %p96 = por %p94, %p95
      %s97 = ssub.s32 %s21, %s28
      %p98 = scmp.eq.s32.totalorder %s97, 0
      %s100 = sadd.s32 %s99, 1
      %s101 = scalar_select %p98, %s99, %s100
      %p104 = pneg %p98
      %p105 = scmp.eq.s32.totalorder %s21, 1
      %p106 = por %p104, %p105
      %p107 = scmp.ne.s32.totalorder %s99, %s102
      %p108 = scmp.eq.s32.totalorder %s21, 0
      %p109 = por %p107, %p108
      %p110 = scmp.ne.s32.totalorder %s99, %s102
      %p111 = scmp.eq.s32.totalorder %s26, 1
      %p112 = por %p110, %p111
      %p113 = scmp.ne.s32.totalorder %s102, %s103
      %p114 = scmp.eq.s32.totalorder %s26, 0
      %p115 = por %p113, %p114
      %p116 = scmp.ne.s32.totalorder %s102, %s103
      %p117 = scmp.eq.s32.totalorder %s27, 1
      %p118 = por %p116, %p117
      %p120 = scmp.ne.s32.totalorder %s103, %s119
      %p121 = scmp.eq.s32.totalorder %s27, 0
      %p122 = por %p120, %p121
      %s123 = ssub.s32 %s21, %s28
      %p124 = scmp.eq.s32.totalorder %s123, 0
      %s126 = sadd.s32 %s125, 1
      %s127 = scalar_select %p124, %s125, %s126
      %p130 = pneg %p124
      %p131 = scmp.eq.s32.totalorder %s21, 1
      %p132 = por %p130, %p131
      %p133 = scmp.ne.s32.totalorder %s125, %s128
      %p134 = scmp.eq.s32.totalorder %s21, 0
      %p135 = por %p133, %p134
      %p136 = scmp.ne.s32.totalorder %s125, %s128
      %p137 = scmp.eq.s32.totalorder %s26, 1
      %p138 = por %p136, %p137
      %p139 = scmp.ne.s32.totalorder %s128, %s129
      %p140 = scmp.eq.s32.totalorder %s26, 0
      %p141 = por %p139, %p140
      %p142 = scmp.ne.s32.totalorder %s128, %s129
      %p143 = scmp.eq.s32.totalorder %s27, 1
      %p144 = por %p142, %p143
      %p146 = scmp.ne.s32.totalorder %s129, %s145
      %p147 = scmp.eq.s32.totalorder %s27, 0
      %p148 = por %p146, %p147
      %s150 = sadd.s32 %s149, 1
      %p153 = scmp.eq.s32.totalorder %s21, 1
      %p154 = scmp.ne.s32.totalorder %s149, %s151
      %p155 = scmp.eq.s32.totalorder %s21, 0
      %p156 = por %p154, %p155
      %p157 = scmp.ne.s32.totalorder %s149, %s151
      %p158 = scmp.eq.s32.totalorder %s26, 1
      %p159 = por %p157, %p158
      %p160 = scmp.ne.s32.totalorder %s151, %s152
      %p161 = scmp.eq.s32.totalorder %s26, 0
      %p162 = por %p160, %p161
      %p163 = scmp.ne.s32.totalorder %s151, %s152
      %p164 = scmp.eq.s32.totalorder %s27, 1
      %p165 = por %p163, %p164
      %p167 = scmp.ne.s32.totalorder %s152, %s166
      %p168 = scmp.eq.s32.totalorder %s27, 0
      %p169 = por %p167, %p168
      %s171 = sadd.s32 %s170, 1
      %p174 = scmp.eq.s32.totalorder %s21, 1
      %p175 = scmp.ne.s32.totalorder %s170, %s172
      %p176 = scmp.eq.s32.totalorder %s21, 0
      %p177 = por %p175, %p176
      %p178 = scmp.ne.s32.totalorder %s170, %s172
      %p179 = scmp.eq.s32.totalorder %s26, 1
      %p180 = por %p178, %p179
      %p181 = scmp.ne.s32.totalorder %s172, %s173
      %p182 = scmp.eq.s32.totalorder %s26, 0
      %p183 = por %p181, %p182
      %p184 = scmp.ne.s32.totalorder %s172, %s173
      %p185 = scmp.eq.s32.totalorder %s27, 1
      %p186 = por %p184, %p185
      %p188 = scmp.ne.s32.totalorder %s173, %s187
      %p189 = scmp.eq.s32.totalorder %s27, 0
      %p190 = por %p188, %p189
      %s192 = sadd.s32 %s191, 1
      %p195 = scmp.eq.s32.totalorder %s21, 1
      %p196 = scmp.ne.s32.totalorder %s191, %s193
      %p197 = scmp.eq.s32.totalorder %s21, 0
      %p198 = por %p196, %p197
      %p199 = scmp.ne.s32.totalorder %s191, %s193
      %p200 = scmp.eq.s32.totalorder %s26, 1
      %p201 = por %p199, %p200
      %p202 = scmp.ne.s32.totalorder %s193, %s194
      %p203 = scmp.eq.s32.totalorder %s26, 0
      %p204 = por %p202, %p203
      %p205 = scmp.ne.s32.totalorder %s193, %s194
      %p206 = scmp.eq.s32.totalorder %s27, 1
      %p207 = por %p205, %p206
      %p209 = scmp.ne.s32.totalorder %s194, %s208
      %p210 = scmp.eq.s32.totalorder %s27, 0
      %p211 = por %p209, %p210
      %s213 = sadd.s32 %s212, 1
      %p216 = scmp.eq.s32.totalorder %s21, 1
      %p217 = scmp.ne.s32.totalorder %s212, %s214
      %p218 = scmp.eq.s32.totalorder %s21, 0
      %p219 = por %p217, %p218
      %p220 = scmp.ne.s32.totalorder %s212, %s214
      %p221 = scmp.eq.s32.totalorder %s26, 1
      %p222 = por %p220, %p221
      %p223 = scmp.ne.s32.totalorder %s214, %s215
      %p224 = scmp.eq.s32.totalorder %s26, 0
      %p225 = por %p223, %p224
      %p226 = scmp.ne.s32.totalorder %s214, %s215
      %p227 = scmp.eq.s32.totalorder %s27, 1
      %p228 = por %p226, %p227
      %p230 = scmp.ne.s32.totalorder %s215, %s229
      %p231 = scmp.eq.s32.totalorder %s27, 0
      %p232 = por %p230, %p231
      %s233 = ssub.s32 %s21, %s28
      %p234 = scmp.eq.s32.totalorder %s233, 0
      %s236 = sadd.s32 %s235, 1
      %s237 = scalar_select %p234, %s235, %s236
      %p240 = pneg %p234
      %p241 = scmp.eq.s32.totalorder %s21, 1
      %p242 = por %p240, %p241
      %p243 = scmp.ne.s32.totalorder %s235, %s238
      %p244 = scmp.eq.s32.totalorder %s21, 0
      %p245 = por %p243, %p244
      %p246 = scmp.ne.s32.totalorder %s235, %s238
      %p247 = scmp.eq.s32.totalorder %s26, 1
      %p248 = por %p246, %p247
      %p249 = scmp.ne.s32.totalorder %s238, %s239
      %p250 = scmp.eq.s32.totalorder %s26, 0
      %p251 = por %p249, %p250
      %p252 = scmp.ne.s32.totalorder %s238, %s239
      %p253 = scmp.eq.s32.totalorder %s27, 1
      %p254 = por %p252, %p253
      %p256 = scmp.ne.s32.totalorder %s239, %s255
      %p257 = scmp.eq.s32.totalorder %s27, 0
      %p258 = por %p256, %p257
      %p259 = scmp.le.s32.totalorder 1, %s21
      %p260 = scmp.lt.s32.totalorder %s21, 3
      %p261 = pnand %p259, %p260
      %p262 = pneg %p261
      // Predicated region
      $region9: #{tpu_custom_call.1} parent=5 // pred_check
        _
      $region10: #{tpu_custom_call.1} parent=5 // pred_check_branch
        %264 = sbr.rel (%p261) target = $region12
      $region11: #{tpu_custom_call.1} parent=5 // pred_region
        %s265 = ssub.s32 %s21, 1
        // Predicated region
        $region13: #{tpu_custom_call.1} parent=11 // pred_check
          %p266 = pneg %p68
        $region14: #{tpu_custom_call.1} parent=11 // pred_check_branch
          %268 = sbr.rel (%p266) target = $region16
        $region15: #{tpu_custom_call.1} parent=11 // pred_region
          _
        $region16: #{tpu_custom_call.1} parent=11 // pred_fallthru
          _
        // Predicated region
        $region17: #{tpu_custom_call.1} parent=11 // pred_check
          %p269 = pneg %p89
        $region18: #{tpu_custom_call.1} parent=11 // pred_check_branch
          %271 = sbr.rel (%p269) target = $region20
        $region19: #{tpu_custom_call.1} parent=11 // pred_region
          %s273 = ssub.s32 3072, 3072
          %274 = vsyncadd [#allocation3], %s273
          %s275 = sshll.u32 [#allocation2], 4
          %s276 = int_to_ptr.vmem [resolvable:$true] %s275
          %281 = dma.hbm_to_vmem [thread:$0]  %s2, 3072, %s276, [#allocation3], 64, 64, 4
        $region20: #{tpu_custom_call.1} parent=11 // pred_fallthru
          _
        // Predicated region
        $region21: #{tpu_custom_call.1} parent=11 // pred_check
          %p282 = pneg %p162
        $region22: #{tpu_custom_call.1} parent=11 // pred_check_branch
          %284 = sbr.rel (%p282) target = $region24
        $region23: #{tpu_custom_call.1} parent=11 // pred_region
          _
        $region24: #{tpu_custom_call.1} parent=11 // pred_fallthru
          _
        // Predicated region
        $region25: #{tpu_custom_call.1} parent=11 // pred_check
          %p285 = pneg %p183
        $region26: #{tpu_custom_call.1} parent=11 // pred_check_branch
          %287 = sbr.rel (%p285) target = $region28
        $region27: #{tpu_custom_call.1} parent=11 // pred_region
          %s289 = ssub.s32 16, 16
          %290 = vsyncadd [#allocation5], %s289
          %s292 = sshll.u32 %s6, 4
          %s293 = int_to_ptr.vmem [resolvable:$true] %s292
          %295 = dma.vmem_to_smem %s293, 16, [#allocation6], [#allocation5]
        $region28: #{tpu_custom_call.1} parent=11 // pred_fallthru
          _
        // Predicated region
        $region29: #{tpu_custom_call.1} parent=11 // pred_check
          %p296 = pneg %p204
        $region30: #{tpu_custom_call.1} parent=11 // pred_check_branch
          %298 = sbr.rel (%p296) target = $region32
        $region31: #{tpu_custom_call.1} parent=11 // pred_region
          %s300 = ssub.s32 16, 16
          %301 = vsyncadd [#allocation8], %s300
          %s303 = sshll.u32 %s7, 4
          %s304 = int_to_ptr.vmem [resolvable:$true] %s303
          %306 = dma.vmem_to_smem %s304, 16, [#allocation7], [#allocation8]
        $region32: #{tpu_custom_call.1} parent=11 // pred_fallthru
          _
        // Predicated region
        $region33: #{tpu_custom_call.1} parent=11 // pred_check
          %p307 = pneg %p225
        $region34: #{tpu_custom_call.1} parent=11 // pred_check_branch
          %309 = sbr.rel (%p307) target = $region36
        $region35: #{tpu_custom_call.1} parent=11 // pred_region
          %s311 = ssub.s32 16, 16
          %312 = vsyncadd [#allocation8], %s311
          %s314 = sshll.u32 %s8, 4
          %s315 = int_to_ptr.vmem [resolvable:$true] %s314
          %317 = dma.vmem_to_smem %s315, 16, [#allocation9], [#allocation8]
        $region36: #{tpu_custom_call.1} parent=11 // pred_fallthru
          _
      $region12: #{tpu_custom_call.1} parent=5 // pred_fallthru
        _
      %p318 = scmp.lt.s32.totalorder %s21, 2
      // Predicated region
      $region37: #{tpu_custom_call.1} parent=5 // pred_check
        %p319 = pneg %p318
      $region38: #{tpu_custom_call.1} parent=5 // pred_check_branch
        %321 = sbr.rel (%p319) target = $region40
      $region39: #{tpu_custom_call.1} parent=5 // pred_region
        // Predicated region
        $region41: #{tpu_custom_call.1} parent=39 // pred_check
          %p322 = pneg %p41
        $region42: #{tpu_custom_call.1} parent=39 // pred_check_branch
          %324 = sbr.rel (%p322) target = $region44
        $region43: #{tpu_custom_call.1} parent=39 // pred_region
          %s325 = smul.u32 8, %s21
          %p326 = scmp.lt.s32.totalorder %s325, 15
          %s327 = scalar_select %p326, %s325, 15
          %s328 = smul.addr %s327, 8
          %s329 = scalar_lea.vmem %s0, %s328
          %s330 = smul.u32 8, %s21
        $region44: #{tpu_custom_call.1} parent=39 // pred_fallthru
          _
        // Predicated region
        $region45: #{tpu_custom_call.1} parent=39 // pred_check
          %p331 = pneg %p109
        $region46: #{tpu_custom_call.1} parent=39 // pred_check_branch
          %333 = sbr.rel (%p331) target = $region48
        $region47: #{tpu_custom_call.1} parent=39 // pred_region
          %s334 = smul.u32 8, %s21
          %p335 = scmp.lt.s32.totalorder %s334, 15
          %s336 = scalar_select %p335, %s334, 15
          %s337 = smul.addr %s336, 4
          %s338 = scalar_lea.vmem %s3, %s337
          %s339 = smul.u32 8, %s21
        $region48: #{tpu_custom_call.1} parent=39 // pred_fallthru
          _
        // Predicated region
        $region49: #{tpu_custom_call.1} parent=39 // pred_check
          %p340 = pneg %p135
        $region50: #{tpu_custom_call.1} parent=39 // pred_check_branch
          %342 = sbr.rel (%p340) target = $region52
        $region51: #{tpu_custom_call.1} parent=39 // pred_region
          %s343 = smul.u32 8, %s21
          %p344 = scmp.lt.s32.totalorder %s343, 15
          %s345 = scalar_select %p344, %s343, 15
          %s346 = smul.addr %s345, 4
          %s347 = scalar_lea.vmem %s4, %s346
          %s348 = smul.u32 8, %s21
        $region52: #{tpu_custom_call.1} parent=39 // pred_fallthru
          _
      $region40: #{tpu_custom_call.1} parent=5 // pred_fallthru
        _
      %p349 = scmp.le.s32.totalorder 1, %s21
      %p350 = scmp.lt.s32.totalorder %s21, 3
      %p351 = pnand %p349, %p350
      %p352 = pneg %p351
      // Predicated region
      $region53: #{tpu_custom_call.1} parent=5 // pred_check
        _
      $region54: #{tpu_custom_call.1} parent=5 // pred_check_branch
        %354 = sbr.rel (%p351) target = $region56
      $region55: #{tpu_custom_call.1} parent=5 // pred_region
        %s355 = ssub.s32 %s21, 1
        // Predicated region
        $region57: #{tpu_custom_call.1} parent=55 // pred_check
          %p356 = pneg %p89
        $region58: #{tpu_custom_call.1} parent=55 // pred_check_branch
          %358 = sbr.rel (%p356) target = $region60
        $region59: #{tpu_custom_call.1} parent=55 // pred_region
          %359 = dma.done [#allocation3], 3072
        $region60: #{tpu_custom_call.1} parent=55 // pred_fallthru
          _
        // Predicated region
        $region61: #{tpu_custom_call.1} parent=55 // pred_check
          %p360 = pneg %p183
        $region62: #{tpu_custom_call.1} parent=55 // pred_check_branch
          %362 = sbr.rel (%p360) target = $region64
        $region63: #{tpu_custom_call.1} parent=55 // pred_region
          %363 = dma.done [#allocation5], 16
        $region64: #{tpu_custom_call.1} parent=55 // pred_fallthru
          _
        // Predicated region
        $region65: #{tpu_custom_call.1} parent=55 // pred_check
          %p364 = pneg %p204
        $region66: #{tpu_custom_call.1} parent=55 // pred_check_branch
          %366 = sbr.rel (%p364) target = $region68
        $region67: #{tpu_custom_call.1} parent=55 // pred_region
          %367 = dma.done [#allocation8], 16
        $region68: #{tpu_custom_call.1} parent=55 // pred_fallthru
          _
        // Predicated region
        $region69: #{tpu_custom_call.1} parent=55 // pred_check
          %p368 = pneg %p225
        $region70: #{tpu_custom_call.1} parent=55 // pred_check_branch
          %370 = sbr.rel (%p368) target = $region72
        $region71: #{tpu_custom_call.1} parent=55 // pred_region
          %371 = dma.done [#allocation8], 16
        $region72: #{tpu_custom_call.1} parent=55 // pred_fallthru
          _
        %372 = sfence
        %s373 = smul.u32 8, %s26
        %p374 = scmp.lt.s32.totalorder %s373, 15
        %s375 = scalar_select %p374, %s373, 15
        %s376 = smul.addr %s375, 8
        %s377 = scalar_lea.vmem %s0, %s376
        %p378 = pneg %p47
        %p379 = pneg %p44
        %p380 = pneg %p68
        %p381 = pneg %p65
        %p382 = pneg %p89
        %p383 = pneg %p86
        %s384 = smul.u32 8, %s26
        %p385 = scmp.lt.s32.totalorder %s384, 15
        %s386 = scalar_select %p385, %s384, 15
        %s387 = smul.addr %s386, 4
        %s388 = scalar_lea.vmem %s3, %s387
        %p389 = pneg %p115
        %p390 = pneg %p112
        %s391 = smul.u32 8, %s26
        %p392 = scmp.lt.s32.totalorder %s391, 15
        %s393 = scalar_select %p392, %s391, 15
        %s394 = smul.addr %s393, 4
        %s395 = scalar_lea.vmem %s4, %s394
        %p396 = pneg %p141
        %p397 = pneg %p138
        %p398 = pneg %p162
        %p399 = pneg %p159
        %p400 = pneg %p183
        %p401 = pneg %p180
        %p402 = pneg %p204
        %p403 = pneg %p201
        %p404 = pneg %p225
        %p405 = pneg %p222
        %p406 = pneg %p251
        %p407 = pneg %p248
        %s408 = sand.u32 %s238, 1
        %s409 = scalar_lea.sflag [#allocation4], %s408
        %s410 = sand.u32 %s238, 1
        %s411 = smul.addr %s410, 32
        %s412 = scalar_lea.vmem [#allocation10], %s411
        %s413 = smul.u32 8, %s26
        %p414 = scmp.lt.s32.totalorder %s413, 15
        %s415 = scalar_select %p414, %s413, 15
        %s416 = smul.addr %s415, 8
        %s417 = scalar_lea.vmem %s0, %s416
        %s418 = smul.u32 8, %s26
        %s419 = smul.u32 8, %s26
        %p420 = scmp.lt.s32.totalorder %s419, 15
        %s421 = scalar_select %p420, %s419, 15
        %s422 = smul.addr %s421, 4
        %s423 = scalar_lea.vmem %s3, %s422
        %s424 = smul.u32 8, %s26
        %s425 = smul.u32 8, %s26
        %p426 = scmp.lt.s32.totalorder %s425, 15
        %s427 = scalar_select %p426, %s425, 15
        %s428 = smul.addr %s427, 4
        %s429 = scalar_lea.vmem %s4, %s428
        %s430 = smul.u32 8, %s26
        %s431 = smul.u32 8, %s26
        %v433 = vld [vmem:[%s423] sm:$0xf]
        %v434 = vld [vmem:[%s423 + $0x4] sm:$0xf]
        %v435 = vld [vmem:[%s423 + $0x8] sm:$0xf]
        %v436 = vld [vmem:[%s423 + $0xc] sm:$0xf]
        %v437 = vld [vmem:[%s423 + $0x10] sm:$0xf]
        %v438 = vld [vmem:[%s423 + $0x14] sm:$0xf]
        %v439 = vld [vmem:[%s423 + $0x18] sm:$0xf]
        %v440 = vld [vmem:[%s423 + $0x1c] sm:$0xf]
        %v441 = vunpack.c.l.bf16 %v433
        %v442 = vunpack.c.l.bf16 %v434
        %v443 = vunpack.c.l.bf16 %v435
        %v444 = vunpack.c.l.bf16 %v436
        %v445 = vunpack.c.l.bf16 %v437
        %v446 = vunpack.c.l.bf16 %v438
        %v447 = vunpack.c.l.bf16 %v439
        %v448 = vunpack.c.l.bf16 %v440
        %vm449 = vcmp.gt.f32.partialorder %v441, 0.0
        %vm450 = vcmp.gt.f32.partialorder %v442, 0.0
        %vm451 = vcmp.gt.f32.partialorder %v443, 0.0
        %vm452 = vcmp.gt.f32.partialorder %v444, 0.0
        %vm453 = vcmp.gt.f32.partialorder %v445, 0.0
        %vm454 = vcmp.gt.f32.partialorder %v446, 0.0
        %vm455 = vcmp.gt.f32.partialorder %v447, 0.0
        %vm456 = vcmp.gt.f32.partialorder %v448, 0.0
        %v457 = vld [vmem:[%s429] sm:$0xf]
        %v458 = vld [vmem:[%s429 + $0x4] sm:$0xf]
        %v459 = vld [vmem:[%s429 + $0x8] sm:$0xf]
        %v460 = vld [vmem:[%s429 + $0xc] sm:$0xf]
        %v461 = vld [vmem:[%s429 + $0x10] sm:$0xf]
        %v462 = vld [vmem:[%s429 + $0x14] sm:$0xf]
        %v463 = vld [vmem:[%s429 + $0x18] sm:$0xf]
        %v464 = vld [vmem:[%s429 + $0x1c] sm:$0xf]
        %v465 = vunpack.c.l.bf16 %v457
        %v466 = vunpack.c.l.bf16 %v458
        %v467 = vunpack.c.l.bf16 %v459
        %v468 = vunpack.c.l.bf16 %v460
        %v469 = vunpack.c.l.bf16 %v461
        %v470 = vunpack.c.l.bf16 %v462
        %v471 = vunpack.c.l.bf16 %v463
        %v472 = vunpack.c.l.bf16 %v464
        %v473 = vld [vmem:[%s417] sm:$0xff]
        %v474 = vld [vmem:[%s417 + $0x8] sm:$0xff]
        %v475 = vld [vmem:[%s417 + $0x10] sm:$0xff]
        %v476 = vld [vmem:[%s417 + $0x18] sm:$0xff]
        %v477 = vld [vmem:[%s417 + $0x20] sm:$0xff]
        %v478 = vld [vmem:[%s417 + $0x28] sm:$0xff]
        %v479 = vld [vmem:[%s417 + $0x30] sm:$0xff]
        %v480 = vld [vmem:[%s417 + $0x38] sm:$0xff]
        %v481 = vld [vmem:[%s1 + $0x18] sm:$0x1]
        %483 = vset.pattern.permute.xlu0 24
        %484 = vperm.xlu0 %483, %v473
        %v485 = vpop.permute.xlu0 %484
        %488 = vset.pattern.permute.xlu0 24
        %489 = vperm.xlu0 %488, %v474
        %v490 = vpop.permute.xlu0 %489
        %493 = vset.pattern.permute.xlu0 24
        %494 = vperm.xlu0 %493, %v475
        %v495 = vpop.permute.xlu0 %494
        %498 = vset.pattern.permute.xlu0 24
        %499 = vperm.xlu0 %498, %v476
        %v500 = vpop.permute.xlu0 %499
        %503 = vset.pattern.permute.xlu0 24
        %504 = vperm.xlu0 %503, %v477
        %v505 = vpop.permute.xlu0 %504
        %508 = vset.pattern.permute.xlu0 24
        %509 = vperm.xlu0 %508, %v478
        %v510 = vpop.permute.xlu0 %509
        %513 = vset.pattern.permute.xlu0 24
        %514 = vperm.xlu0 %513, %v479
        %v515 = vpop.permute.xlu0 %514
        %518 = vset.pattern.permute.xlu0 24
        %519 = vperm.xlu0 %518, %v480
        %v520 = vpop.permute.xlu0 %519
        %v522 = vlaneseq
        %v523 = vshrl.u32 %v522, 7
        %v524 = vsub.s32 0, %v523
        %v525 = vrot.slane %v481, %v524
        %v526 = vadd.f32 %v485, %v525
        %v527 = vadd.f32 %v490, %v525
        %v528 = vadd.f32 %v495, %v525
        %v529 = vadd.f32 %v500, %v525
        %v530 = vadd.f32 %v505, %v525
        %v531 = vadd.f32 %v510, %v525
        %v532 = vadd.f32 %v515, %v525
        %v533 = vadd.f32 %v520, %v525
        %s534 = sld [smem:[#allocation9]]
        %v535 = vstv %s534
        %v536 = vmul.f32 %v535, %v465
        %v537 = vmul.f32 %v535, %v466
        %v538 = vmul.f32 %v535, %v467
        %v539 = vmul.f32 %v535, %v468
        %v540 = vmul.f32 %v535, %v469
        %v541 = vmul.f32 %v535, %v470
        %v542 = vmul.f32 %v535, %v471
        %v543 = vmul.f32 %v535, %v472
        %v544 = vadd.f32 %v526, %v536
        %v545 = vadd.f32 %v527, %v537
        %v546 = vadd.f32 %v528, %v538
        %v547 = vadd.f32 %v529, %v539
        %v548 = vadd.f32 %v530, %v540
        %v549 = vadd.f32 %v531, %v541
        %v550 = vadd.f32 %v532, %v542
        %v551 = vadd.f32 %v533, %v543
        %v552 = vld [vmem:[%s1] sm:$0x1]
        %553 = vset.pattern.permute.xlu0 0
        %554 = vperm.xlu0 %553, %v473
        %v555 = vpop.permute.xlu0 %554
        %557 = vset.pattern.permute.xlu0 0
        %558 = vperm.xlu0 %557, %v474
        %v559 = vpop.permute.xlu0 %558
        %561 = vset.pattern.permute.xlu0 0
        %562 = vperm.xlu0 %561, %v475
        %v563 = vpop.permute.xlu0 %562
        %565 = vset.pattern.permute.xlu0 0
        %566 = vperm.xlu0 %565, %v476
        %v567 = vpop.permute.xlu0 %566
        %569 = vset.pattern.permute.xlu0 0
        %570 = vperm.xlu0 %569, %v477
        %v571 = vpop.permute.xlu0 %570
        %573 = vset.pattern.permute.xlu0 0
        %574 = vperm.xlu0 %573, %v478
        %v575 = vpop.permute.xlu0 %574
        %577 = vset.pattern.permute.xlu0 0
        %578 = vperm.xlu0 %577, %v479
        %v579 = vpop.permute.xlu0 %578
        %581 = vset.pattern.permute.xlu0 0
        %582 = vperm.xlu0 %581, %v480
        %v583 = vpop.permute.xlu0 %582
        %v585 = vlaneseq
        %v586 = vshrl.u32 %v585, 7
        %v587 = vsub.s32 0, %v586
        %v588 = vrot.slane %v552, %v587
        %v589 = vadd.f32 %v555, %v588
        %v590 = vadd.f32 %v559, %v588
        %v591 = vadd.f32 %v563, %v588
        %v592 = vadd.f32 %v567, %v588
        %v593 = vadd.f32 %v571, %v588
        %v594 = vadd.f32 %v575, %v588
        %v595 = vadd.f32 %v579, %v588
        %v596 = vadd.f32 %v583, %v588
        %s597 = sld [smem:[#allocation6]]
        %v598 = vstv %s597
        %v599 = vmul.f32 %v598, %v465
        %v600 = vmul.f32 %v598, %v466
        %v601 = vmul.f32 %v598, %v467
        %v602 = vmul.f32 %v598, %v468
        %v603 = vmul.f32 %v598, %v469
        %v604 = vmul.f32 %v598, %v470
        %v605 = vmul.f32 %v598, %v471
        %v606 = vmul.f32 %v598, %v472
        %v607 = vadd.f32 %v589, %v599
        %v608 = vadd.f32 %v590, %v600
        %v609 = vadd.f32 %v591, %v601
        %v610 = vadd.f32 %v592, %v602
        %v611 = vadd.f32 %v593, %v603
        %v612 = vadd.f32 %v594, %v604
        %v613 = vadd.f32 %v595, %v605
        %v614 = vadd.f32 %v596, %v606
        %s615 = sld [smem:[#allocation7]]
        %v616 = vand.u32 2147483647, %v607
        %v617 = vand.u32 2147483647, %v608
        %v618 = vand.u32 2147483647, %v609
        %v619 = vand.u32 2147483647, %v610
        %v620 = vand.u32 2147483647, %v611
        %v621 = vand.u32 2147483647, %v612
        %v622 = vand.u32 2147483647, %v613
        %v623 = vand.u32 2147483647, %v614
        %v624 = vstv %s615
        %v625 = vmul.f32 %v624, %v616
        %v626 = vmul.f32 %v624, %v617
        %v627 = vmul.f32 %v624, %v618
        %v628 = vmul.f32 %v624, %v619
        %v629 = vmul.f32 %v624, %v620
        %v630 = vmul.f32 %v624, %v621
        %v631 = vmul.f32 %v624, %v622
        %v632 = vmul.f32 %v624, %v623
        %v633 = vadd.f32 %v544, %v625
        %v634 = vadd.f32 %v545, %v626
        %v635 = vadd.f32 %v546, %v627
        %v636 = vadd.f32 %v547, %v628
        %v637 = vadd.f32 %v548, %v629
        %v638 = vadd.f32 %v549, %v630
        %v639 = vadd.f32 %v550, %v631
        %v640 = vadd.f32 %v551, %v632
        %v641 = vld [vmem:[%s1 + $0x1] sm:$0x1]
        %642 = vset.pattern.permute.xlu0 1
        %643 = vperm.xlu0 %642, %v473
        %v644 = vpop.permute.xlu0 %643
        %646 = vset.pattern.permute.xlu0 1
        %647 = vperm.xlu0 %646, %v474
        %v648 = vpop.permute.xlu0 %647
        %650 = vset.pattern.permute.xlu0 1
        %651 = vperm.xlu0 %650, %v475
        %v652 = vpop.permute.xlu0 %651
        %654 = vset.pattern.permute.xlu0 1
        %655 = vperm.xlu0 %654, %v476
        %v656 = vpop.permute.xlu0 %655
        %658 = vset.pattern.permute.xlu0 1
        %659 = vperm.xlu0 %658, %v477
        %v660 = vpop.permute.xlu0 %659
        %662 = vset.pattern.permute.xlu0 1
        %663 = vperm.xlu0 %662, %v478
        %v664 = vpop.permute.xlu0 %663
        %666 = vset.pattern.permute.xlu0 1
        %667 = vperm.xlu0 %666, %v479
        %v668 = vpop.permute.xlu0 %667
        %670 = vset.pattern.permute.xlu0 1
        %671 = vperm.xlu0 %670, %v480
        %v672 = vpop.permute.xlu0 %671
        %v674 = vlaneseq
        %v675 = vshrl.u32 %v674, 7
        %v676 = vsub.s32 0, %v675
        %v677 = vrot.slane %v641, %v676
        %v678 = vadd.f32 %v644, %v677
        %v679 = vadd.f32 %v648, %v677
        %v680 = vadd.f32 %v652, %v677
        %v681 = vadd.f32 %v656, %v677
        %v682 = vadd.f32 %v660, %v677
        %v683 = vadd.f32 %v664, %v677
        %v684 = vadd.f32 %v668, %v677
        %v685 = vadd.f32 %v672, %v677
        %s686 = sld [smem:[#allocation6 + $0x1]]
        %v687 = vstv %s686
        %v688 = vmul.f32 %v687, %v465
        %v689 = vmul.f32 %v687, %v466
        %v690 = vmul.f32 %v687, %v467
        %v691 = vmul.f32 %v687, %v468
        %v692 = vmul.f32 %v687, %v469
        %v693 = vmul.f32 %v687, %v470
        %v694 = vmul.f32 %v687, %v471
        %v695 = vmul.f32 %v687, %v472
        %v696 = vadd.f32 %v678, %v688
        %v697 = vadd.f32 %v679, %v689
        %v698 = vadd.f32 %v680, %v690
        %v699 = vadd.f32 %v681, %v691
        %v700 = vadd.f32 %v682, %v692
        %v701 = vadd.f32 %v683, %v693
        %v702 = vadd.f32 %v684, %v694
        %v703 = vadd.f32 %v685, %v695
        %s704 = sld [smem:[#allocation7 + $0x1]]
        %v705 = vand.u32 2147483647, %v696
        %v706 = vand.u32 2147483647, %v697
        %v707 = vand.u32 2147483647, %v698
        %v708 = vand.u32 2147483647, %v699
        %v709 = vand.u32 2147483647, %v700
        %v710 = vand.u32 2147483647, %v701
        %v711 = vand.u32 2147483647, %v702
        %v712 = vand.u32 2147483647, %v703
        %v713 = vstv %s704
        %v714 = vmul.f32 %v713, %v705
        %v715 = vmul.f32 %v713, %v706
        %v716 = vmul.f32 %v713, %v707
        %v717 = vmul.f32 %v713, %v708
        %v718 = vmul.f32 %v713, %v709
        %v719 = vmul.f32 %v713, %v710
        %v720 = vmul.f32 %v713, %v711
        %v721 = vmul.f32 %v713, %v712
        %v722 = vadd.f32 %v633, %v714
        %v723 = vadd.f32 %v634, %v715
        %v724 = vadd.f32 %v635, %v716
        %v725 = vadd.f32 %v636, %v717
        %v726 = vadd.f32 %v637, %v718
        %v727 = vadd.f32 %v638, %v719
        %v728 = vadd.f32 %v639, %v720
        %v729 = vadd.f32 %v640, %v721
        %v730 = vld [vmem:[%s1 + $0x2] sm:$0x1]
        %731 = vset.pattern.permute.xlu0 2
        %732 = vperm.xlu0 %731, %v473
        %v733 = vpop.permute.xlu0 %732
        %735 = vset.pattern.permute.xlu0 2
        %736 = vperm.xlu0 %735, %v474
        %v737 = vpop.permute.xlu0 %736
        %739 = vset.pattern.permute.xlu0 2
        %740 = vperm.xlu0 %739, %v475
        %v741 = vpop.permute.xlu0 %740
        %743 = vset.pattern.permute.xlu0 2
        %744 = vperm.xlu0 %743, %v476
        %v745 = vpop.permute.xlu0 %744
        %747 = vset.pattern.permute.xlu0 2
        %748 = vperm.xlu0 %747, %v477
        %v749 = vpop.permute.xlu0 %748
        %751 = vset.pattern.permute.xlu0 2
        %752 = vperm.xlu0 %751, %v478
        %v753 = vpop.permute.xlu0 %752
        %755 = vset.pattern.permute.xlu0 2
        %756 = vperm.xlu0 %755, %v479
        %v757 = vpop.permute.xlu0 %756
        %759 = vset.pattern.permute.xlu0 2
        %760 = vperm.xlu0 %759, %v480
        %v761 = vpop.permute.xlu0 %760
        %v763 = vlaneseq
        %v764 = vshrl.u32 %v763, 7
        %v765 = vsub.s32 0, %v764
        %v766 = vrot.slane %v730, %v765
        %v767 = vadd.f32 %v733, %v766
        %v768 = vadd.f32 %v737, %v766
        %v769 = vadd.f32 %v741, %v766
        %v770 = vadd.f32 %v745, %v766
        %v771 = vadd.f32 %v749, %v766
        %v772 = vadd.f32 %v753, %v766
        %v773 = vadd.f32 %v757, %v766
        %v774 = vadd.f32 %v761, %v766
        %s775 = sld [smem:[#allocation6 + $0x2]]
        %v776 = vstv %s775
        %v777 = vmul.f32 %v776, %v465
        %v778 = vmul.f32 %v776, %v466
        %v779 = vmul.f32 %v776, %v467
        %v780 = vmul.f32 %v776, %v468
        %v781 = vmul.f32 %v776, %v469
        %v782 = vmul.f32 %v776, %v470
        %v783 = vmul.f32 %v776, %v471
        %v784 = vmul.f32 %v776, %v472
        %v785 = vadd.f32 %v767, %v777
        %v786 = vadd.f32 %v768, %v778
        %v787 = vadd.f32 %v769, %v779
        %v788 = vadd.f32 %v770, %v780
        %v789 = vadd.f32 %v771, %v781
        %v790 = vadd.f32 %v772, %v782
        %v791 = vadd.f32 %v773, %v783
        %v792 = vadd.f32 %v774, %v784
        %s793 = sld [smem:[#allocation7 + $0x2]]
        %v794 = vand.u32 2147483647, %v785
        %v795 = vand.u32 2147483647, %v786
        %v796 = vand.u32 2147483647, %v787
        %v797 = vand.u32 2147483647, %v788
        %v798 = vand.u32 2147483647, %v789
        %v799 = vand.u32 2147483647, %v790
        %v800 = vand.u32 2147483647, %v791
        %v801 = vand.u32 2147483647, %v792
        %v802 = vstv %s793
        %v803 = vmul.f32 %v802, %v794
        %v804 = vmul.f32 %v802, %v795
        %v805 = vmul.f32 %v802, %v796
        %v806 = vmul.f32 %v802, %v797
        %v807 = vmul.f32 %v802, %v798
        %v808 = vmul.f32 %v802, %v799
        %v809 = vmul.f32 %v802, %v800
        %v810 = vmul.f32 %v802, %v801
        %v811 = vadd.f32 %v722, %v803
        %v812 = vadd.f32 %v723, %v804
        %v813 = vadd.f32 %v724, %v805
        %v814 = vadd.f32 %v725, %v806
        %v815 = vadd.f32 %v726, %v807
        %v816 = vadd.f32 %v727, %v808
        %v817 = vadd.f32 %v728, %v809
        %v818 = vadd.f32 %v729, %v810
        %v819 = vld [vmem:[%s1 + $0x3] sm:$0x1]
        %820 = vset.pattern.permute.xlu0 3
        %821 = vperm.xlu0 %820, %v473
        %v822 = vpop.permute.xlu0 %821
        %824 = vset.pattern.permute.xlu0 3
        %825 = vperm.xlu0 %824, %v474
        %v826 = vpop.permute.xlu0 %825
        %828 = vset.pattern.permute.xlu0 3
        %829 = vperm.xlu0 %828, %v475
        %v830 = vpop.permute.xlu0 %829
        %832 = vset.pattern.permute.xlu0 3
        %833 = vperm.xlu0 %832, %v476
        %v834 = vpop.permute.xlu0 %833
        %836 = vset.pattern.permute.xlu0 3
        %837 = vperm.xlu0 %836, %v477
        %v838 = vpop.permute.xlu0 %837
        %840 = vset.pattern.permute.xlu0 3
        %841 = vperm.xlu0 %840, %v478
        %v842 = vpop.permute.xlu0 %841
        %844 = vset.pattern.permute.xlu0 3
        %845 = vperm.xlu0 %844, %v479
        %v846 = vpop.permute.xlu0 %845
        %848 = vset.pattern.permute.xlu0 3
        %849 = vperm.xlu0 %848, %v480
        %v850 = vpop.permute.xlu0 %849
        %v852 = vlaneseq
        %v853 = vshrl.u32 %v852, 7
        %v854 = vsub.s32 0, %v853
        %v855 = vrot.slane %v819, %v854
        %v856 = vadd.f32 %v822, %v855
        %v857 = vadd.f32 %v826, %v855
        %v858 = vadd.f32 %v830, %v855
        %v859 = vadd.f32 %v834, %v855
        %v860 = vadd.f32 %v838, %v855
        %v861 = vadd.f32 %v842, %v855
        %v862 = vadd.f32 %v846, %v855
        %v863 = vadd.f32 %v850, %v855
        %s864 = sld [smem:[#allocation6 + $0x3]]
        %v865 = vstv %s864
        %v866 = vmul.f32 %v865, %v465
        %v867 = vmul.f32 %v865, %v466
        %v868 = vmul.f32 %v865, %v467
        %v869 = vmul.f32 %v865, %v468
        %v870 = vmul.f32 %v865, %v469
        %v871 = vmul.f32 %v865, %v470
        %v872 = vmul.f32 %v865, %v471
        %v873 = vmul.f32 %v865, %v472
        %v874 = vadd.f32 %v856, %v866
        %v875 = vadd.f32 %v857, %v867
        %v876 = vadd.f32 %v858, %v868
        %v877 = vadd.f32 %v859, %v869
        %v878 = vadd.f32 %v860, %v870
        %v879 = vadd.f32 %v861, %v871
        %v880 = vadd.f32 %v862, %v872
        %v881 = vadd.f32 %v863, %v873
        %s882 = sld [smem:[#allocation7 + $0x3]]
        %v883 = vand.u32 2147483647, %v874
        %v884 = vand.u32 2147483647, %v875
        %v885 = vand.u32 2147483647, %v876
        %v886 = vand.u32 2147483647, %v877
        %v887 = vand.u32 2147483647, %v878
        %v888 = vand.u32 2147483647, %v879
        %v889 = vand.u32 2147483647, %v880
        %v890 = vand.u32 2147483647, %v881
        %v891 = vstv %s882
        %v892 = vmul.f32 %v891, %v883
        %v893 = vmul.f32 %v891, %v884
        %v894 = vmul.f32 %v891, %v885
        %v895 = vmul.f32 %v891, %v886
        %v896 = vmul.f32 %v891, %v887
        %v897 = vmul.f32 %v891, %v888
        %v898 = vmul.f32 %v891, %v889
        %v899 = vmul.f32 %v891, %v890
        %v900 = vadd.f32 %v811, %v892
        %v901 = vadd.f32 %v812, %v893
        %v902 = vadd.f32 %v813, %v894
        %v903 = vadd.f32 %v814, %v895
        %v904 = vadd.f32 %v815, %v896
        %v905 = vadd.f32 %v816, %v897
        %v906 = vadd.f32 %v817, %v898
        %v907 = vadd.f32 %v818, %v899
        %v908 = vld [vmem:[%s1 + $0x4] sm:$0x1]
        %909 = vset.pattern.permute.xlu0 4
        %910 = vperm.xlu0 %909, %v473
        %v911 = vpop.permute.xlu0 %910
        %913 = vset.pattern.permute.xlu0 4
        %914 = vperm.xlu0 %913, %v474
        %v915 = vpop.permute.xlu0 %914
        %917 = vset.pattern.permute.xlu0 4
        %918 = vperm.xlu0 %917, %v475
        %v919 = vpop.permute.xlu0 %918
        %921 = vset.pattern.permute.xlu0 4
        %922 = vperm.xlu0 %921, %v476
        %v923 = vpop.permute.xlu0 %922
        %925 = vset.pattern.permute.xlu0 4
        %926 = vperm.xlu0 %925, %v477
        %v927 = vpop.permute.xlu0 %926
        %929 = vset.pattern.permute.xlu0 4
        %930 = vperm.xlu0 %929, %v478
        %v931 = vpop.permute.xlu0 %930
        %933 = vset.pattern.permute.xlu0 4
        %934 = vperm.xlu0 %933, %v479
        %v935 = vpop.permute.xlu0 %934
        %937 = vset.pattern.permute.xlu0 4
        %938 = vperm.xlu0 %937, %v480
        %v939 = vpop.permute.xlu0 %938
        %v941 = vlaneseq
        %v942 = vshrl.u32 %v941, 7
        %v943 = vsub.s32 0, %v942
        %v944 = vrot.slane %v908, %v943
        %v945 = vadd.f32 %v911, %v944
        %v946 = vadd.f32 %v915, %v944
        %v947 = vadd.f32 %v919, %v944
        %v948 = vadd.f32 %v923, %v944
        %v949 = vadd.f32 %v927, %v944
        %v950 = vadd.f32 %v931, %v944
        %v951 = vadd.f32 %v935, %v944
        %v952 = vadd.f32 %v939, %v944
        %s953 = sld [smem:[#allocation6 + $0x4]]
        %v954 = vstv %s953
        %v955 = vmul.f32 %v954, %v465
        %v956 = vmul.f32 %v954, %v466
        %v957 = vmul.f32 %v954, %v467
        %v958 = vmul.f32 %v954, %v468
        %v959 = vmul.f32 %v954, %v469
        %v960 = vmul.f32 %v954, %v470
        %v961 = vmul.f32 %v954, %v471
        %v962 = vmul.f32 %v954, %v472
        %v963 = vadd.f32 %v945, %v955
        %v964 = vadd.f32 %v946, %v956
        %v965 = vadd.f32 %v947, %v957
        %v966 = vadd.f32 %v948, %v958
        %v967 = vadd.f32 %v949, %v959
        %v968 = vadd.f32 %v950, %v960
        %v969 = vadd.f32 %v951, %v961
        %v970 = vadd.f32 %v952, %v962
        %s971 = sld [smem:[#allocation7 + $0x4]]
        %v972 = vand.u32 2147483647, %v963
        %v973 = vand.u32 2147483647, %v964
        %v974 = vand.u32 2147483647, %v965
        %v975 = vand.u32 2147483647, %v966
        %v976 = vand.u32 2147483647, %v967
        %v977 = vand.u32 2147483647, %v968
        %v978 = vand.u32 2147483647, %v969
        %v979 = vand.u32 2147483647, %v970
        %v980 = vstv %s971
        %v981 = vmul.f32 %v980, %v972
        %v982 = vmul.f32 %v980, %v973
        %v983 = vmul.f32 %v980, %v974
        %v984 = vmul.f32 %v980, %v975
        %v985 = vmul.f32 %v980, %v976
        %v986 = vmul.f32 %v980, %v977
        %v987 = vmul.f32 %v980, %v978
        %v988 = vmul.f32 %v980, %v979
        %v989 = vadd.f32 %v900, %v981
        %v990 = vadd.f32 %v901, %v982
        %v991 = vadd.f32 %v902, %v983
        %v992 = vadd.f32 %v903, %v984
        %v993 = vadd.f32 %v904, %v985
        %v994 = vadd.f32 %v905, %v986
        %v995 = vadd.f32 %v906, %v987
        %v996 = vadd.f32 %v907, %v988
        %v997 = vld [vmem:[%s1 + $0x5] sm:$0x1]
        %998 = vset.pattern.permute.xlu0 5
        %999 = vperm.xlu0 %998, %v473
        %v1000 = vpop.permute.xlu0 %999
        %1002 = vset.pattern.permute.xlu0 5
        %1003 = vperm.xlu0 %1002, %v474
        %v1004 = vpop.permute.xlu0 %1003
        %1006 = vset.pattern.permute.xlu0 5
        %1007 = vperm.xlu0 %1006, %v475
        %v1008 = vpop.permute.xlu0 %1007
        %1010 = vset.pattern.permute.xlu0 5
        %1011 = vperm.xlu0 %1010, %v476
        %v1012 = vpop.permute.xlu0 %1011
        %1014 = vset.pattern.permute.xlu0 5
        %1015 = vperm.xlu0 %1014, %v477
        %v1016 = vpop.permute.xlu0 %1015
        %1018 = vset.pattern.permute.xlu0 5
        %1019 = vperm.xlu0 %1018, %v478
        %v1020 = vpop.permute.xlu0 %1019
        %1022 = vset.pattern.permute.xlu0 5
        %1023 = vperm.xlu0 %1022, %v479
        %v1024 = vpop.permute.xlu0 %1023
        %1026 = vset.pattern.permute.xlu0 5
        %1027 = vperm.xlu0 %1026, %v480
        %v1028 = vpop.permute.xlu0 %1027
        %v1030 = vlaneseq
        %v1031 = vshrl.u32 %v1030, 7
        %v1032 = vsub.s32 0, %v1031
        %v1033 = vrot.slane %v997, %v1032
        %v1034 = vadd.f32 %v1000, %v1033
        %v1035 = vadd.f32 %v1004, %v1033
        %v1036 = vadd.f32 %v1008, %v1033
        %v1037 = vadd.f32 %v1012, %v1033
        %v1038 = vadd.f32 %v1016, %v1033
        %v1039 = vadd.f32 %v1020, %v1033
        %v1040 = vadd.f32 %v1024, %v1033
        %v1041 = vadd.f32 %v1028, %v1033
        %s1042 = sld [smem:[#allocation6 + $0x5]]
        %v1043 = vstv %s1042
        %v1044 = vmul.f32 %v1043, %v465
        %v1045 = vmul.f32 %v1043, %v466
        %v1046 = vmul.f32 %v1043, %v467
        %v1047 = vmul.f32 %v1043, %v468
        %v1048 = vmul.f32 %v1043, %v469
        %v1049 = vmul.f32 %v1043, %v470
        %v1050 = vmul.f32 %v1043, %v471
        %v1051 = vmul.f32 %v1043, %v472
        %v1052 = vadd.f32 %v1034, %v1044
        %v1053 = vadd.f32 %v1035, %v1045
        %v1054 = vadd.f32 %v1036, %v1046
        %v1055 = vadd.f32 %v1037, %v1047
        %v1056 = vadd.f32 %v1038, %v1048
        %v1057 = vadd.f32 %v1039, %v1049
        %v1058 = vadd.f32 %v1040, %v1050
        %v1059 = vadd.f32 %v1041, %v1051
        %s1060 = sld [smem:[#allocation7 + $0x5]]
        %v1061 = vand.u32 2147483647, %v1052
        %v1062 = vand.u32 2147483647, %v1053
        %v1063 = vand.u32 2147483647, %v1054
        %v1064 = vand.u32 2147483647, %v1055
        %v1065 = vand.u32 2147483647, %v1056
        %v1066 = vand.u32 2147483647, %v1057
        %v1067 = vand.u32 2147483647, %v1058
        %v1068 = vand.u32 2147483647, %v1059
        %v1069 = vstv %s1060
        %v1070 = vmul.f32 %v1069, %v1061
        %v1071 = vmul.f32 %v1069, %v1062
        %v1072 = vmul.f32 %v1069, %v1063
        %v1073 = vmul.f32 %v1069, %v1064
        %v1074 = vmul.f32 %v1069, %v1065
        %v1075 = vmul.f32 %v1069, %v1066
        %v1076 = vmul.f32 %v1069, %v1067
        %v1077 = vmul.f32 %v1069, %v1068
        %v1078 = vadd.f32 %v989, %v1070
        %v1079 = vadd.f32 %v990, %v1071
        %v1080 = vadd.f32 %v991, %v1072
        %v1081 = vadd.f32 %v992, %v1073
        %v1082 = vadd.f32 %v993, %v1074
        %v1083 = vadd.f32 %v994, %v1075
        %v1084 = vadd.f32 %v995, %v1076
        %v1085 = vadd.f32 %v996, %v1077
        %v1086 = vld [vmem:[%s1 + $0x6] sm:$0x1]
        %1087 = vset.pattern.permute.xlu0 6
        %1088 = vperm.xlu0 %1087, %v473
        %v1089 = vpop.permute.xlu0 %1088
        %1091 = vset.pattern.permute.xlu0 6
        %1092 = vperm.xlu0 %1091, %v474
        %v1093 = vpop.permute.xlu0 %1092
        %1095 = vset.pattern.permute.xlu0 6
        %1096 = vperm.xlu0 %1095, %v475
        %v1097 = vpop.permute.xlu0 %1096
        %1099 = vset.pattern.permute.xlu0 6
        %1100 = vperm.xlu0 %1099, %v476
        %v1101 = vpop.permute.xlu0 %1100
        %1103 = vset.pattern.permute.xlu0 6
        %1104 = vperm.xlu0 %1103, %v477
        %v1105 = vpop.permute.xlu0 %1104
        %1107 = vset.pattern.permute.xlu0 6
        %1108 = vperm.xlu0 %1107, %v478
        %v1109 = vpop.permute.xlu0 %1108
        %1111 = vset.pattern.permute.xlu0 6
        %1112 = vperm.xlu0 %1111, %v479
        %v1113 = vpop.permute.xlu0 %1112
        %1115 = vset.pattern.permute.xlu0 6
        %1116 = vperm.xlu0 %1115, %v480
        %v1117 = vpop.permute.xlu0 %1116
        %v1119 = vlaneseq
        %v1120 = vshrl.u32 %v1119, 7
        %v1121 = vsub.s32 0, %v1120
        %v1122 = vrot.slane %v1086, %v1121
        %v1123 = vadd.f32 %v1089, %v1122
        %v1124 = vadd.f32 %v1093, %v1122
        %v1125 = vadd.f32 %v1097, %v1122
        %v1126 = vadd.f32 %v1101, %v1122
        %v1127 = vadd.f32 %v1105, %v1122
        %v1128 = vadd.f32 %v1109, %v1122
        %v1129 = vadd.f32 %v1113, %v1122
        %v1130 = vadd.f32 %v1117, %v1122
        %s1131 = sld [smem:[#allocation6 + $0x6]]
        %v1132 = vstv %s1131
        %v1133 = vmul.f32 %v1132, %v465
        %v1134 = vmul.f32 %v1132, %v466
        %v1135 = vmul.f32 %v1132, %v467
        %v1136 = vmul.f32 %v1132, %v468
        %v1137 = vmul.f32 %v1132, %v469
        %v1138 = vmul.f32 %v1132, %v470
        %v1139 = vmul.f32 %v1132, %v471
        %v1140 = vmul.f32 %v1132, %v472
        %v1141 = vadd.f32 %v1123, %v1133
        %v1142 = vadd.f32 %v1124, %v1134
        %v1143 = vadd.f32 %v1125, %v1135
        %v1144 = vadd.f32 %v1126, %v1136
        %v1145 = vadd.f32 %v1127, %v1137
        %v1146 = vadd.f32 %v1128, %v1138
        %v1147 = vadd.f32 %v1129, %v1139
        %v1148 = vadd.f32 %v1130, %v1140
        %s1149 = sld [smem:[#allocation7 + $0x6]]
        %v1150 = vand.u32 2147483647, %v1141
        %v1151 = vand.u32 2147483647, %v1142
        %v1152 = vand.u32 2147483647, %v1143
        %v1153 = vand.u32 2147483647, %v1144
        %v1154 = vand.u32 2147483647, %v1145
        %v1155 = vand.u32 2147483647, %v1146
        %v1156 = vand.u32 2147483647, %v1147
        %v1157 = vand.u32 2147483647, %v1148
        %v1158 = vstv %s1149
        %v1159 = vmul.f32 %v1158, %v1150
        %v1160 = vmul.f32 %v1158, %v1151
        %v1161 = vmul.f32 %v1158, %v1152
        %v1162 = vmul.f32 %v1158, %v1153
        %v1163 = vmul.f32 %v1158, %v1154
        %v1164 = vmul.f32 %v1158, %v1155
        %v1165 = vmul.f32 %v1158, %v1156
        %v1166 = vmul.f32 %v1158, %v1157
        %v1167 = vadd.f32 %v1078, %v1159
        %v1168 = vadd.f32 %v1079, %v1160
        %v1169 = vadd.f32 %v1080, %v1161
        %v1170 = vadd.f32 %v1081, %v1162
        %v1171 = vadd.f32 %v1082, %v1163
        %v1172 = vadd.f32 %v1083, %v1164
        %v1173 = vadd.f32 %v1084, %v1165
        %v1174 = vadd.f32 %v1085, %v1166
        %v1175 = vld [vmem:[%s1 + $0x7] sm:$0x1]
        %1176 = vset.pattern.permute.xlu0 7
        %1177 = vperm.xlu0 %1176, %v473
        %v1178 = vpop.permute.xlu0 %1177
        %1180 = vset.pattern.permute.xlu0 7
        %1181 = vperm.xlu0 %1180, %v474
        %v1182 = vpop.permute.xlu0 %1181
        %1184 = vset.pattern.permute.xlu0 7
        %1185 = vperm.xlu0 %1184, %v475
        %v1186 = vpop.permute.xlu0 %1185
        %1188 = vset.pattern.permute.xlu0 7
        %1189 = vperm.xlu0 %1188, %v476
        %v1190 = vpop.permute.xlu0 %1189
        %1192 = vset.pattern.permute.xlu0 7
        %1193 = vperm.xlu0 %1192, %v477
        %v1194 = vpop.permute.xlu0 %1193
        %1196 = vset.pattern.permute.xlu0 7
        %1197 = vperm.xlu0 %1196, %v478
        %v1198 = vpop.permute.xlu0 %1197
        %1200 = vset.pattern.permute.xlu0 7
        %1201 = vperm.xlu0 %1200, %v479
        %v1202 = vpop.permute.xlu0 %1201
        %1204 = vset.pattern.permute.xlu0 7
        %1205 = vperm.xlu0 %1204, %v480
        %v1206 = vpop.permute.xlu0 %1205
        %v1208 = vlaneseq
        %v1209 = vshrl.u32 %v1208, 7
        %v1210 = vsub.s32 0, %v1209
        %v1211 = vrot.slane %v1175, %v1210
        %v1212 = vadd.f32 %v1178, %v1211
        %v1213 = vadd.f32 %v1182, %v1211
        %v1214 = vadd.f32 %v1186, %v1211
        %v1215 = vadd.f32 %v1190, %v1211
        %v1216 = vadd.f32 %v1194, %v1211
        %v1217 = vadd.f32 %v1198, %v1211
        %v1218 = vadd.f32 %v1202, %v1211
        %v1219 = vadd.f32 %v1206, %v1211
        %s1220 = sld [smem:[#allocation6 + $0x7]]
        %v1221 = vstv %s1220
        %v1222 = vmul.f32 %v1221, %v465
        %v1223 = vmul.f32 %v1221, %v466
        %v1224 = vmul.f32 %v1221, %v467
        %v1225 = vmul.f32 %v1221, %v468
        %v1226 = vmul.f32 %v1221, %v469
        %v1227 = vmul.f32 %v1221, %v470
        %v1228 = vmul.f32 %v1221, %v471
        %v1229 = vmul.f32 %v1221, %v472
        %v1230 = vadd.f32 %v1212, %v1222
        %v1231 = vadd.f32 %v1213, %v1223
        %v1232 = vadd.f32 %v1214, %v1224
        %v1233 = vadd.f32 %v1215, %v1225
        %v1234 = vadd.f32 %v1216, %v1226
        %v1235 = vadd.f32 %v1217, %v1227
        %v1236 = vadd.f32 %v1218, %v1228
        %v1237 = vadd.f32 %v1219, %v1229
        %s1238 = sld [smem:[#allocation7 + $0x7]]
        %v1239 = vand.u32 2147483647, %v1230
        %v1240 = vand.u32 2147483647, %v1231
        %v1241 = vand.u32 2147483647, %v1232
        %v1242 = vand.u32 2147483647, %v1233
        %v1243 = vand.u32 2147483647, %v1234
        %v1244 = vand.u32 2147483647, %v1235
        %v1245 = vand.u32 2147483647, %v1236
        %v1246 = vand.u32 2147483647, %v1237
        %v1247 = vstv %s1238
        %v1248 = vmul.f32 %v1247, %v1239
        %v1249 = vmul.f32 %v1247, %v1240
        %v1250 = vmul.f32 %v1247, %v1241
        %v1251 = vmul.f32 %v1247, %v1242
        %v1252 = vmul.f32 %v1247, %v1243
        %v1253 = vmul.f32 %v1247, %v1244
        %v1254 = vmul.f32 %v1247, %v1245
        %v1255 = vmul.f32 %v1247, %v1246
        %v1256 = vadd.f32 %v1167, %v1248
        %v1257 = vadd.f32 %v1168, %v1249
        %v1258 = vadd.f32 %v1169, %v1250
        %v1259 = vadd.f32 %v1170, %v1251
        %v1260 = vadd.f32 %v1171, %v1252
        %v1261 = vadd.f32 %v1172, %v1253
        %v1262 = vadd.f32 %v1173, %v1254
        %v1263 = vadd.f32 %v1174, %v1255
        %v1264 = vsel %vm449, %v1256, -1e+30
        %v1265 = vsel %vm450, %v1257, -1e+30
        %v1266 = vsel %vm451, %v1258, -1e+30
        %v1267 = vsel %vm452, %v1259, -1e+30
        %v1268 = vsel %vm453, %v1260, -1e+30
        %v1269 = vsel %vm454, %v1261, -1e+30
        %v1270 = vsel %vm455, %v1262, -1e+30
        %v1271 = vsel %vm456, %v1263, -1e+30
        %1272 = vmax.xlane.f32.xlu0 %v1264
        %v1273 = vpop.xlane.xlu0 %1272
        %1274 = vmax.xlane.f32.xlu0 %v1265
        %v1275 = vpop.xlane.xlu0 %1274
        %1276 = vmax.xlane.f32.xlu0 %v1266
        %v1277 = vpop.xlane.xlu0 %1276
        %1278 = vmax.xlane.f32.xlu0 %v1267
        %v1279 = vpop.xlane.xlu0 %1278
        %1280 = vmax.xlane.f32.xlu0 %v1268
        %v1281 = vpop.xlane.xlu0 %1280
        %1282 = vmax.xlane.f32.xlu0 %v1269
        %v1283 = vpop.xlane.xlu0 %1282
        %1284 = vmax.xlane.f32.xlu0 %v1270
        %v1285 = vpop.xlane.xlu0 %1284
        %1286 = vmax.xlane.f32.xlu0 %v1271
        %v1287 = vpop.xlane.xlu0 %1286
        %v1288 = vsub.f32 %v1264, %v1273
        %v1289 = vsub.f32 %v1265, %v1275
        %v1290 = vsub.f32 %v1266, %v1277
        %v1291 = vsub.f32 %v1267, %v1279
        %v1292 = vsub.f32 %v1268, %v1281
        %v1293 = vsub.f32 %v1269, %v1283
        %v1294 = vsub.f32 %v1270, %v1285
        %v1295 = vsub.f32 %v1271, %v1287
        %v1296 = vmul.f32 %v1288, 1.442695
        %v1297 = vpow.pop %v1296
        %v1298 = vmul.f32 %v1289, 1.442695
        %v1299 = vpow.pop %v1298
        %v1300 = vmul.f32 %v1290, 1.442695
        %v1301 = vpow.pop %v1300
        %v1302 = vmul.f32 %v1291, 1.442695
        %v1303 = vpow.pop %v1302
        %v1304 = vmul.f32 %v1292, 1.442695
        %v1305 = vpow.pop %v1304
        %v1306 = vmul.f32 %v1293, 1.442695
        %v1307 = vpow.pop %v1306
        %v1308 = vmul.f32 %v1294, 1.442695
        %v1309 = vpow.pop %v1308
        %v1310 = vmul.f32 %v1295, 1.442695
        %v1311 = vpow.pop %v1310
        %v1312 = vsel %vm449, %v1297, 0.0
        %v1313 = vsel %vm450, %v1299, 0.0
        %v1314 = vsel %vm451, %v1301, 0.0
        %v1315 = vsel %vm452, %v1303, 0.0
        %v1316 = vsel %vm453, %v1305, 0.0
        %v1317 = vsel %vm454, %v1307, 0.0
        %v1318 = vsel %vm455, %v1309, 0.0
        %v1319 = vsel %vm456, %v1311, 0.0
        %1320 = vadd.xlane.f32.xlu0 %v1312
        %v1321 = vpop.xlane.xlu0 %1320
        %1322 = vadd.xlane.f32.xlu0 %v1313
        %v1323 = vpop.xlane.xlu0 %1322
        %1324 = vadd.xlane.f32.xlu0 %v1314
        %v1325 = vpop.xlane.xlu0 %1324
        %1326 = vadd.xlane.f32.xlu0 %v1315
        %v1327 = vpop.xlane.xlu0 %1326
        %1328 = vadd.xlane.f32.xlu0 %v1316
        %v1329 = vpop.xlane.xlu0 %1328
        %1330 = vadd.xlane.f32.xlu0 %v1317
        %v1331 = vpop.xlane.xlu0 %1330
        %1332 = vadd.xlane.f32.xlu0 %v1318
        %v1333 = vpop.xlane.xlu0 %1332
        %1334 = vadd.xlane.f32.xlu0 %v1319
        %v1335 = vpop.xlane.xlu0 %1334
        %vm1336 = vcmp.gt.f32.partialorder %v1321, 0.0
        %vm1337 = vcmp.gt.f32.partialorder %v1323, 0.0
        %vm1338 = vcmp.gt.f32.partialorder %v1325, 0.0
        %vm1339 = vcmp.gt.f32.partialorder %v1327, 0.0
        %vm1340 = vcmp.gt.f32.partialorder %v1329, 0.0
        %vm1341 = vcmp.gt.f32.partialorder %v1331, 0.0
        %vm1342 = vcmp.gt.f32.partialorder %v1333, 0.0
        %vm1343 = vcmp.gt.f32.partialorder %v1335, 0.0
        %v1344 = vsel %vm1336, %v1321, 1.0
        %v1345 = vsel %vm1337, %v1323, 1.0
        %v1346 = vsel %vm1338, %v1325, 1.0
        %v1347 = vsel %vm1339, %v1327, 1.0
        %v1348 = vsel %vm1340, %v1329, 1.0
        %v1349 = vsel %vm1341, %v1331, 1.0
        %v1350 = vsel %vm1342, %v1333, 1.0
        %v1351 = vsel %vm1343, %v1335, 1.0
        %v1352 = vrcp.pop %v1344
        %v1353 = vrcp.pop %v1345
        %v1354 = vrcp.pop %v1346
        %v1355 = vrcp.pop %v1347
        %v1356 = vrcp.pop %v1348
        %v1357 = vrcp.pop %v1349
        %v1358 = vrcp.pop %v1350
        %v1359 = vrcp.pop %v1351
        %v1360 = vmul.f32 %v1312, %v1352
        %v1361 = vmul.f32 %v1313, %v1353
        %v1362 = vmul.f32 %v1314, %v1354
        %v1363 = vmul.f32 %v1315, %v1355
        %v1364 = vmul.f32 %v1316, %v1356
        %v1365 = vmul.f32 %v1317, %v1357
        %v1366 = vmul.f32 %v1318, %v1358
        %v1367 = vmul.f32 %v1319, %v1359
        %v1368 = vpack.c.bf16 %v1361, %v1360
        %v1369 = vpack.c.bf16 %v1363, %v1362
        %v1370 = vpack.c.bf16 %v1365, %v1364
        %v1371 = vpack.c.bf16 %v1367, %v1366
        %v1372 = vld [vmem:[#allocation2] sm:$0xf]
        %v1373 = vld [vmem:[#allocation2 + $0x4] sm:$0xf]
        %v1374 = vld [vmem:[#allocation2 + $0x8] sm:$0xf]
        %v1375 = vld [vmem:[#allocation2 + $0xc] sm:$0xf]
        %v1376 = vld [vmem:[#allocation2 + $0x10] sm:$0xf]
        %v1377 = vld [vmem:[#allocation2 + $0x14] sm:$0xf]
        %v1378 = vld [vmem:[#allocation2 + $0x18] sm:$0xf]
        %v1379 = vld [vmem:[#allocation2 + $0x1c] sm:$0xf]
        %v1380 = vld [vmem:[#allocation2 + $0x20] sm:$0xf]
        %v1381 = vld [vmem:[#allocation2 + $0x24] sm:$0xf]
        %v1382 = vld [vmem:[#allocation2 + $0x28] sm:$0xf]
        %v1383 = vld [vmem:[#allocation2 + $0x2c] sm:$0xf]
        %v1384 = vld [vmem:[#allocation2 + $0x30] sm:$0xf]
        %v1385 = vld [vmem:[#allocation2 + $0x34] sm:$0xf]
        %v1386 = vld [vmem:[#allocation2 + $0x38] sm:$0xf]
        %v1387 = vld [vmem:[#allocation2 + $0x3c] sm:$0xf]
        %v1388 = vld [vmem:[%s1 + $0x19] sm:$0x1]
        %1389 = vset.pattern.permute.xlu0 25
        %1390 = vperm.xlu0 %1389, %v473
        %v1391 = vpop.permute.xlu0 %1390
        %1393 = vset.pattern.permute.xlu0 25
        %1394 = vperm.xlu0 %1393, %v474
        %v1395 = vpop.permute.xlu0 %1394
        %1397 = vset.pattern.permute.xlu0 25
        %1398 = vperm.xlu0 %1397, %v475
        %v1399 = vpop.permute.xlu0 %1398
        %1401 = vset.pattern.permute.xlu0 25
        %1402 = vperm.xlu0 %1401, %v476
        %v1403 = vpop.permute.xlu0 %1402
        %1405 = vset.pattern.permute.xlu0 25
        %1406 = vperm.xlu0 %1405, %v477
        %v1407 = vpop.permute.xlu0 %1406
        %1409 = vset.pattern.permute.xlu0 25
        %1410 = vperm.xlu0 %1409, %v478
        %v1411 = vpop.permute.xlu0 %1410
        %1413 = vset.pattern.permute.xlu0 25
        %1414 = vperm.xlu0 %1413, %v479
        %v1415 = vpop.permute.xlu0 %1414
        %1417 = vset.pattern.permute.xlu0 25
        %1418 = vperm.xlu0 %1417, %v480
        %v1419 = vpop.permute.xlu0 %1418
        %v1421 = vlaneseq
        %v1422 = vshrl.u32 %v1421, 7
        %v1423 = vsub.s32 0, %v1422
        %v1424 = vrot.slane %v1388, %v1423
        %v1425 = vadd.f32 %v1391, %v1424
        %v1426 = vadd.f32 %v1395, %v1424
        %v1427 = vadd.f32 %v1399, %v1424
        %v1428 = vadd.f32 %v1403, %v1424
        %v1429 = vadd.f32 %v1407, %v1424
        %v1430 = vadd.f32 %v1411, %v1424
        %v1431 = vadd.f32 %v1415, %v1424
        %v1432 = vadd.f32 %v1419, %v1424
        %s1433 = sld [smem:[#allocation9 + $0x1]]
        %v1434 = vstv %s1433
        %v1435 = vmul.f32 %v1434, %v465
        %v1436 = vmul.f32 %v1434, %v466
        %v1437 = vmul.f32 %v1434, %v467
        %v1438 = vmul.f32 %v1434, %v468
        %v1439 = vmul.f32 %v1434, %v469
        %v1440 = vmul.f32 %v1434, %v470
        %v1441 = vmul.f32 %v1434, %v471
        %v1442 = vmul.f32 %v1434, %v472
        %v1443 = vadd.f32 %v1425, %v1435
        %v1444 = vadd.f32 %v1426, %v1436
        %v1445 = vadd.f32 %v1427, %v1437
        %v1446 = vadd.f32 %v1428, %v1438
        %v1447 = vadd.f32 %v1429, %v1439
        %v1448 = vadd.f32 %v1430, %v1440
        %v1449 = vadd.f32 %v1431, %v1441
        %v1450 = vadd.f32 %v1432, %v1442
        %v1451 = vld [vmem:[%s1 + $0x8] sm:$0x1]
        %1452 = vset.pattern.permute.xlu0 8
        %1453 = vperm.xlu0 %1452, %v473
        %v1454 = vpop.permute.xlu0 %1453
        %1456 = vset.pattern.permute.xlu0 8
        %1457 = vperm.xlu0 %1456, %v474
        %v1458 = vpop.permute.xlu0 %1457
        %1460 = vset.pattern.permute.xlu0 8
        %1461 = vperm.xlu0 %1460, %v475
        %v1462 = vpop.permute.xlu0 %1461
        %1464 = vset.pattern.permute.xlu0 8
        %1465 = vperm.xlu0 %1464, %v476
        %v1466 = vpop.permute.xlu0 %1465
        %1468 = vset.pattern.permute.xlu0 8
        %1469 = vperm.xlu0 %1468, %v477
        %v1470 = vpop.permute.xlu0 %1469
        %1472 = vset.pattern.permute.xlu0 8
        %1473 = vperm.xlu0 %1472, %v478
        %v1474 = vpop.permute.xlu0 %1473
        %1476 = vset.pattern.permute.xlu0 8
        %1477 = vperm.xlu0 %1476, %v479
        %v1478 = vpop.permute.xlu0 %1477
        %1480 = vset.pattern.permute.xlu0 8
        %1481 = vperm.xlu0 %1480, %v480
        %v1482 = vpop.permute.xlu0 %1481
        %v1484 = vlaneseq
        %v1485 = vshrl.u32 %v1484, 7
        %v1486 = vsub.s32 0, %v1485
        %v1487 = vrot.slane %v1451, %v1486
        %v1488 = vadd.f32 %v1454, %v1487
        %v1489 = vadd.f32 %v1458, %v1487
        %v1490 = vadd.f32 %v1462, %v1487
        %v1491 = vadd.f32 %v1466, %v1487
        %v1492 = vadd.f32 %v1470, %v1487
        %v1493 = vadd.f32 %v1474, %v1487
        %v1494 = vadd.f32 %v1478, %v1487
        %v1495 = vadd.f32 %v1482, %v1487
        %s1496 = sld [smem:[#allocation6 + $0x8]]
        %v1497 = vstv %s1496
        %v1498 = vmul.f32 %v1497, %v465
        %v1499 = vmul.f32 %v1497, %v466
        %v1500 = vmul.f32 %v1497, %v467
        %v1501 = vmul.f32 %v1497, %v468
        %v1502 = vmul.f32 %v1497, %v469
        %v1503 = vmul.f32 %v1497, %v470
        %v1504 = vmul.f32 %v1497, %v471
        %v1505 = vmul.f32 %v1497, %v472
        %v1506 = vadd.f32 %v1488, %v1498
        %v1507 = vadd.f32 %v1489, %v1499
        %v1508 = vadd.f32 %v1490, %v1500
        %v1509 = vadd.f32 %v1491, %v1501
        %v1510 = vadd.f32 %v1492, %v1502
        %v1511 = vadd.f32 %v1493, %v1503
        %v1512 = vadd.f32 %v1494, %v1504
        %v1513 = vadd.f32 %v1495, %v1505
        %s1514 = sld [smem:[#allocation7 + $0x8]]
        %v1515 = vand.u32 2147483647, %v1506
        %v1516 = vand.u32 2147483647, %v1507
        %v1517 = vand.u32 2147483647, %v1508
        %v1518 = vand.u32 2147483647, %v1509
        %v1519 = vand.u32 2147483647, %v1510
        %v1520 = vand.u32 2147483647, %v1511
        %v1521 = vand.u32 2147483647, %v1512
        %v1522 = vand.u32 2147483647, %v1513
        %v1523 = vstv %s1514
        %v1524 = vmul.f32 %v1523, %v1515
        %v1525 = vmul.f32 %v1523, %v1516
        %v1526 = vmul.f32 %v1523, %v1517
        %v1527 = vmul.f32 %v1523, %v1518
        %v1528 = vmul.f32 %v1523, %v1519
        %v1529 = vmul.f32 %v1523, %v1520
        %v1530 = vmul.f32 %v1523, %v1521
        %v1531 = vmul.f32 %v1523, %v1522
        %v1532 = vadd.f32 %v1443, %v1524
        %v1533 = vadd.f32 %v1444, %v1525
        %v1534 = vadd.f32 %v1445, %v1526
        %v1535 = vadd.f32 %v1446, %v1527
        %v1536 = vadd.f32 %v1447, %v1528
        %v1537 = vadd.f32 %v1448, %v1529
        %v1538 = vadd.f32 %v1449, %v1530
        %v1539 = vadd.f32 %v1450, %v1531
        %v1540 = vld [vmem:[%s1 + $0x9] sm:$0x1]
        %1541 = vset.pattern.permute.xlu0 9
        %1542 = vperm.xlu0 %1541, %v473
        %v1543 = vpop.permute.xlu0 %1542
        %1545 = vset.pattern.permute.xlu0 9
        %1546 = vperm.xlu0 %1545, %v474
        %v1547 = vpop.permute.xlu0 %1546
        %1549 = vset.pattern.permute.xlu0 9
        %1550 = vperm.xlu0 %1549, %v475
        %v1551 = vpop.permute.xlu0 %1550
        %1553 = vset.pattern.permute.xlu0 9
        %1554 = vperm.xlu0 %1553, %v476
        %v1555 = vpop.permute.xlu0 %1554
        %1557 = vset.pattern.permute.xlu0 9
        %1558 = vperm.xlu0 %1557, %v477
        %v1559 = vpop.permute.xlu0 %1558
        %1561 = vset.pattern.permute.xlu0 9
        %1562 = vperm.xlu0 %1561, %v478
        %v1563 = vpop.permute.xlu0 %1562
        %1565 = vset.pattern.permute.xlu0 9
        %1566 = vperm.xlu0 %1565, %v479
        %v1567 = vpop.permute.xlu0 %1566
        %1569 = vset.pattern.permute.xlu0 9
        %1570 = vperm.xlu0 %1569, %v480
        %v1571 = vpop.permute.xlu0 %1570
        %v1573 = vlaneseq
        %v1574 = vshrl.u32 %v1573, 7
        %v1575 = vsub.s32 0, %v1574
        %v1576 = vrot.slane %v1540, %v1575
        %v1577 = vadd.f32 %v1543, %v1576
        %v1578 = vadd.f32 %v1547, %v1576
        %v1579 = vadd.f32 %v1551, %v1576
        %v1580 = vadd.f32 %v1555, %v1576
        %v1581 = vadd.f32 %v1559, %v1576
        %v1582 = vadd.f32 %v1563, %v1576
        %v1583 = vadd.f32 %v1567, %v1576
        %v1584 = vadd.f32 %v1571, %v1576
        %s1585 = sld [smem:[#allocation6 + $0x9]]
        %v1586 = vstv %s1585
        %v1587 = vmul.f32 %v1586, %v465
        %v1588 = vmul.f32 %v1586, %v466
        %v1589 = vmul.f32 %v1586, %v467
        %v1590 = vmul.f32 %v1586, %v468
        %v1591 = vmul.f32 %v1586, %v469
        %v1592 = vmul.f32 %v1586, %v470
        %v1593 = vmul.f32 %v1586, %v471
        %v1594 = vmul.f32 %v1586, %v472
        %v1595 = vadd.f32 %v1577, %v1587
        %v1596 = vadd.f32 %v1578, %v1588
        %v1597 = vadd.f32 %v1579, %v1589
        %v1598 = vadd.f32 %v1580, %v1590
        %v1599 = vadd.f32 %v1581, %v1591
        %v1600 = vadd.f32 %v1582, %v1592
        %v1601 = vadd.f32 %v1583, %v1593
        %v1602 = vadd.f32 %v1584, %v1594
        %s1603 = sld [smem:[#allocation7 + $0x9]]
        %v1604 = vand.u32 2147483647, %v1595
        %v1605 = vand.u32 2147483647, %v1596
        %v1606 = vand.u32 2147483647, %v1597
        %v1607 = vand.u32 2147483647, %v1598
        %v1608 = vand.u32 2147483647, %v1599
        %v1609 = vand.u32 2147483647, %v1600
        %v1610 = vand.u32 2147483647, %v1601
        %v1611 = vand.u32 2147483647, %v1602
        %v1612 = vstv %s1603
        %v1613 = vmul.f32 %v1612, %v1604
        %v1614 = vmul.f32 %v1612, %v1605
        %v1615 = vmul.f32 %v1612, %v1606
        %v1616 = vmul.f32 %v1612, %v1607
        %v1617 = vmul.f32 %v1612, %v1608
        %v1618 = vmul.f32 %v1612, %v1609
        %v1619 = vmul.f32 %v1612, %v1610
        %v1620 = vmul.f32 %v1612, %v1611
        %v1621 = vadd.f32 %v1532, %v1613
        %v1622 = vadd.f32 %v1533, %v1614
        %v1623 = vadd.f32 %v1534, %v1615
        %v1624 = vadd.f32 %v1535, %v1616
        %v1625 = vadd.f32 %v1536, %v1617
        %v1626 = vadd.f32 %v1537, %v1618
        %v1627 = vadd.f32 %v1538, %v1619
        %v1628 = vadd.f32 %v1539, %v1620
        %v1629 = vld [vmem:[%s1 + $0xa] sm:$0x1]
        %1630 = vset.pattern.permute.xlu0 10
        %1631 = vperm.xlu0 %1630, %v473
        %v1632 = vpop.permute.xlu0 %1631
        %1634 = vset.pattern.permute.xlu0 10
        %1635 = vperm.xlu0 %1634, %v474
        %v1636 = vpop.permute.xlu0 %1635
        %1638 = vset.pattern.permute.xlu0 10
        %1639 = vperm.xlu0 %1638, %v475
        %v1640 = vpop.permute.xlu0 %1639
        %1642 = vset.pattern.permute.xlu0 10
        %1643 = vperm.xlu0 %1642, %v476
        %v1644 = vpop.permute.xlu0 %1643
        %1646 = vset.pattern.permute.xlu0 10
        %1647 = vperm.xlu0 %1646, %v477
        %v1648 = vpop.permute.xlu0 %1647
        %1650 = vset.pattern.permute.xlu0 10
        %1651 = vperm.xlu0 %1650, %v478
        %v1652 = vpop.permute.xlu0 %1651
        %1654 = vset.pattern.permute.xlu0 10
        %1655 = vperm.xlu0 %1654, %v479
        %v1656 = vpop.permute.xlu0 %1655
        %1658 = vset.pattern.permute.xlu0 10
        %1659 = vperm.xlu0 %1658, %v480
        %v1660 = vpop.permute.xlu0 %1659
        %v1662 = vlaneseq
        %v1663 = vshrl.u32 %v1662, 7
        %v1664 = vsub.s32 0, %v1663
        %v1665 = vrot.slane %v1629, %v1664
        %v1666 = vadd.f32 %v1632, %v1665
        %v1667 = vadd.f32 %v1636, %v1665
        %v1668 = vadd.f32 %v1640, %v1665
        %v1669 = vadd.f32 %v1644, %v1665
        %v1670 = vadd.f32 %v1648, %v1665
        %v1671 = vadd.f32 %v1652, %v1665
        %v1672 = vadd.f32 %v1656, %v1665
        %v1673 = vadd.f32 %v1660, %v1665
        %s1674 = sld [smem:[#allocation6 + $0xa]]
        %v1675 = vstv %s1674
        %v1676 = vmul.f32 %v1675, %v465
        %v1677 = vmul.f32 %v1675, %v466
        %v1678 = vmul.f32 %v1675, %v467
        %v1679 = vmul.f32 %v1675, %v468
        %v1680 = vmul.f32 %v1675, %v469
        %v1681 = vmul.f32 %v1675, %v470
        %v1682 = vmul.f32 %v1675, %v471
        %v1683 = vmul.f32 %v1675, %v472
        %v1684 = vadd.f32 %v1666, %v1676
        %v1685 = vadd.f32 %v1667, %v1677
        %v1686 = vadd.f32 %v1668, %v1678
        %v1687 = vadd.f32 %v1669, %v1679
        %v1688 = vadd.f32 %v1670, %v1680
        %v1689 = vadd.f32 %v1671, %v1681
        %v1690 = vadd.f32 %v1672, %v1682
        %v1691 = vadd.f32 %v1673, %v1683
        %s1692 = sld [smem:[#allocation7 + $0xa]]
        %v1693 = vand.u32 2147483647, %v1684
        %v1694 = vand.u32 2147483647, %v1685
        %v1695 = vand.u32 2147483647, %v1686
        %v1696 = vand.u32 2147483647, %v1687
        %v1697 = vand.u32 2147483647, %v1688
        %v1698 = vand.u32 2147483647, %v1689
        %v1699 = vand.u32 2147483647, %v1690
        %v1700 = vand.u32 2147483647, %v1691
        %v1701 = vstv %s1692
        %v1702 = vmul.f32 %v1701, %v1693
        %v1703 = vmul.f32 %v1701, %v1694
        %v1704 = vmul.f32 %v1701, %v1695
        %v1705 = vmul.f32 %v1701, %v1696
        %v1706 = vmul.f32 %v1701, %v1697
        %v1707 = vmul.f32 %v1701, %v1698
        %v1708 = vmul.f32 %v1701, %v1699
        %v1709 = vmul.f32 %v1701, %v1700
        %v1710 = vadd.f32 %v1621, %v1702
        %v1711 = vadd.f32 %v1622, %v1703
        %v1712 = vadd.f32 %v1623, %v1704
        %v1713 = vadd.f32 %v1624, %v1705
        %v1714 = vadd.f32 %v1625, %v1706
        %v1715 = vadd.f32 %v1626, %v1707
        %v1716 = vadd.f32 %v1627, %v1708
        %v1717 = vadd.f32 %v1628, %v1709
        %v1718 = vld [vmem:[%s1 + $0xb] sm:$0x1]
        %1719 = vset.pattern.permute.xlu0 11
        %1720 = vperm.xlu0 %1719, %v473
        %v1721 = vpop.permute.xlu0 %1720
        %1723 = vset.pattern.permute.xlu0 11
        %1724 = vperm.xlu0 %1723, %v474
        %v1725 = vpop.permute.xlu0 %1724
        %1727 = vset.pattern.permute.xlu0 11
        %1728 = vperm.xlu0 %1727, %v475
        %v1729 = vpop.permute.xlu0 %1728
        %1731 = vset.pattern.permute.xlu0 11
        %1732 = vperm.xlu0 %1731, %v476
        %v1733 = vpop.permute.xlu0 %1732
        %1735 = vset.pattern.permute.xlu0 11
        %1736 = vperm.xlu0 %1735, %v477
        %v1737 = vpop.permute.xlu0 %1736
        %1739 = vset.pattern.permute.xlu0 11
        %1740 = vperm.xlu0 %1739, %v478
        %v1741 = vpop.permute.xlu0 %1740
        %1743 = vset.pattern.permute.xlu0 11
        %1744 = vperm.xlu0 %1743, %v479
        %v1745 = vpop.permute.xlu0 %1744
        %1747 = vset.pattern.permute.xlu0 11
        %1748 = vperm.xlu0 %1747, %v480
        %v1749 = vpop.permute.xlu0 %1748
        %v1751 = vlaneseq
        %v1752 = vshrl.u32 %v1751, 7
        %v1753 = vsub.s32 0, %v1752
        %v1754 = vrot.slane %v1718, %v1753
        %v1755 = vadd.f32 %v1721, %v1754
        %v1756 = vadd.f32 %v1725, %v1754
        %v1757 = vadd.f32 %v1729, %v1754
        %v1758 = vadd.f32 %v1733, %v1754
        %v1759 = vadd.f32 %v1737, %v1754
        %v1760 = vadd.f32 %v1741, %v1754
        %v1761 = vadd.f32 %v1745, %v1754
        %v1762 = vadd.f32 %v1749, %v1754
        %s1763 = sld [smem:[#allocation6 + $0xb]]
        %v1764 = vstv %s1763
        %v1765 = vmul.f32 %v1764, %v465
        %v1766 = vmul.f32 %v1764, %v466
        %v1767 = vmul.f32 %v1764, %v467
        %v1768 = vmul.f32 %v1764, %v468
        %v1769 = vmul.f32 %v1764, %v469
        %v1770 = vmul.f32 %v1764, %v470
        %v1771 = vmul.f32 %v1764, %v471
        %v1772 = vmul.f32 %v1764, %v472
        %v1773 = vadd.f32 %v1755, %v1765
        %v1774 = vadd.f32 %v1756, %v1766
        %v1775 = vadd.f32 %v1757, %v1767
        %v1776 = vadd.f32 %v1758, %v1768
        %v1777 = vadd.f32 %v1759, %v1769
        %v1778 = vadd.f32 %v1760, %v1770
        %v1779 = vadd.f32 %v1761, %v1771
        %v1780 = vadd.f32 %v1762, %v1772
        %s1781 = sld [smem:[#allocation7 + $0xb]]
        %v1782 = vand.u32 2147483647, %v1773
        %v1783 = vand.u32 2147483647, %v1774
        %v1784 = vand.u32 2147483647, %v1775
        %v1785 = vand.u32 2147483647, %v1776
        %v1786 = vand.u32 2147483647, %v1777
        %v1787 = vand.u32 2147483647, %v1778
        %v1788 = vand.u32 2147483647, %v1779
        %v1789 = vand.u32 2147483647, %v1780
        %v1790 = vstv %s1781
        %v1791 = vmul.f32 %v1790, %v1782
        %v1792 = vmul.f32 %v1790, %v1783
        %v1793 = vmul.f32 %v1790, %v1784
        %v1794 = vmul.f32 %v1790, %v1785
        %v1795 = vmul.f32 %v1790, %v1786
        %v1796 = vmul.f32 %v1790, %v1787
        %v1797 = vmul.f32 %v1790, %v1788
        %v1798 = vmul.f32 %v1790, %v1789
        %v1799 = vadd.f32 %v1710, %v1791
        %v1800 = vadd.f32 %v1711, %v1792
        %v1801 = vadd.f32 %v1712, %v1793
        %v1802 = vadd.f32 %v1713, %v1794
        %v1803 = vadd.f32 %v1714, %v1795
        %v1804 = vadd.f32 %v1715, %v1796
        %v1805 = vadd.f32 %v1716, %v1797
        %v1806 = vadd.f32 %v1717, %v1798
        %v1807 = vld [vmem:[%s1 + $0xc] sm:$0x1]
        %1808 = vset.pattern.permute.xlu0 12
        %1809 = vperm.xlu0 %1808, %v473
        %v1810 = vpop.permute.xlu0 %1809
        %1812 = vset.pattern.permute.xlu0 12
        %1813 = vperm.xlu0 %1812, %v474
        %v1814 = vpop.permute.xlu0 %1813
        %1816 = vset.pattern.permute.xlu0 12
        %1817 = vperm.xlu0 %1816, %v475
        %v1818 = vpop.permute.xlu0 %1817
        %1820 = vset.pattern.permute.xlu0 12
        %1821 = vperm.xlu0 %1820, %v476
        %v1822 = vpop.permute.xlu0 %1821
        %1824 = vset.pattern.permute.xlu0 12
        %1825 = vperm.xlu0 %1824, %v477
        %v1826 = vpop.permute.xlu0 %1825
        %1828 = vset.pattern.permute.xlu0 12
        %1829 = vperm.xlu0 %1828, %v478
        %v1830 = vpop.permute.xlu0 %1829
        %1832 = vset.pattern.permute.xlu0 12
        %1833 = vperm.xlu0 %1832, %v479
        %v1834 = vpop.permute.xlu0 %1833
        %1836 = vset.pattern.permute.xlu0 12
        %1837 = vperm.xlu0 %1836, %v480
        %v1838 = vpop.permute.xlu0 %1837
        %v1840 = vlaneseq
        %v1841 = vshrl.u32 %v1840, 7
        %v1842 = vsub.s32 0, %v1841
        %v1843 = vrot.slane %v1807, %v1842
        %v1844 = vadd.f32 %v1810, %v1843
        %v1845 = vadd.f32 %v1814, %v1843
        %v1846 = vadd.f32 %v1818, %v1843
        %v1847 = vadd.f32 %v1822, %v1843
        %v1848 = vadd.f32 %v1826, %v1843
        %v1849 = vadd.f32 %v1830, %v1843
        %v1850 = vadd.f32 %v1834, %v1843
        %v1851 = vadd.f32 %v1838, %v1843
        %s1852 = sld [smem:[#allocation6 + $0xc]]
        %v1853 = vstv %s1852
        %v1854 = vmul.f32 %v1853, %v465
        %v1855 = vmul.f32 %v1853, %v466
        %v1856 = vmul.f32 %v1853, %v467
        %v1857 = vmul.f32 %v1853, %v468
        %v1858 = vmul.f32 %v1853, %v469
        %v1859 = vmul.f32 %v1853, %v470
        %v1860 = vmul.f32 %v1853, %v471
        %v1861 = vmul.f32 %v1853, %v472
        %v1862 = vadd.f32 %v1844, %v1854
        %v1863 = vadd.f32 %v1845, %v1855
        %v1864 = vadd.f32 %v1846, %v1856
        %v1865 = vadd.f32 %v1847, %v1857
        %v1866 = vadd.f32 %v1848, %v1858
        %v1867 = vadd.f32 %v1849, %v1859
        %v1868 = vadd.f32 %v1850, %v1860
        %v1869 = vadd.f32 %v1851, %v1861
        %s1870 = sld [smem:[#allocation7 + $0xc]]
        %v1871 = vand.u32 2147483647, %v1862
        %v1872 = vand.u32 2147483647, %v1863
        %v1873 = vand.u32 2147483647, %v1864
        %v1874 = vand.u32 2147483647, %v1865
        %v1875 = vand.u32 2147483647, %v1866
        %v1876 = vand.u32 2147483647, %v1867
        %v1877 = vand.u32 2147483647, %v1868
        %v1878 = vand.u32 2147483647, %v1869
        %v1879 = vstv %s1870
        %v1880 = vmul.f32 %v1879, %v1871
        %v1881 = vmul.f32 %v1879, %v1872
        %v1882 = vmul.f32 %v1879, %v1873
        %v1883 = vmul.f32 %v1879, %v1874
        %v1884 = vmul.f32 %v1879, %v1875
        %v1885 = vmul.f32 %v1879, %v1876
        %v1886 = vmul.f32 %v1879, %v1877
        %v1887 = vmul.f32 %v1879, %v1878
        %v1888 = vadd.f32 %v1799, %v1880
        %v1889 = vadd.f32 %v1800, %v1881
        %v1890 = vadd.f32 %v1801, %v1882
        %v1891 = vadd.f32 %v1802, %v1883
        %v1892 = vadd.f32 %v1803, %v1884
        %v1893 = vadd.f32 %v1804, %v1885
        %v1894 = vadd.f32 %v1805, %v1886
        %v1895 = vadd.f32 %v1806, %v1887
        %v1896 = vld [vmem:[%s1 + $0xd] sm:$0x1]
        %1897 = vset.pattern.permute.xlu0 13
        %1898 = vperm.xlu0 %1897, %v473
        %v1899 = vpop.permute.xlu0 %1898
        %1901 = vset.pattern.permute.xlu0 13
        %1902 = vperm.xlu0 %1901, %v474
        %v1903 = vpop.permute.xlu0 %1902
        %1905 = vset.pattern.permute.xlu0 13
        %1906 = vperm.xlu0 %1905, %v475
        %v1907 = vpop.permute.xlu0 %1906
        %1909 = vset.pattern.permute.xlu0 13
        %1910 = vperm.xlu0 %1909, %v476
        %v1911 = vpop.permute.xlu0 %1910
        %1913 = vset.pattern.permute.xlu0 13
        %1914 = vperm.xlu0 %1913, %v477
        %v1915 = vpop.permute.xlu0 %1914
        %1917 = vset.pattern.permute.xlu0 13
        %1918 = vperm.xlu0 %1917, %v478
        %v1919 = vpop.permute.xlu0 %1918
        %1921 = vset.pattern.permute.xlu0 13
        %1922 = vperm.xlu0 %1921, %v479
        %v1923 = vpop.permute.xlu0 %1922
        %1925 = vset.pattern.permute.xlu0 13
        %1926 = vperm.xlu0 %1925, %v480
        %v1927 = vpop.permute.xlu0 %1926
        %v1929 = vlaneseq
        %v1930 = vshrl.u32 %v1929, 7
        %v1931 = vsub.s32 0, %v1930
        %v1932 = vrot.slane %v1896, %v1931
        %v1933 = vadd.f32 %v1899, %v1932
        %v1934 = vadd.f32 %v1903, %v1932
        %v1935 = vadd.f32 %v1907, %v1932
        %v1936 = vadd.f32 %v1911, %v1932
        %v1937 = vadd.f32 %v1915, %v1932
        %v1938 = vadd.f32 %v1919, %v1932
        %v1939 = vadd.f32 %v1923, %v1932
        %v1940 = vadd.f32 %v1927, %v1932
        %s1941 = sld [smem:[#allocation6 + $0xd]]
        %v1942 = vstv %s1941
        %v1943 = vmul.f32 %v1942, %v465
        %v1944 = vmul.f32 %v1942, %v466
        %v1945 = vmul.f32 %v1942, %v467
        %v1946 = vmul.f32 %v1942, %v468
        %v1947 = vmul.f32 %v1942, %v469
        %v1948 = vmul.f32 %v1942, %v470
        %v1949 = vmul.f32 %v1942, %v471
        %v1950 = vmul.f32 %v1942, %v472
        %v1951 = vadd.f32 %v1933, %v1943
        %v1952 = vadd.f32 %v1934, %v1944
        %v1953 = vadd.f32 %v1935, %v1945
        %v1954 = vadd.f32 %v1936, %v1946
        %v1955 = vadd.f32 %v1937, %v1947
        %v1956 = vadd.f32 %v1938, %v1948
        %v1957 = vadd.f32 %v1939, %v1949
        %v1958 = vadd.f32 %v1940, %v1950
        %s1959 = sld [smem:[#allocation7 + $0xd]]
        %v1960 = vand.u32 2147483647, %v1951
        %v1961 = vand.u32 2147483647, %v1952
        %v1962 = vand.u32 2147483647, %v1953
        %v1963 = vand.u32 2147483647, %v1954
        %v1964 = vand.u32 2147483647, %v1955
        %v1965 = vand.u32 2147483647, %v1956
        %v1966 = vand.u32 2147483647, %v1957
        %v1967 = vand.u32 2147483647, %v1958
        %v1968 = vstv %s1959
        %v1969 = vmul.f32 %v1968, %v1960
        %v1970 = vmul.f32 %v1968, %v1961
        %v1971 = vmul.f32 %v1968, %v1962
        %v1972 = vmul.f32 %v1968, %v1963
        %v1973 = vmul.f32 %v1968, %v1964
        %v1974 = vmul.f32 %v1968, %v1965
        %v1975 = vmul.f32 %v1968, %v1966
        %v1976 = vmul.f32 %v1968, %v1967
        %v1977 = vadd.f32 %v1888, %v1969
        %v1978 = vadd.f32 %v1889, %v1970
        %v1979 = vadd.f32 %v1890, %v1971
        %v1980 = vadd.f32 %v1891, %v1972
        %v1981 = vadd.f32 %v1892, %v1973
        %v1982 = vadd.f32 %v1893, %v1974
        %v1983 = vadd.f32 %v1894, %v1975
        %v1984 = vadd.f32 %v1895, %v1976
        %v1985 = vld [vmem:[%s1 + $0xe] sm:$0x1]
        %1986 = vset.pattern.permute.xlu0 14
        %1987 = vperm.xlu0 %1986, %v473
        %v1988 = vpop.permute.xlu0 %1987
        %1990 = vset.pattern.permute.xlu0 14
        %1991 = vperm.xlu0 %1990, %v474
        %v1992 = vpop.permute.xlu0 %1991
        %1994 = vset.pattern.permute.xlu0 14
        %1995 = vperm.xlu0 %1994, %v475
        %v1996 = vpop.permute.xlu0 %1995
        %1998 = vset.pattern.permute.xlu0 14
        %1999 = vperm.xlu0 %1998, %v476
        %v2000 = vpop.permute.xlu0 %1999
        %2002 = vset.pattern.permute.xlu0 14
        %2003 = vperm.xlu0 %2002, %v477
        %v2004 = vpop.permute.xlu0 %2003
        %2006 = vset.pattern.permute.xlu0 14
        %2007 = vperm.xlu0 %2006, %v478
        %v2008 = vpop.permute.xlu0 %2007
        %2010 = vset.pattern.permute.xlu0 14
        %2011 = vperm.xlu0 %2010, %v479
        %v2012 = vpop.permute.xlu0 %2011
        %2014 = vset.pattern.permute.xlu0 14
        %2015 = vperm.xlu0 %2014, %v480
        %v2016 = vpop.permute.xlu0 %2015
        %v2018 = vlaneseq
        %v2019 = vshrl.u32 %v2018, 7
        %v2020 = vsub.s32 0, %v2019
        %v2021 = vrot.slane %v1985, %v2020
        %v2022 = vadd.f32 %v1988, %v2021
        %v2023 = vadd.f32 %v1992, %v2021
        %v2024 = vadd.f32 %v1996, %v2021
        %v2025 = vadd.f32 %v2000, %v2021
        %v2026 = vadd.f32 %v2004, %v2021
        %v2027 = vadd.f32 %v2008, %v2021
        %v2028 = vadd.f32 %v2012, %v2021
        %v2029 = vadd.f32 %v2016, %v2021
        %s2030 = sld [smem:[#allocation6 + $0xe]]
        %v2031 = vstv %s2030
        %v2032 = vmul.f32 %v2031, %v465
        %v2033 = vmul.f32 %v2031, %v466
        %v2034 = vmul.f32 %v2031, %v467
        %v2035 = vmul.f32 %v2031, %v468
        %v2036 = vmul.f32 %v2031, %v469
        %v2037 = vmul.f32 %v2031, %v470
        %v2038 = vmul.f32 %v2031, %v471
        %v2039 = vmul.f32 %v2031, %v472
        %v2040 = vadd.f32 %v2022, %v2032
        %v2041 = vadd.f32 %v2023, %v2033
        %v2042 = vadd.f32 %v2024, %v2034
        %v2043 = vadd.f32 %v2025, %v2035
        %v2044 = vadd.f32 %v2026, %v2036
        %v2045 = vadd.f32 %v2027, %v2037
        %v2046 = vadd.f32 %v2028, %v2038
        %v2047 = vadd.f32 %v2029, %v2039
        %s2048 = sld [smem:[#allocation7 + $0xe]]
        %v2049 = vand.u32 2147483647, %v2040
        %v2050 = vand.u32 2147483647, %v2041
        %v2051 = vand.u32 2147483647, %v2042
        %v2052 = vand.u32 2147483647, %v2043
        %v2053 = vand.u32 2147483647, %v2044
        %v2054 = vand.u32 2147483647, %v2045
        %v2055 = vand.u32 2147483647, %v2046
        %v2056 = vand.u32 2147483647, %v2047
        %v2057 = vstv %s2048
        %v2058 = vmul.f32 %v2057, %v2049
        %v2059 = vmul.f32 %v2057, %v2050
        %v2060 = vmul.f32 %v2057, %v2051
        %v2061 = vmul.f32 %v2057, %v2052
        %v2062 = vmul.f32 %v2057, %v2053
        %v2063 = vmul.f32 %v2057, %v2054
        %v2064 = vmul.f32 %v2057, %v2055
        %v2065 = vmul.f32 %v2057, %v2056
        %v2066 = vadd.f32 %v1977, %v2058
        %v2067 = vadd.f32 %v1978, %v2059
        %v2068 = vadd.f32 %v1979, %v2060
        %v2069 = vadd.f32 %v1980, %v2061
        %v2070 = vadd.f32 %v1981, %v2062
        %v2071 = vadd.f32 %v1982, %v2063
        %v2072 = vadd.f32 %v1983, %v2064
        %v2073 = vadd.f32 %v1984, %v2065
        %v2074 = vld [vmem:[%s1 + $0xf] sm:$0x1]
        %2075 = vset.pattern.permute.xlu0 15
        %2076 = vperm.xlu0 %2075, %v473
        %v2077 = vpop.permute.xlu0 %2076
        %2079 = vset.pattern.permute.xlu0 15
        %2080 = vperm.xlu0 %2079, %v474
        %v2081 = vpop.permute.xlu0 %2080
        %2083 = vset.pattern.permute.xlu0 15
        %2084 = vperm.xlu0 %2083, %v475
        %v2085 = vpop.permute.xlu0 %2084
        %2087 = vset.pattern.permute.xlu0 15
        %2088 = vperm.xlu0 %2087, %v476
        %v2089 = vpop.permute.xlu0 %2088
        %2091 = vset.pattern.permute.xlu0 15
        %2092 = vperm.xlu0 %2091, %v477
        %v2093 = vpop.permute.xlu0 %2092
        %2095 = vset.pattern.permute.xlu0 15
        %2096 = vperm.xlu0 %2095, %v478
        %v2097 = vpop.permute.xlu0 %2096
        %2099 = vset.pattern.permute.xlu0 15
        %2100 = vperm.xlu0 %2099, %v479
        %v2101 = vpop.permute.xlu0 %2100
        %2103 = vset.pattern.permute.xlu0 15
        %2104 = vperm.xlu0 %2103, %v480
        %v2105 = vpop.permute.xlu0 %2104
        %v2107 = vlaneseq
        %v2108 = vshrl.u32 %v2107, 7
        %v2109 = vsub.s32 0, %v2108
        %v2110 = vrot.slane %v2074, %v2109
        %v2111 = vadd.f32 %v2077, %v2110
        %v2112 = vadd.f32 %v2081, %v2110
        %v2113 = vadd.f32 %v2085, %v2110
        %v2114 = vadd.f32 %v2089, %v2110
        %v2115 = vadd.f32 %v2093, %v2110
        %v2116 = vadd.f32 %v2097, %v2110
        %v2117 = vadd.f32 %v2101, %v2110
        %v2118 = vadd.f32 %v2105, %v2110
        %s2119 = sld [smem:[#allocation6 + $0xf]]
        %v2120 = vstv %s2119
        %v2121 = vmul.f32 %v2120, %v465
        %v2122 = vmul.f32 %v2120, %v466
        %v2123 = vmul.f32 %v2120, %v467
        %v2124 = vmul.f32 %v2120, %v468
        %v2125 = vmul.f32 %v2120, %v469
        %v2126 = vmul.f32 %v2120, %v470
        %v2127 = vmul.f32 %v2120, %v471
        %v2128 = vmul.f32 %v2120, %v472
        %v2129 = vadd.f32 %v2111, %v2121
        %v2130 = vadd.f32 %v2112, %v2122
        %v2131 = vadd.f32 %v2113, %v2123
        %v2132 = vadd.f32 %v2114, %v2124
        %v2133 = vadd.f32 %v2115, %v2125
        %v2134 = vadd.f32 %v2116, %v2126
        %v2135 = vadd.f32 %v2117, %v2127
        %v2136 = vadd.f32 %v2118, %v2128
        %s2137 = sld [smem:[#allocation7 + $0xf]]
        %v2138 = vand.u32 2147483647, %v2129
        %v2139 = vand.u32 2147483647, %v2130
        %v2140 = vand.u32 2147483647, %v2131
        %v2141 = vand.u32 2147483647, %v2132
        %v2142 = vand.u32 2147483647, %v2133
        %v2143 = vand.u32 2147483647, %v2134
        %v2144 = vand.u32 2147483647, %v2135
        %v2145 = vand.u32 2147483647, %v2136
        %v2146 = vstv %s2137
        %v2147 = vmul.f32 %v2146, %v2138
        %v2148 = vmul.f32 %v2146, %v2139
        %v2149 = vmul.f32 %v2146, %v2140
        %v2150 = vmul.f32 %v2146, %v2141
        %v2151 = vmul.f32 %v2146, %v2142
        %v2152 = vmul.f32 %v2146, %v2143
        %v2153 = vmul.f32 %v2146, %v2144
        %v2154 = vmul.f32 %v2146, %v2145
        %v2155 = vadd.f32 %v2066, %v2147
        %v2156 = vadd.f32 %v2067, %v2148
        %v2157 = vadd.f32 %v2068, %v2149
        %v2158 = vadd.f32 %v2069, %v2150
        %v2159 = vadd.f32 %v2070, %v2151
        %v2160 = vadd.f32 %v2071, %v2152
        %v2161 = vadd.f32 %v2072, %v2153
        %v2162 = vadd.f32 %v2073, %v2154
        %v2163 = vsel %vm449, %v2155, -1e+30
        %v2164 = vsel %vm450, %v2156, -1e+30
        %v2165 = vsel %vm451, %v2157, -1e+30
        %v2166 = vsel %vm452, %v2158, -1e+30
        %v2167 = vsel %vm453, %v2159, -1e+30
        %v2168 = vsel %vm454, %v2160, -1e+30
        %v2169 = vsel %vm455, %v2161, -1e+30
        %v2170 = vsel %vm456, %v2162, -1e+30
        %2171 = vmax.xlane.f32.xlu0 %v2163
        %v2172 = vpop.xlane.xlu0 %2171
        %2173 = vmax.xlane.f32.xlu0 %v2164
        %v2174 = vpop.xlane.xlu0 %2173
        %2175 = vmax.xlane.f32.xlu0 %v2165
        %v2176 = vpop.xlane.xlu0 %2175
        %2177 = vmax.xlane.f32.xlu0 %v2166
        %v2178 = vpop.xlane.xlu0 %2177
        %2179 = vmax.xlane.f32.xlu0 %v2167
        %v2180 = vpop.xlane.xlu0 %2179
        %2181 = vmax.xlane.f32.xlu0 %v2168
        %v2182 = vpop.xlane.xlu0 %2181
        %2183 = vmax.xlane.f32.xlu0 %v2169
        %v2184 = vpop.xlane.xlu0 %2183
        %2185 = vmax.xlane.f32.xlu0 %v2170
        %v2186 = vpop.xlane.xlu0 %2185
        %v2187 = vsub.f32 %v2163, %v2172
        %v2188 = vsub.f32 %v2164, %v2174
        %v2189 = vsub.f32 %v2165, %v2176
        %v2190 = vsub.f32 %v2166, %v2178
        %v2191 = vsub.f32 %v2167, %v2180
        %v2192 = vsub.f32 %v2168, %v2182
        %v2193 = vsub.f32 %v2169, %v2184
        %v2194 = vsub.f32 %v2170, %v2186
        %v2195 = vmul.f32 %v2187, 1.442695
        %v2196 = vpow.pop %v2195
        %v2197 = vmul.f32 %v2188, 1.442695
        %v2198 = vpow.pop %v2197
        %v2199 = vmul.f32 %v2189, 1.442695
        %v2200 = vpow.pop %v2199
        %v2201 = vmul.f32 %v2190, 1.442695
        %v2202 = vpow.pop %v2201
        %v2203 = vmul.f32 %v2191, 1.442695
        %v2204 = vpow.pop %v2203
        %v2205 = vmul.f32 %v2192, 1.442695
        %v2206 = vpow.pop %v2205
        %v2207 = vmul.f32 %v2193, 1.442695
        %v2208 = vpow.pop %v2207
        %v2209 = vmul.f32 %v2194, 1.442695
        %v2210 = vpow.pop %v2209
        %v2211 = vsel %vm449, %v2196, 0.0
        %v2212 = vsel %vm450, %v2198, 0.0
        %v2213 = vsel %vm451, %v2200, 0.0
        %v2214 = vsel %vm452, %v2202, 0.0
        %v2215 = vsel %vm453, %v2204, 0.0
        %v2216 = vsel %vm454, %v2206, 0.0
        %v2217 = vsel %vm455, %v2208, 0.0
        %v2218 = vsel %vm456, %v2210, 0.0
        %2219 = vadd.xlane.f32.xlu0 %v2211
        %v2220 = vpop.xlane.xlu0 %2219
        %2221 = vadd.xlane.f32.xlu0 %v2212
        %v2222 = vpop.xlane.xlu0 %2221
        %2223 = vadd.xlane.f32.xlu0 %v2213
        %v2224 = vpop.xlane.xlu0 %2223
        %2225 = vadd.xlane.f32.xlu0 %v2214
        %v2226 = vpop.xlane.xlu0 %2225
        %2227 = vadd.xlane.f32.xlu0 %v2215
        %v2228 = vpop.xlane.xlu0 %2227
        %2229 = vadd.xlane.f32.xlu0 %v2216
        %v2230 = vpop.xlane.xlu0 %2229
        %2231 = vadd.xlane.f32.xlu0 %v2217
        %v2232 = vpop.xlane.xlu0 %2231
        %2233 = vadd.xlane.f32.xlu0 %v2218
        %v2234 = vpop.xlane.xlu0 %2233
        %vm2235 = vcmp.gt.f32.partialorder %v2220, 0.0
        %vm2236 = vcmp.gt.f32.partialorder %v2222, 0.0
        %vm2237 = vcmp.gt.f32.partialorder %v2224, 0.0
        %vm2238 = vcmp.gt.f32.partialorder %v2226, 0.0
        %vm2239 = vcmp.gt.f32.partialorder %v2228, 0.0
        %vm2240 = vcmp.gt.f32.partialorder %v2230, 0.0
        %vm2241 = vcmp.gt.f32.partialorder %v2232, 0.0
        %vm2242 = vcmp.gt.f32.partialorder %v2234, 0.0
        %v2243 = vsel %vm2235, %v2220, 1.0
        %v2244 = vsel %vm2236, %v2222, 1.0
        %v2245 = vsel %vm2237, %v2224, 1.0
        %v2246 = vsel %vm2238, %v2226, 1.0
        %v2247 = vsel %vm2239, %v2228, 1.0
        %v2248 = vsel %vm2240, %v2230, 1.0
        %v2249 = vsel %vm2241, %v2232, 1.0
        %v2250 = vsel %vm2242, %v2234, 1.0
        %v2251 = vrcp.pop %v2243
        %v2252 = vrcp.pop %v2244
        %v2253 = vrcp.pop %v2245
        %v2254 = vrcp.pop %v2246
        %v2255 = vrcp.pop %v2247
        %v2256 = vrcp.pop %v2248
        %v2257 = vrcp.pop %v2249
        %v2258 = vrcp.pop %v2250
        %v2259 = vmul.f32 %v2211, %v2251
        %v2260 = vmul.f32 %v2212, %v2252
        %v2261 = vmul.f32 %v2213, %v2253
        %v2262 = vmul.f32 %v2214, %v2254
        %v2263 = vmul.f32 %v2215, %v2255
        %v2264 = vmul.f32 %v2216, %v2256
        %v2265 = vmul.f32 %v2217, %v2257
        %v2266 = vmul.f32 %v2218, %v2258
        %v2267 = vpack.c.bf16 %v2260, %v2259
        %v2268 = vpack.c.bf16 %v2262, %v2261
        %v2269 = vpack.c.bf16 %v2264, %v2263
        %v2270 = vpack.c.bf16 %v2266, %v2265
        %s2271 = scalar_lea.vmem [#allocation2], 64
        %v2272 = vld [vmem:[%s2271] sm:$0xf]
        %v2273 = vld [vmem:[%s2271 + $0x4] sm:$0xf]
        %v2274 = vld [vmem:[%s2271 + $0x8] sm:$0xf]
        %v2275 = vld [vmem:[%s2271 + $0xc] sm:$0xf]
        %v2276 = vld [vmem:[%s2271 + $0x10] sm:$0xf]
        %v2277 = vld [vmem:[%s2271 + $0x14] sm:$0xf]
        %v2278 = vld [vmem:[%s2271 + $0x18] sm:$0xf]
        %v2279 = vld [vmem:[%s2271 + $0x1c] sm:$0xf]
        %v2280 = vld [vmem:[%s2271 + $0x20] sm:$0xf]
        %v2281 = vld [vmem:[%s2271 + $0x24] sm:$0xf]
        %v2282 = vld [vmem:[%s2271 + $0x28] sm:$0xf]
        %v2283 = vld [vmem:[%s2271 + $0x2c] sm:$0xf]
        %v2284 = vld [vmem:[%s2271 + $0x30] sm:$0xf]
        %v2285 = vld [vmem:[%s2271 + $0x34] sm:$0xf]
        %v2286 = vld [vmem:[%s2271 + $0x38] sm:$0xf]
        %v2287 = vld [vmem:[%s2271 + $0x3c] sm:$0xf]
        %v2304 = vunpack.c.l.b16 %v2272
        %v2305 = vunpack.c.l.b16 %v2273
        %v2306 = vunpack.c.l.b16 %v2274
        %v2307 = vunpack.c.l.b16 %v2275
        %v2308 = vunpack.c.l.b16 %v2276
        %v2309 = vunpack.c.l.b16 %v2277
        %v2310 = vunpack.c.l.b16 %v2278
        %v2311 = vunpack.c.l.b16 %v2279
        %v2312 = vunpack.c.l.b16 %v2280
        %v2313 = vunpack.c.l.b16 %v2281
        %v2314 = vunpack.c.l.b16 %v2282
        %v2315 = vunpack.c.l.b16 %v2283
        %v2316 = vunpack.c.l.b16 %v2284
        %v2317 = vunpack.c.l.b16 %v2285
        %v2318 = vunpack.c.l.b16 %v2286
        %v2319 = vunpack.c.l.b16 %v2287
        %v2320 = vpack.c.b16 %v2305, %v2304
        %v2321 = vpack.c.b16 %v2307, %v2306
        %v2322 = vpack.c.b16 %v2309, %v2308
        %v2323 = vpack.c.b16 %v2311, %v2310
        %v2324 = vpack.c.b16 %v2313, %v2312
        %v2325 = vpack.c.b16 %v2315, %v2314
        %v2326 = vpack.c.b16 %v2317, %v2316
        %v2327 = vpack.c.b16 %v2319, %v2318
        %2336 = vmatprep.subr.bf16.mxu0 0
        %2337 = vmatpush1.bf16.msra.mxu0 %v2320
        %2338 = vmatprep.subr.bf16.mxu0 0
        %2339 = vmatpush1.bf16.msra.mxu0 %v2321
        %2340 = vmatprep.subr.bf16.mxu0 0
        %2341 = vmatpush1.bf16.msra.mxu0 %v2322
        %2342 = vmatprep.subr.bf16.mxu0 0
        %2343 = vmatpush1.bf16.msra.mxu0 %v2323
        %2344 = vmatprep.subr.bf16.mxu0 0
        %2345 = vmatpush1.bf16.msra.mxu0 %v2324
        %2346 = vmatprep.subr.bf16.mxu0 0
        %2347 = vmatpush1.bf16.msra.mxu0 %v2325
        %2348 = vmatprep.subr.bf16.mxu0 0
        %2349 = vmatpush1.bf16.msra.mxu0 %v2326
        %2350 = vmatprep.subr.bf16.mxu0 0
        %2351 = vmatpush1.bf16.msra.mxu0 %v2327
        %2352 = vmatprep.subr.bf16.mxu0 0
        %2353 = vmatpush1.bf16.msra.mxu0 0
        %2354 = vmatprep.subr.bf16.mxu0 0
        %2355 = vmatpush1.bf16.msra.mxu0 0
        %2356 = vmatprep.subr.bf16.mxu0 0
        %2357 = vmatpush1.bf16.msra.mxu0 0
        %2358 = vmatprep.subr.bf16.mxu0 0
        %2359 = vmatpush1.bf16.msra.mxu0 0
        %2360 = vmatprep.subr.bf16.mxu0 0
        %2361 = vmatpush1.bf16.msra.mxu0 0
        %2362 = vmatprep.subr.bf16.mxu0 0
        %2363 = vmatpush1.bf16.msra.mxu0 0
        %2364 = vmatprep.subr.bf16.mxu0 0
        %2365 = vmatpush1.bf16.msra.mxu0 0
        %2366 = vmatprep.subr.bf16.mxu0 0
        %2367 = vmatpush1.bf16.msra.mxu0 0
        %2368 = vmatprep.mubr.bf16.mxu0 0
        %2369 = vmatmul.mubr.bf16.gmra.mrb[0].mxu0 %v2267
        %v2370 = vpop.f32.mrb[0].mxu0
        %v2371 = vadd.f32 0.0, %v2370
        %v2372 = vpop.f32.mrb[0].mxu0
        %v2373 = vpop.f32.mrb[0].mxu0
        %v2374 = vadd.f32 0.0, %v2373
        %v2375 = vpop.f32.mrb[0].mxu0
        %2376 = vmatprep.mubr.bf16.mxu0 0
        %2377 = vmatmul.mubr.bf16.gmra.mrb[0].mxu0 %v2268
        %v2378 = vpop.f32.mrb[0].mxu0
        %v2379 = vadd.f32 0.0, %v2378
        %v2380 = vpop.f32.mrb[0].mxu0
        %v2381 = vpop.f32.mrb[0].mxu0
        %v2382 = vadd.f32 0.0, %v2381
        %v2383 = vpop.f32.mrb[0].mxu0
        %2384 = vmatprep.mubr.bf16.mxu0 0
        %2385 = vmatmul.mubr.bf16.gmra.mrb[0].mxu0 %v2269
        %v2386 = vpop.f32.mrb[0].mxu0
        %v2387 = vadd.f32 0.0, %v2386
        %v2388 = vpop.f32.mrb[0].mxu0
        %v2389 = vpop.f32.mrb[0].mxu0
        %v2390 = vadd.f32 0.0, %v2389
        %v2391 = vpop.f32.mrb[0].mxu0
        %2392 = vmatprep.mubr.bf16.mxu0 0
        %2393 = vmatmul.mubr.bf16.gmra.mrb[0].mxu0 %v2270
        %v2394 = vpop.f32.mrb[0].mxu0
        %v2395 = vadd.f32 0.0, %v2394
        %v2396 = vpop.f32.mrb[0].mxu0
        %v2397 = vpop.f32.mrb[0].mxu0
        %v2398 = vadd.f32 0.0, %v2397
        %v2399 = vpop.f32.mrb[0].mxu0
        %2400 = vdwg.mxu0
        %v2417 = vunpack.c.l.b16 %v1372
        %v2418 = vunpack.c.l.b16 %v1373
        %v2419 = vunpack.c.l.b16 %v1374
        %v2420 = vunpack.c.l.b16 %v1375
        %v2421 = vunpack.c.l.b16 %v1376
        %v2422 = vunpack.c.l.b16 %v1377
        %v2423 = vunpack.c.l.b16 %v1378
        %v2424 = vunpack.c.l.b16 %v1379
        %v2425 = vunpack.c.l.b16 %v1380
        %v2426 = vunpack.c.l.b16 %v1381
        %v2427 = vunpack.c.l.b16 %v1382
        %v2428 = vunpack.c.l.b16 %v1383
        %v2429 = vunpack.c.l.b16 %v1384
        %v2430 = vunpack.c.l.b16 %v1385
        %v2431 = vunpack.c.l.b16 %v1386
        %v2432 = vunpack.c.l.b16 %v1387
        %v2433 = vpack.c.b16 %v2418, %v2417
        %v2434 = vpack.c.b16 %v2420, %v2419
        %v2435 = vpack.c.b16 %v2422, %v2421
        %v2436 = vpack.c.b16 %v2424, %v2423
        %v2437 = vpack.c.b16 %v2426, %v2425
        %v2438 = vpack.c.b16 %v2428, %v2427
        %v2439 = vpack.c.b16 %v2430, %v2429
        %v2440 = vpack.c.b16 %v2432, %v2431
        %2449 = vmatprep.subr.bf16.mxu0 0
        %2450 = vmatpush1.bf16.msra.mxu0 %v2433
        %2451 = vmatprep.subr.bf16.mxu0 0
        %2452 = vmatpush1.bf16.msra.mxu0 %v2434
        %2453 = vmatprep.subr.bf16.mxu0 0
        %2454 = vmatpush1.bf16.msra.mxu0 %v2435
        %2455 = vmatprep.subr.bf16.mxu0 0
        %2456 = vmatpush1.bf16.msra.mxu0 %v2436
        %2457 = vmatprep.subr.bf16.mxu0 0
        %2458 = vmatpush1.bf16.msra.mxu0 %v2437
        %2459 = vmatprep.subr.bf16.mxu0 0
        %2460 = vmatpush1.bf16.msra.mxu0 %v2438
        %2461 = vmatprep.subr.bf16.mxu0 0
        %2462 = vmatpush1.bf16.msra.mxu0 %v2439
        %2463 = vmatprep.subr.bf16.mxu0 0
        %2464 = vmatpush1.bf16.msra.mxu0 %v2440
        %2465 = vmatprep.subr.bf16.mxu0 0
        %2466 = vmatpush1.bf16.msra.mxu0 0
        %2467 = vmatprep.subr.bf16.mxu0 0
        %2468 = vmatpush1.bf16.msra.mxu0 0
        %2469 = vmatprep.subr.bf16.mxu0 0
        %2470 = vmatpush1.bf16.msra.mxu0 0
        %2471 = vmatprep.subr.bf16.mxu0 0
        %2472 = vmatpush1.bf16.msra.mxu0 0
        %2473 = vmatprep.subr.bf16.mxu0 0
        %2474 = vmatpush1.bf16.msra.mxu0 0
        %2475 = vmatprep.subr.bf16.mxu0 0
        %2476 = vmatpush1.bf16.msra.mxu0 0
        %2477 = vmatprep.subr.bf16.mxu0 0
        %2478 = vmatpush1.bf16.msra.mxu0 0
        %2479 = vmatprep.subr.bf16.mxu0 0
        %2480 = vmatpush1.bf16.msra.mxu0 0
        %2481 = vmatprep.mubr.bf16.mxu0 0
        %2482 = vmatmul.mubr.bf16.gmra.mrb[0].mxu0 %v1368
        %v2483 = vpop.f32.mrb[0].mxu0
        %v2484 = vadd.f32 %v2371, %v2483
        %v2485 = vpop.f32.mrb[0].mxu0
        %v2486 = vpop.f32.mrb[0].mxu0
        %v2487 = vadd.f32 %v2374, %v2486
        %v2488 = vpop.f32.mrb[0].mxu0
        %2489 = vmatprep.mubr.bf16.mxu0 0
        %2490 = vmatmul.mubr.bf16.gmra.mrb[0].mxu0 %v1369
        %v2491 = vpop.f32.mrb[0].mxu0
        %v2492 = vadd.f32 %v2379, %v2491
        %v2493 = vpop.f32.mrb[0].mxu0
        %v2494 = vpop.f32.mrb[0].mxu0
        %v2495 = vadd.f32 %v2382, %v2494
        %v2496 = vpop.f32.mrb[0].mxu0
        %2497 = vmatprep.mubr.bf16.mxu0 0
        %2498 = vmatmul.mubr.bf16.gmra.mrb[0].mxu0 %v1370
        %v2499 = vpop.f32.mrb[0].mxu0
        %v2500 = vadd.f32 %v2387, %v2499
        %v2501 = vpop.f32.mrb[0].mxu0
        %v2502 = vpop.f32.mrb[0].mxu0
        %v2503 = vadd.f32 %v2390, %v2502
        %v2504 = vpop.f32.mrb[0].mxu0
        %2505 = vmatprep.mubr.bf16.mxu0 0
        %2506 = vmatmul.mubr.bf16.gmra.mrb[0].mxu0 %v1371
        %v2507 = vpop.f32.mrb[0].mxu0
        %v2508 = vadd.f32 %v2395, %v2507
        %v2509 = vpop.f32.mrb[0].mxu0
        %v2510 = vpop.f32.mrb[0].mxu0
        %v2511 = vadd.f32 %v2398, %v2510
        %v2512 = vpop.f32.mrb[0].mxu0
        %2513 = vdwg.mxu0
        %v2514 = vld [vmem:[%s1 + $0x1a] sm:$0x1]
        %2515 = vset.pattern.permute.xlu0 26
        %2516 = vperm.xlu0 %2515, %v473
        %v2517 = vpop.permute.xlu0 %2516
        %2519 = vset.pattern.permute.xlu0 26
        %2520 = vperm.xlu0 %2519, %v474
        %v2521 = vpop.permute.xlu0 %2520
        %2523 = vset.pattern.permute.xlu0 26
        %2524 = vperm.xlu0 %2523, %v475
        %v2525 = vpop.permute.xlu0 %2524
        %2527 = vset.pattern.permute.xlu0 26
        %2528 = vperm.xlu0 %2527, %v476
        %v2529 = vpop.permute.xlu0 %2528
        %2531 = vset.pattern.permute.xlu0 26
        %2532 = vperm.xlu0 %2531, %v477
        %v2533 = vpop.permute.xlu0 %2532
        %2535 = vset.pattern.permute.xlu0 26
        %2536 = vperm.xlu0 %2535, %v478
        %v2537 = vpop.permute.xlu0 %2536
        %2539 = vset.pattern.permute.xlu0 26
        %2540 = vperm.xlu0 %2539, %v479
        %v2541 = vpop.permute.xlu0 %2540
        %2543 = vset.pattern.permute.xlu0 26
        %2544 = vperm.xlu0 %2543, %v480
        %v2545 = vpop.permute.xlu0 %2544
        %v2547 = vlaneseq
        %v2548 = vshrl.u32 %v2547, 7
        %v2549 = vsub.s32 0, %v2548
        %v2550 = vrot.slane %v2514, %v2549
        %v2551 = vadd.f32 %v2517, %v2550
        %v2552 = vadd.f32 %v2521, %v2550
        %v2553 = vadd.f32 %v2525, %v2550
        %v2554 = vadd.f32 %v2529, %v2550
        %v2555 = vadd.f32 %v2533, %v2550
        %v2556 = vadd.f32 %v2537, %v2550
        %v2557 = vadd.f32 %v2541, %v2550
        %v2558 = vadd.f32 %v2545, %v2550
        %s2559 = sld [smem:[#allocation9 + $0x2]]
        %v2560 = vstv %s2559
        %v2561 = vmul.f32 %v2560, %v465
        %v2562 = vmul.f32 %v2560, %v466
        %v2563 = vmul.f32 %v2560, %v467
        %v2564 = vmul.f32 %v2560, %v468
        %v2565 = vmul.f32 %v2560, %v469
        %v2566 = vmul.f32 %v2560, %v470
        %v2567 = vmul.f32 %v2560, %v471
        %v2568 = vmul.f32 %v2560, %v472
        %v2569 = vadd.f32 %v2551, %v2561
        %v2570 = vadd.f32 %v2552, %v2562
        %v2571 = vadd.f32 %v2553, %v2563
        %v2572 = vadd.f32 %v2554, %v2564
        %v2573 = vadd.f32 %v2555, %v2565
        %v2574 = vadd.f32 %v2556, %v2566
        %v2575 = vadd.f32 %v2557, %v2567
        %v2576 = vadd.f32 %v2558, %v2568
        %v2577 = vld [vmem:[%s1 + $0x10] sm:$0x1]
        %2578 = vset.pattern.permute.xlu0 16
        %2579 = vperm.xlu0 %2578, %v473
        %v2580 = vpop.permute.xlu0 %2579
        %2582 = vset.pattern.permute.xlu0 16
        %2583 = vperm.xlu0 %2582, %v474
        %v2584 = vpop.permute.xlu0 %2583
        %2586 = vset.pattern.permute.xlu0 16
        %2587 = vperm.xlu0 %2586, %v475
        %v2588 = vpop.permute.xlu0 %2587
        %2590 = vset.pattern.permute.xlu0 16
        %2591 = vperm.xlu0 %2590, %v476
        %v2592 = vpop.permute.xlu0 %2591
        %2594 = vset.pattern.permute.xlu0 16
        %2595 = vperm.xlu0 %2594, %v477
        %v2596 = vpop.permute.xlu0 %2595
        %2598 = vset.pattern.permute.xlu0 16
        %2599 = vperm.xlu0 %2598, %v478
        %v2600 = vpop.permute.xlu0 %2599
        %2602 = vset.pattern.permute.xlu0 16
        %2603 = vperm.xlu0 %2602, %v479
        %v2604 = vpop.permute.xlu0 %2603
        %2606 = vset.pattern.permute.xlu0 16
        %2607 = vperm.xlu0 %2606, %v480
        %v2608 = vpop.permute.xlu0 %2607
        %v2610 = vlaneseq
        %v2611 = vshrl.u32 %v2610, 7
        %v2612 = vsub.s32 0, %v2611
        %v2613 = vrot.slane %v2577, %v2612
        %v2614 = vadd.f32 %v2580, %v2613
        %v2615 = vadd.f32 %v2584, %v2613
        %v2616 = vadd.f32 %v2588, %v2613
        %v2617 = vadd.f32 %v2592, %v2613
        %v2618 = vadd.f32 %v2596, %v2613
        %v2619 = vadd.f32 %v2600, %v2613
        %v2620 = vadd.f32 %v2604, %v2613
        %v2621 = vadd.f32 %v2608, %v2613
        %s2622 = sld [smem:[#allocation6 + $0x10]]
        %v2623 = vstv %s2622
        %v2624 = vmul.f32 %v2623, %v465
        %v2625 = vmul.f32 %v2623, %v466
        %v2626 = vmul.f32 %v2623, %v467
        %v2627 = vmul.f32 %v2623, %v468
        %v2628 = vmul.f32 %v2623, %v469
        %v2629 = vmul.f32 %v2623, %v470
        %v2630 = vmul.f32 %v2623, %v471
        %v2631 = vmul.f32 %v2623, %v472
        %v2632 = vadd.f32 %v2614, %v2624
        %v2633 = vadd.f32 %v2615, %v2625
        %v2634 = vadd.f32 %v2616, %v2626
        %v2635 = vadd.f32 %v2617, %v2627
        %v2636 = vadd.f32 %v2618, %v2628
        %v2637 = vadd.f32 %v2619, %v2629
        %v2638 = vadd.f32 %v2620, %v2630
        %v2639 = vadd.f32 %v2621, %v2631
        %s2640 = sld [smem:[#allocation7 + $0x10]]
        %v2641 = vand.u32 2147483647, %v2632
        %v2642 = vand.u32 2147483647, %v2633
        %v2643 = vand.u32 2147483647, %v2634
        %v2644 = vand.u32 2147483647, %v2635
        %v2645 = vand.u32 2147483647, %v2636
        %v2646 = vand.u32 2147483647, %v2637
        %v2647 = vand.u32 2147483647, %v2638
        %v2648 = vand.u32 2147483647, %v2639
        %v2649 = vstv %s2640
        %v2650 = vmul.f32 %v2649, %v2641
        %v2651 = vmul.f32 %v2649, %v2642
        %v2652 = vmul.f32 %v2649, %v2643
        %v2653 = vmul.f32 %v2649, %v2644
        %v2654 = vmul.f32 %v2649, %v2645
        %v2655 = vmul.f32 %v2649, %v2646
        %v2656 = vmul.f32 %v2649, %v2647
        %v2657 = vmul.f32 %v2649, %v2648
        %v2658 = vadd.f32 %v2569, %v2650
        %v2659 = vadd.f32 %v2570, %v2651
        %v2660 = vadd.f32 %v2571, %v2652
        %v2661 = vadd.f32 %v2572, %v2653
        %v2662 = vadd.f32 %v2573, %v2654
        %v2663 = vadd.f32 %v2574, %v2655
        %v2664 = vadd.f32 %v2575, %v2656
        %v2665 = vadd.f32 %v2576, %v2657
        %v2666 = vld [vmem:[%s1 + $0x11] sm:$0x1]
        %2667 = vset.pattern.permute.xlu0 17
        %2668 = vperm.xlu0 %2667, %v473
        %v2669 = vpop.permute.xlu0 %2668
        %2671 = vset.pattern.permute.xlu0 17
        %2672 = vperm.xlu0 %2671, %v474
        %v2673 = vpop.permute.xlu0 %2672
        %2675 = vset.pattern.permute.xlu0 17
        %2676 = vperm.xlu0 %2675, %v475
        %v2677 = vpop.permute.xlu0 %2676
        %2679 = vset.pattern.permute.xlu0 17
        %2680 = vperm.xlu0 %2679, %v476
        %v2681 = vpop.permute.xlu0 %2680
        %2683 = vset.pattern.permute.xlu0 17
        %2684 = vperm.xlu0 %2683, %v477
        %v2685 = vpop.permute.xlu0 %2684
        %2687 = vset.pattern.permute.xlu0 17
        %2688 = vperm.xlu0 %2687, %v478
        %v2689 = vpop.permute.xlu0 %2688
        %2691 = vset.pattern.permute.xlu0 17
        %2692 = vperm.xlu0 %2691, %v479
        %v2693 = vpop.permute.xlu0 %2692
        %2695 = vset.pattern.permute.xlu0 17
        %2696 = vperm.xlu0 %2695, %v480
        %v2697 = vpop.permute.xlu0 %2696
        %v2699 = vlaneseq
        %v2700 = vshrl.u32 %v2699, 7
        %v2701 = vsub.s32 0, %v2700
        %v2702 = vrot.slane %v2666, %v2701
        %v2703 = vadd.f32 %v2669, %v2702
        %v2704 = vadd.f32 %v2673, %v2702
        %v2705 = vadd.f32 %v2677, %v2702
        %v2706 = vadd.f32 %v2681, %v2702
        %v2707 = vadd.f32 %v2685, %v2702
        %v2708 = vadd.f32 %v2689, %v2702
        %v2709 = vadd.f32 %v2693, %v2702
        %v2710 = vadd.f32 %v2697, %v2702
        %s2711 = sld [smem:[#allocation6 + $0x11]]
        %v2712 = vstv %s2711
        %v2713 = vmul.f32 %v2712, %v465
        %v2714 = vmul.f32 %v2712, %v466
        %v2715 = vmul.f32 %v2712, %v467
        %v2716 = vmul.f32 %v2712, %v468
        %v2717 = vmul.f32 %v2712, %v469
        %v2718 = vmul.f32 %v2712, %v470
        %v2719 = vmul.f32 %v2712, %v471
        %v2720 = vmul.f32 %v2712, %v472
        %v2721 = vadd.f32 %v2703, %v2713
        %v2722 = vadd.f32 %v2704, %v2714
        %v2723 = vadd.f32 %v2705, %v2715
        %v2724 = vadd.f32 %v2706, %v2716
        %v2725 = vadd.f32 %v2707, %v2717
        %v2726 = vadd.f32 %v2708, %v2718
        %v2727 = vadd.f32 %v2709, %v2719
        %v2728 = vadd.f32 %v2710, %v2720
        %s2729 = sld [smem:[#allocation7 + $0x11]]
        %v2730 = vand.u32 2147483647, %v2721
        %v2731 = vand.u32 2147483647, %v2722
        %v2732 = vand.u32 2147483647, %v2723
        %v2733 = vand.u32 2147483647, %v2724
        %v2734 = vand.u32 2147483647, %v2725
        %v2735 = vand.u32 2147483647, %v2726
        %v2736 = vand.u32 2147483647, %v2727
        %v2737 = vand.u32 2147483647, %v2728
        %v2738 = vstv %s2729
        %v2739 = vmul.f32 %v2738, %v2730
        %v2740 = vmul.f32 %v2738, %v2731
        %v2741 = vmul.f32 %v2738, %v2732
        %v2742 = vmul.f32 %v2738, %v2733
        %v2743 = vmul.f32 %v2738, %v2734
        %v2744 = vmul.f32 %v2738, %v2735
        %v2745 = vmul.f32 %v2738, %v2736
        %v2746 = vmul.f32 %v2738, %v2737
        %v2747 = vadd.f32 %v2658, %v2739
        %v2748 = vadd.f32 %v2659, %v2740
        %v2749 = vadd.f32 %v2660, %v2741
        %v2750 = vadd.f32 %v2661, %v2742
        %v2751 = vadd.f32 %v2662, %v2743
        %v2752 = vadd.f32 %v2663, %v2744
        %v2753 = vadd.f32 %v2664, %v2745
        %v2754 = vadd.f32 %v2665, %v2746
        %v2755 = vld [vmem:[%s1 + $0x12] sm:$0x1]
        %2756 = vset.pattern.permute.xlu0 18
        %2757 = vperm.xlu0 %2756, %v473
        %v2758 = vpop.permute.xlu0 %2757
        %2760 = vset.pattern.permute.xlu0 18
        %2761 = vperm.xlu0 %2760, %v474
        %v2762 = vpop.permute.xlu0 %2761
        %2764 = vset.pattern.permute.xlu0 18
        %2765 = vperm.xlu0 %2764, %v475
        %v2766 = vpop.permute.xlu0 %2765
        %2768 = vset.pattern.permute.xlu0 18
        %2769 = vperm.xlu0 %2768, %v476
        %v2770 = vpop.permute.xlu0 %2769
        %2772 = vset.pattern.permute.xlu0 18
        %2773 = vperm.xlu0 %2772, %v477
        %v2774 = vpop.permute.xlu0 %2773
        %2776 = vset.pattern.permute.xlu0 18
        %2777 = vperm.xlu0 %2776, %v478
        %v2778 = vpop.permute.xlu0 %2777
        %2780 = vset.pattern.permute.xlu0 18
        %2781 = vperm.xlu0 %2780, %v479
        %v2782 = vpop.permute.xlu0 %2781
        %2784 = vset.pattern.permute.xlu0 18
        %2785 = vperm.xlu0 %2784, %v480
        %v2786 = vpop.permute.xlu0 %2785
        %v2788 = vlaneseq
        %v2789 = vshrl.u32 %v2788, 7
        %v2790 = vsub.s32 0, %v2789
        %v2791 = vrot.slane %v2755, %v2790
        %v2792 = vadd.f32 %v2758, %v2791
        %v2793 = vadd.f32 %v2762, %v2791
        %v2794 = vadd.f32 %v2766, %v2791
        %v2795 = vadd.f32 %v2770, %v2791
        %v2796 = vadd.f32 %v2774, %v2791
        %v2797 = vadd.f32 %v2778, %v2791
        %v2798 = vadd.f32 %v2782, %v2791
        %v2799 = vadd.f32 %v2786, %v2791
        %s2800 = sld [smem:[#allocation6 + $0x12]]
        %v2801 = vstv %s2800
        %v2802 = vmul.f32 %v2801, %v465
        %v2803 = vmul.f32 %v2801, %v466
        %v2804 = vmul.f32 %v2801, %v467
        %v2805 = vmul.f32 %v2801, %v468
        %v2806 = vmul.f32 %v2801, %v469
        %v2807 = vmul.f32 %v2801, %v470
        %v2808 = vmul.f32 %v2801, %v471
        %v2809 = vmul.f32 %v2801, %v472
        %v2810 = vadd.f32 %v2792, %v2802
        %v2811 = vadd.f32 %v2793, %v2803
        %v2812 = vadd.f32 %v2794, %v2804
        %v2813 = vadd.f32 %v2795, %v2805
        %v2814 = vadd.f32 %v2796, %v2806
        %v2815 = vadd.f32 %v2797, %v2807
        %v2816 = vadd.f32 %v2798, %v2808
        %v2817 = vadd.f32 %v2799, %v2809
        %s2818 = sld [smem:[#allocation7 + $0x12]]
        %v2819 = vand.u32 2147483647, %v2810
        %v2820 = vand.u32 2147483647, %v2811
        %v2821 = vand.u32 2147483647, %v2812
        %v2822 = vand.u32 2147483647, %v2813
        %v2823 = vand.u32 2147483647, %v2814
        %v2824 = vand.u32 2147483647, %v2815
        %v2825 = vand.u32 2147483647, %v2816
        %v2826 = vand.u32 2147483647, %v2817
        %v2827 = vstv %s2818
        %v2828 = vmul.f32 %v2827, %v2819
        %v2829 = vmul.f32 %v2827, %v2820
        %v2830 = vmul.f32 %v2827, %v2821
        %v2831 = vmul.f32 %v2827, %v2822
        %v2832 = vmul.f32 %v2827, %v2823
        %v2833 = vmul.f32 %v2827, %v2824
        %v2834 = vmul.f32 %v2827, %v2825
        %v2835 = vmul.f32 %v2827, %v2826
        %v2836 = vadd.f32 %v2747, %v2828
        %v2837 = vadd.f32 %v2748, %v2829
        %v2838 = vadd.f32 %v2749, %v2830
        %v2839 = vadd.f32 %v2750, %v2831
        %v2840 = vadd.f32 %v2751, %v2832
        %v2841 = vadd.f32 %v2752, %v2833
        %v2842 = vadd.f32 %v2753, %v2834
        %v2843 = vadd.f32 %v2754, %v2835
        %v2844 = vld [vmem:[%s1 + $0x13] sm:$0x1]
        %2845 = vset.pattern.permute.xlu0 19
        %2846 = vperm.xlu0 %2845, %v473
        %v2847 = vpop.permute.xlu0 %2846
        %2849 = vset.pattern.permute.xlu0 19
        %2850 = vperm.xlu0 %2849, %v474
        %v2851 = vpop.permute.xlu0 %2850
        %2853 = vset.pattern.permute.xlu0 19
        %2854 = vperm.xlu0 %2853, %v475
        %v2855 = vpop.permute.xlu0 %2854
        %2857 = vset.pattern.permute.xlu0 19
        %2858 = vperm.xlu0 %2857, %v476
        %v2859 = vpop.permute.xlu0 %2858
        %2861 = vset.pattern.permute.xlu0 19
        %2862 = vperm.xlu0 %2861, %v477
        %v2863 = vpop.permute.xlu0 %2862
        %2865 = vset.pattern.permute.xlu0 19
        %2866 = vperm.xlu0 %2865, %v478
        %v2867 = vpop.permute.xlu0 %2866
        %2869 = vset.pattern.permute.xlu0 19
        %2870 = vperm.xlu0 %2869, %v479
        %v2871 = vpop.permute.xlu0 %2870
        %2873 = vset.pattern.permute.xlu0 19
        %2874 = vperm.xlu0 %2873, %v480
        %v2875 = vpop.permute.xlu0 %2874
        %v2877 = vlaneseq
        %v2878 = vshrl.u32 %v2877, 7
        %v2879 = vsub.s32 0, %v2878
        %v2880 = vrot.slane %v2844, %v2879
        %v2881 = vadd.f32 %v2847, %v2880
        %v2882 = vadd.f32 %v2851, %v2880
        %v2883 = vadd.f32 %v2855, %v2880
        %v2884 = vadd.f32 %v2859, %v2880
        %v2885 = vadd.f32 %v2863, %v2880
        %v2886 = vadd.f32 %v2867, %v2880
        %v2887 = vadd.f32 %v2871, %v2880
        %v2888 = vadd.f32 %v2875, %v2880
        %s2889 = sld [smem:[#allocation6 + $0x13]]
        %v2890 = vstv %s2889
        %v2891 = vmul.f32 %v2890, %v465
        %v2892 = vmul.f32 %v2890, %v466
        %v2893 = vmul.f32 %v2890, %v467
        %v2894 = vmul.f32 %v2890, %v468
        %v2895 = vmul.f32 %v2890, %v469
        %v2896 = vmul.f32 %v2890, %v470
        %v2897 = vmul.f32 %v2890, %v471
        %v2898 = vmul.f32 %v2890, %v472
        %v2899 = vadd.f32 %v2881, %v2891
        %v2900 = vadd.f32 %v2882, %v2892
        %v2901 = vadd.f32 %v2883, %v2893
        %v2902 = vadd.f32 %v2884, %v2894
        %v2903 = vadd.f32 %v2885, %v2895
        %v2904 = vadd.f32 %v2886, %v2896
        %v2905 = vadd.f32 %v2887, %v2897
        %v2906 = vadd.f32 %v2888, %v2898
        %s2907 = sld [smem:[#allocation7 + $0x13]]
        %v2908 = vand.u32 2147483647, %v2899
        %v2909 = vand.u32 2147483647, %v2900
        %v2910 = vand.u32 2147483647, %v2901
        %v2911 = vand.u32 2147483647, %v2902
        %v2912 = vand.u32 2147483647, %v2903
        %v2913 = vand.u32 2147483647, %v2904
        %v2914 = vand.u32 2147483647, %v2905
        %v2915 = vand.u32 2147483647, %v2906
        %v2916 = vstv %s2907
        %v2917 = vmul.f32 %v2916, %v2908
        %v2918 = vmul.f32 %v2916, %v2909
        %v2919 = vmul.f32 %v2916, %v2910
        %v2920 = vmul.f32 %v2916, %v2911
        %v2921 = vmul.f32 %v2916, %v2912
        %v2922 = vmul.f32 %v2916, %v2913
        %v2923 = vmul.f32 %v2916, %v2914
        %v2924 = vmul.f32 %v2916, %v2915
        %v2925 = vadd.f32 %v2836, %v2917
        %v2926 = vadd.f32 %v2837, %v2918
        %v2927 = vadd.f32 %v2838, %v2919
        %v2928 = vadd.f32 %v2839, %v2920
        %v2929 = vadd.f32 %v2840, %v2921
        %v2930 = vadd.f32 %v2841, %v2922
        %v2931 = vadd.f32 %v2842, %v2923
        %v2932 = vadd.f32 %v2843, %v2924
        %v2933 = vld [vmem:[%s1 + $0x14] sm:$0x1]
        %2934 = vset.pattern.permute.xlu0 20
        %2935 = vperm.xlu0 %2934, %v473
        %v2936 = vpop.permute.xlu0 %2935
        %2938 = vset.pattern.permute.xlu0 20
        %2939 = vperm.xlu0 %2938, %v474
        %v2940 = vpop.permute.xlu0 %2939
        %2942 = vset.pattern.permute.xlu0 20
        %2943 = vperm.xlu0 %2942, %v475
        %v2944 = vpop.permute.xlu0 %2943
        %2946 = vset.pattern.permute.xlu0 20
        %2947 = vperm.xlu0 %2946, %v476
        %v2948 = vpop.permute.xlu0 %2947
        %2950 = vset.pattern.permute.xlu0 20
        %2951 = vperm.xlu0 %2950, %v477
        %v2952 = vpop.permute.xlu0 %2951
        %2954 = vset.pattern.permute.xlu0 20
        %2955 = vperm.xlu0 %2954, %v478
        %v2956 = vpop.permute.xlu0 %2955
        %2958 = vset.pattern.permute.xlu0 20
        %2959 = vperm.xlu0 %2958, %v479
        %v2960 = vpop.permute.xlu0 %2959
        %2962 = vset.pattern.permute.xlu0 20
        %2963 = vperm.xlu0 %2962, %v480
        %v2964 = vpop.permute.xlu0 %2963
        %v2966 = vlaneseq
        %v2967 = vshrl.u32 %v2966, 7
        %v2968 = vsub.s32 0, %v2967
        %v2969 = vrot.slane %v2933, %v2968
        %v2970 = vadd.f32 %v2936, %v2969
        %v2971 = vadd.f32 %v2940, %v2969
        %v2972 = vadd.f32 %v2944, %v2969
        %v2973 = vadd.f32 %v2948, %v2969
        %v2974 = vadd.f32 %v2952, %v2969
        %v2975 = vadd.f32 %v2956, %v2969
        %v2976 = vadd.f32 %v2960, %v2969
        %v2977 = vadd.f32 %v2964, %v2969
        %s2978 = sld [smem:[#allocation6 + $0x14]]
        %v2979 = vstv %s2978
        %v2980 = vmul.f32 %v2979, %v465
        %v2981 = vmul.f32 %v2979, %v466
        %v2982 = vmul.f32 %v2979, %v467
        %v2983 = vmul.f32 %v2979, %v468
        %v2984 = vmul.f32 %v2979, %v469
        %v2985 = vmul.f32 %v2979, %v470
        %v2986 = vmul.f32 %v2979, %v471
        %v2987 = vmul.f32 %v2979, %v472
        %v2988 = vadd.f32 %v2970, %v2980
        %v2989 = vadd.f32 %v2971, %v2981
        %v2990 = vadd.f32 %v2972, %v2982
        %v2991 = vadd.f32 %v2973, %v2983
        %v2992 = vadd.f32 %v2974, %v2984
        %v2993 = vadd.f32 %v2975, %v2985
        %v2994 = vadd.f32 %v2976, %v2986
        %v2995 = vadd.f32 %v2977, %v2987
        %s2996 = sld [smem:[#allocation7 + $0x14]]
        %v2997 = vand.u32 2147483647, %v2988
        %v2998 = vand.u32 2147483647, %v2989
        %v2999 = vand.u32 2147483647, %v2990
        %v3000 = vand.u32 2147483647, %v2991
        %v3001 = vand.u32 2147483647, %v2992
        %v3002 = vand.u32 2147483647, %v2993
        %v3003 = vand.u32 2147483647, %v2994
        %v3004 = vand.u32 2147483647, %v2995
        %v3005 = vstv %s2996
        %v3006 = vmul.f32 %v3005, %v2997
        %v3007 = vmul.f32 %v3005, %v2998
        %v3008 = vmul.f32 %v3005, %v2999
        %v3009 = vmul.f32 %v3005, %v3000
        %v3010 = vmul.f32 %v3005, %v3001
        %v3011 = vmul.f32 %v3005, %v3002
        %v3012 = vmul.f32 %v3005, %v3003
        %v3013 = vmul.f32 %v3005, %v3004
        %v3014 = vadd.f32 %v2925, %v3006
        %v3015 = vadd.f32 %v2926, %v3007
        %v3016 = vadd.f32 %v2927, %v3008
        %v3017 = vadd.f32 %v2928, %v3009
        %v3018 = vadd.f32 %v2929, %v3010
        %v3019 = vadd.f32 %v2930, %v3011
        %v3020 = vadd.f32 %v2931, %v3012
        %v3021 = vadd.f32 %v2932, %v3013
        %v3022 = vld [vmem:[%s1 + $0x15] sm:$0x1]
        %3023 = vset.pattern.permute.xlu0 21
        %3024 = vperm.xlu0 %3023, %v473
        %v3025 = vpop.permute.xlu0 %3024
        %3027 = vset.pattern.permute.xlu0 21
        %3028 = vperm.xlu0 %3027, %v474
        %v3029 = vpop.permute.xlu0 %3028
        %3031 = vset.pattern.permute.xlu0 21
        %3032 = vperm.xlu0 %3031, %v475
        %v3033 = vpop.permute.xlu0 %3032
        %3035 = vset.pattern.permute.xlu0 21
        %3036 = vperm.xlu0 %3035, %v476
        %v3037 = vpop.permute.xlu0 %3036
        %3039 = vset.pattern.permute.xlu0 21
        %3040 = vperm.xlu0 %3039, %v477
        %v3041 = vpop.permute.xlu0 %3040
        %3043 = vset.pattern.permute.xlu0 21
        %3044 = vperm.xlu0 %3043, %v478
        %v3045 = vpop.permute.xlu0 %3044
        %3047 = vset.pattern.permute.xlu0 21
        %3048 = vperm.xlu0 %3047, %v479
        %v3049 = vpop.permute.xlu0 %3048
        %3051 = vset.pattern.permute.xlu0 21
        %3052 = vperm.xlu0 %3051, %v480
        %v3053 = vpop.permute.xlu0 %3052
        %v3055 = vlaneseq
        %v3056 = vshrl.u32 %v3055, 7
        %v3057 = vsub.s32 0, %v3056
        %v3058 = vrot.slane %v3022, %v3057
        %v3059 = vadd.f32 %v3025, %v3058
        %v3060 = vadd.f32 %v3029, %v3058
        %v3061 = vadd.f32 %v3033, %v3058
        %v3062 = vadd.f32 %v3037, %v3058
        %v3063 = vadd.f32 %v3041, %v3058
        %v3064 = vadd.f32 %v3045, %v3058
        %v3065 = vadd.f32 %v3049, %v3058
        %v3066 = vadd.f32 %v3053, %v3058
        %s3067 = sld [smem:[#allocation6 + $0x15]]
        %v3068 = vstv %s3067
        %v3069 = vmul.f32 %v3068, %v465
        %v3070 = vmul.f32 %v3068, %v466
        %v3071 = vmul.f32 %v3068, %v467
        %v3072 = vmul.f32 %v3068, %v468
        %v3073 = vmul.f32 %v3068, %v469
        %v3074 = vmul.f32 %v3068, %v470
        %v3075 = vmul.f32 %v3068, %v471
        %v3076 = vmul.f32 %v3068, %v472
        %v3077 = vadd.f32 %v3059, %v3069
        %v3078 = vadd.f32 %v3060, %v3070
        %v3079 = vadd.f32 %v3061, %v3071
        %v3080 = vadd.f32 %v3062, %v3072
        %v3081 = vadd.f32 %v3063, %v3073
        %v3082 = vadd.f32 %v3064, %v3074
        %v3083 = vadd.f32 %v3065, %v3075
        %v3084 = vadd.f32 %v3066, %v3076
        %s3085 = sld [smem:[#allocation7 + $0x15]]
        %v3086 = vand.u32 2147483647, %v3077
        %v3087 = vand.u32 2147483647, %v3078
        %v3088 = vand.u32 2147483647, %v3079
        %v3089 = vand.u32 2147483647, %v3080
        %v3090 = vand.u32 2147483647, %v3081
        %v3091 = vand.u32 2147483647, %v3082
        %v3092 = vand.u32 2147483647, %v3083
        %v3093 = vand.u32 2147483647, %v3084
        %v3094 = vstv %s3085
        %v3095 = vmul.f32 %v3094, %v3086
        %v3096 = vmul.f32 %v3094, %v3087
        %v3097 = vmul.f32 %v3094, %v3088
        %v3098 = vmul.f32 %v3094, %v3089
        %v3099 = vmul.f32 %v3094, %v3090
        %v3100 = vmul.f32 %v3094, %v3091
        %v3101 = vmul.f32 %v3094, %v3092
        %v3102 = vmul.f32 %v3094, %v3093
        %v3103 = vadd.f32 %v3014, %v3095
        %v3104 = vadd.f32 %v3015, %v3096
        %v3105 = vadd.f32 %v3016, %v3097
        %v3106 = vadd.f32 %v3017, %v3098
        %v3107 = vadd.f32 %v3018, %v3099
        %v3108 = vadd.f32 %v3019, %v3100
        %v3109 = vadd.f32 %v3020, %v3101
        %v3110 = vadd.f32 %v3021, %v3102
        %v3111 = vld [vmem:[%s1 + $0x16] sm:$0x1]
        %3112 = vset.pattern.permute.xlu0 22
        %3113 = vperm.xlu0 %3112, %v473
        %v3114 = vpop.permute.xlu0 %3113
        %3116 = vset.pattern.permute.xlu0 22
        %3117 = vperm.xlu0 %3116, %v474
        %v3118 = vpop.permute.xlu0 %3117
        %3120 = vset.pattern.permute.xlu0 22
        %3121 = vperm.xlu0 %3120, %v475
        %v3122 = vpop.permute.xlu0 %3121
        %3124 = vset.pattern.permute.xlu0 22
        %3125 = vperm.xlu0 %3124, %v476
        %v3126 = vpop.permute.xlu0 %3125
        %3128 = vset.pattern.permute.xlu0 22
        %3129 = vperm.xlu0 %3128, %v477
        %v3130 = vpop.permute.xlu0 %3129
        %3132 = vset.pattern.permute.xlu0 22
        %3133 = vperm.xlu0 %3132, %v478
        %v3134 = vpop.permute.xlu0 %3133
        %3136 = vset.pattern.permute.xlu0 22
        %3137 = vperm.xlu0 %3136, %v479
        %v3138 = vpop.permute.xlu0 %3137
        %3140 = vset.pattern.permute.xlu0 22
        %3141 = vperm.xlu0 %3140, %v480
        %v3142 = vpop.permute.xlu0 %3141
        %v3144 = vlaneseq
        %v3145 = vshrl.u32 %v3144, 7
        %v3146 = vsub.s32 0, %v3145
        %v3147 = vrot.slane %v3111, %v3146
        %v3148 = vadd.f32 %v3114, %v3147
        %v3149 = vadd.f32 %v3118, %v3147
        %v3150 = vadd.f32 %v3122, %v3147
        %v3151 = vadd.f32 %v3126, %v3147
        %v3152 = vadd.f32 %v3130, %v3147
        %v3153 = vadd.f32 %v3134, %v3147
        %v3154 = vadd.f32 %v3138, %v3147
        %v3155 = vadd.f32 %v3142, %v3147
        %s3156 = sld [smem:[#allocation6 + $0x16]]
        %v3157 = vstv %s3156
        %v3158 = vmul.f32 %v3157, %v465
        %v3159 = vmul.f32 %v3157, %v466
        %v3160 = vmul.f32 %v3157, %v467
        %v3161 = vmul.f32 %v3157, %v468
        %v3162 = vmul.f32 %v3157, %v469
        %v3163 = vmul.f32 %v3157, %v470
        %v3164 = vmul.f32 %v3157, %v471
        %v3165 = vmul.f32 %v3157, %v472
        %v3166 = vadd.f32 %v3148, %v3158
        %v3167 = vadd.f32 %v3149, %v3159
        %v3168 = vadd.f32 %v3150, %v3160
        %v3169 = vadd.f32 %v3151, %v3161
        %v3170 = vadd.f32 %v3152, %v3162
        %v3171 = vadd.f32 %v3153, %v3163
        %v3172 = vadd.f32 %v3154, %v3164
        %v3173 = vadd.f32 %v3155, %v3165
        %s3174 = sld [smem:[#allocation7 + $0x16]]
        %v3175 = vand.u32 2147483647, %v3166
        %v3176 = vand.u32 2147483647, %v3167
        %v3177 = vand.u32 2147483647, %v3168
        %v3178 = vand.u32 2147483647, %v3169
        %v3179 = vand.u32 2147483647, %v3170
        %v3180 = vand.u32 2147483647, %v3171
        %v3181 = vand.u32 2147483647, %v3172
        %v3182 = vand.u32 2147483647, %v3173
        %v3183 = vstv %s3174
        %v3184 = vmul.f32 %v3183, %v3175
        %v3185 = vmul.f32 %v3183, %v3176
        %v3186 = vmul.f32 %v3183, %v3177
        %v3187 = vmul.f32 %v3183, %v3178
        %v3188 = vmul.f32 %v3183, %v3179
        %v3189 = vmul.f32 %v3183, %v3180
        %v3190 = vmul.f32 %v3183, %v3181
        %v3191 = vmul.f32 %v3183, %v3182
        %v3192 = vadd.f32 %v3103, %v3184
        %v3193 = vadd.f32 %v3104, %v3185
        %v3194 = vadd.f32 %v3105, %v3186
        %v3195 = vadd.f32 %v3106, %v3187
        %v3196 = vadd.f32 %v3107, %v3188
        %v3197 = vadd.f32 %v3108, %v3189
        %v3198 = vadd.f32 %v3109, %v3190
        %v3199 = vadd.f32 %v3110, %v3191
        %v3200 = vld [vmem:[%s1 + $0x17] sm:$0x1]
        %3201 = vset.pattern.permute.xlu0 23
        %3202 = vperm.xlu0 %3201, %v473
        %v3203 = vpop.permute.xlu0 %3202
        %3205 = vset.pattern.permute.xlu0 23
        %3206 = vperm.xlu0 %3205, %v474
        %v3207 = vpop.permute.xlu0 %3206
        %3209 = vset.pattern.permute.xlu0 23
        %3210 = vperm.xlu0 %3209, %v475
        %v3211 = vpop.permute.xlu0 %3210
        %3213 = vset.pattern.permute.xlu0 23
        %3214 = vperm.xlu0 %3213, %v476
        %v3215 = vpop.permute.xlu0 %3214
        %3217 = vset.pattern.permute.xlu0 23
        %3218 = vperm.xlu0 %3217, %v477
        %v3219 = vpop.permute.xlu0 %3218
        %3221 = vset.pattern.permute.xlu0 23
        %3222 = vperm.xlu0 %3221, %v478
        %v3223 = vpop.permute.xlu0 %3222
        %3225 = vset.pattern.permute.xlu0 23
        %3226 = vperm.xlu0 %3225, %v479
        %v3227 = vpop.permute.xlu0 %3226
        %3229 = vset.pattern.permute.xlu0 23
        %3230 = vperm.xlu0 %3229, %v480
        %v3231 = vpop.permute.xlu0 %3230
        %v3233 = vlaneseq
        %v3234 = vshrl.u32 %v3233, 7
        %v3235 = vsub.s32 0, %v3234
        %v3236 = vrot.slane %v3200, %v3235
        %v3237 = vadd.f32 %v3203, %v3236
        %v3238 = vadd.f32 %v3207, %v3236
        %v3239 = vadd.f32 %v3211, %v3236
        %v3240 = vadd.f32 %v3215, %v3236
        %v3241 = vadd.f32 %v3219, %v3236
        %v3242 = vadd.f32 %v3223, %v3236
        %v3243 = vadd.f32 %v3227, %v3236
        %v3244 = vadd.f32 %v3231, %v3236
        %s3245 = sld [smem:[#allocation6 + $0x17]]
        %v3246 = vstv %s3245
        %v3247 = vmul.f32 %v3246, %v465
        %v3248 = vmul.f32 %v3246, %v466
        %v3249 = vmul.f32 %v3246, %v467
        %v3250 = vmul.f32 %v3246, %v468
        %v3251 = vmul.f32 %v3246, %v469
        %v3252 = vmul.f32 %v3246, %v470
        %v3253 = vmul.f32 %v3246, %v471
        %v3254 = vmul.f32 %v3246, %v472
        %v3255 = vadd.f32 %v3237, %v3247
        %v3256 = vadd.f32 %v3238, %v3248
        %v3257 = vadd.f32 %v3239, %v3249
        %v3258 = vadd.f32 %v3240, %v3250
        %v3259 = vadd.f32 %v3241, %v3251
        %v3260 = vadd.f32 %v3242, %v3252
        %v3261 = vadd.f32 %v3243, %v3253
        %v3262 = vadd.f32 %v3244, %v3254
        %s3263 = sld [smem:[#allocation7 + $0x17]]
        %v3264 = vand.u32 2147483647, %v3255
        %v3265 = vand.u32 2147483647, %v3256
        %v3266 = vand.u32 2147483647, %v3257
        %v3267 = vand.u32 2147483647, %v3258
        %v3268 = vand.u32 2147483647, %v3259
        %v3269 = vand.u32 2147483647, %v3260
        %v3270 = vand.u32 2147483647, %v3261
        %v3271 = vand.u32 2147483647, %v3262
        %v3272 = vstv %s3263
        %v3273 = vmul.f32 %v3272, %v3264
        %v3274 = vmul.f32 %v3272, %v3265
        %v3275 = vmul.f32 %v3272, %v3266
        %v3276 = vmul.f32 %v3272, %v3267
        %v3277 = vmul.f32 %v3272, %v3268
        %v3278 = vmul.f32 %v3272, %v3269
        %v3279 = vmul.f32 %v3272, %v3270
        %v3280 = vmul.f32 %v3272, %v3271
        %v3281 = vadd.f32 %v3192, %v3273
        %v3282 = vadd.f32 %v3193, %v3274
        %v3283 = vadd.f32 %v3194, %v3275
        %v3284 = vadd.f32 %v3195, %v3276
        %v3285 = vadd.f32 %v3196, %v3277
        %v3286 = vadd.f32 %v3197, %v3278
        %v3287 = vadd.f32 %v3198, %v3279
        %v3288 = vadd.f32 %v3199, %v3280
        %v3289 = vsel %vm449, %v3281, -1e+30
        %v3290 = vsel %vm450, %v3282, -1e+30
        %v3291 = vsel %vm451, %v3283, -1e+30
        %v3292 = vsel %vm452, %v3284, -1e+30
        %v3293 = vsel %vm453, %v3285, -1e+30
        %v3294 = vsel %vm454, %v3286, -1e+30
        %v3295 = vsel %vm455, %v3287, -1e+30
        %v3296 = vsel %vm456, %v3288, -1e+30
        %3297 = vmax.xlane.f32.xlu0 %v3289
        %v3298 = vpop.xlane.xlu0 %3297
        %3299 = vmax.xlane.f32.xlu0 %v3290
        %v3300 = vpop.xlane.xlu0 %3299
        %3301 = vmax.xlane.f32.xlu0 %v3291
        %v3302 = vpop.xlane.xlu0 %3301
        %3303 = vmax.xlane.f32.xlu0 %v3292
        %v3304 = vpop.xlane.xlu0 %3303
        %3305 = vmax.xlane.f32.xlu0 %v3293
        %v3306 = vpop.xlane.xlu0 %3305
        %3307 = vmax.xlane.f32.xlu0 %v3294
        %v3308 = vpop.xlane.xlu0 %3307
        %3309 = vmax.xlane.f32.xlu0 %v3295
        %v3310 = vpop.xlane.xlu0 %3309
        %3311 = vmax.xlane.f32.xlu0 %v3296
        %v3312 = vpop.xlane.xlu0 %3311
        %v3313 = vsub.f32 %v3289, %v3298
        %v3314 = vsub.f32 %v3290, %v3300
        %v3315 = vsub.f32 %v3291, %v3302
        %v3316 = vsub.f32 %v3292, %v3304
        %v3317 = vsub.f32 %v3293, %v3306
        %v3318 = vsub.f32 %v3294, %v3308
        %v3319 = vsub.f32 %v3295, %v3310
        %v3320 = vsub.f32 %v3296, %v3312
        %v3321 = vmul.f32 %v3313, 1.442695
        %v3322 = vpow.pop %v3321
        %v3323 = vmul.f32 %v3314, 1.442695
        %v3324 = vpow.pop %v3323
        %v3325 = vmul.f32 %v3315, 1.442695
        %v3326 = vpow.pop %v3325
        %v3327 = vmul.f32 %v3316, 1.442695
        %v3328 = vpow.pop %v3327
        %v3329 = vmul.f32 %v3317, 1.442695
        %v3330 = vpow.pop %v3329
        %v3331 = vmul.f32 %v3318, 1.442695
        %v3332 = vpow.pop %v3331
        %v3333 = vmul.f32 %v3319, 1.442695
        %v3334 = vpow.pop %v3333
        %v3335 = vmul.f32 %v3320, 1.442695
        %v3336 = vpow.pop %v3335
        %v3337 = vsel %vm449, %v3322, 0.0
        %v3338 = vsel %vm450, %v3324, 0.0
        %v3339 = vsel %vm451, %v3326, 0.0
        %v3340 = vsel %vm452, %v3328, 0.0
        %v3341 = vsel %vm453, %v3330, 0.0
        %v3342 = vsel %vm454, %v3332, 0.0
        %v3343 = vsel %vm455, %v3334, 0.0
        %v3344 = vsel %vm456, %v3336, 0.0
        %3345 = vadd.xlane.f32.xlu0 %v3337
        %v3346 = vpop.xlane.xlu0 %3345
        %3347 = vadd.xlane.f32.xlu0 %v3338
        %v3348 = vpop.xlane.xlu0 %3347
        %3349 = vadd.xlane.f32.xlu0 %v3339
        %v3350 = vpop.xlane.xlu0 %3349
        %3351 = vadd.xlane.f32.xlu0 %v3340
        %v3352 = vpop.xlane.xlu0 %3351
        %3353 = vadd.xlane.f32.xlu0 %v3341
        %v3354 = vpop.xlane.xlu0 %3353
        %3355 = vadd.xlane.f32.xlu0 %v3342
        %v3356 = vpop.xlane.xlu0 %3355
        %3357 = vadd.xlane.f32.xlu0 %v3343
        %v3358 = vpop.xlane.xlu0 %3357
        %3359 = vadd.xlane.f32.xlu0 %v3344
        %v3360 = vpop.xlane.xlu0 %3359
        %vm3361 = vcmp.gt.f32.partialorder %v3346, 0.0
        %vm3362 = vcmp.gt.f32.partialorder %v3348, 0.0
        %vm3363 = vcmp.gt.f32.partialorder %v3350, 0.0
        %vm3364 = vcmp.gt.f32.partialorder %v3352, 0.0
        %vm3365 = vcmp.gt.f32.partialorder %v3354, 0.0
        %vm3366 = vcmp.gt.f32.partialorder %v3356, 0.0
        %vm3367 = vcmp.gt.f32.partialorder %v3358, 0.0
        %vm3368 = vcmp.gt.f32.partialorder %v3360, 0.0
        %v3369 = vsel %vm3361, %v3346, 1.0
        %v3370 = vsel %vm3362, %v3348, 1.0
        %v3371 = vsel %vm3363, %v3350, 1.0
        %v3372 = vsel %vm3364, %v3352, 1.0
        %v3373 = vsel %vm3365, %v3354, 1.0
        %v3374 = vsel %vm3366, %v3356, 1.0
        %v3375 = vsel %vm3367, %v3358, 1.0
        %v3376 = vsel %vm3368, %v3360, 1.0
        %v3377 = vrcp.pop %v3369
        %v3378 = vrcp.pop %v3370
        %v3379 = vrcp.pop %v3371
        %v3380 = vrcp.pop %v3372
        %v3381 = vrcp.pop %v3373
        %v3382 = vrcp.pop %v3374
        %v3383 = vrcp.pop %v3375
        %v3384 = vrcp.pop %v3376
        %v3385 = vmul.f32 %v3337, %v3377
        %v3386 = vmul.f32 %v3338, %v3378
        %v3387 = vmul.f32 %v3339, %v3379
        %v3388 = vmul.f32 %v3340, %v3380
        %v3389 = vmul.f32 %v3341, %v3381
        %v3390 = vmul.f32 %v3342, %v3382
        %v3391 = vmul.f32 %v3343, %v3383
        %v3392 = vmul.f32 %v3344, %v3384
        %v3393 = vpack.c.bf16 %v3386, %v3385
        %v3394 = vpack.c.bf16 %v3388, %v3387
        %v3395 = vpack.c.bf16 %v3390, %v3389
        %v3396 = vpack.c.bf16 %v3392, %v3391
        %s3397 = scalar_lea.vmem [#allocation2], 128
        %v3398 = vld [vmem:[%s3397] sm:$0xf]
        %v3399 = vld [vmem:[%s3397 + $0x4] sm:$0xf]
        %v3400 = vld [vmem:[%s3397 + $0x8] sm:$0xf]
        %v3401 = vld [vmem:[%s3397 + $0xc] sm:$0xf]
        %v3402 = vld [vmem:[%s3397 + $0x10] sm:$0xf]
        %v3403 = vld [vmem:[%s3397 + $0x14] sm:$0xf]
        %v3404 = vld [vmem:[%s3397 + $0x18] sm:$0xf]
        %v3405 = vld [vmem:[%s3397 + $0x1c] sm:$0xf]
        %v3406 = vld [vmem:[%s3397 + $0x20] sm:$0xf]
        %v3407 = vld [vmem:[%s3397 + $0x24] sm:$0xf]
        %v3408 = vld [vmem:[%s3397 + $0x28] sm:$0xf]
        %v3409 = vld [vmem:[%s3397 + $0x2c] sm:$0xf]
        %v3410 = vld [vmem:[%s3397 + $0x30] sm:$0xf]
        %v3411 = vld [vmem:[%s3397 + $0x34] sm:$0xf]
        %v3412 = vld [vmem:[%s3397 + $0x38] sm:$0xf]
        %v3413 = vld [vmem:[%s3397 + $0x3c] sm:$0xf]
        %v3430 = vunpack.c.l.b16 %v3398
        %v3431 = vunpack.c.l.b16 %v3399
        %v3432 = vunpack.c.l.b16 %v3400
        %v3433 = vunpack.c.l.b16 %v3401
        %v3434 = vunpack.c.l.b16 %v3402
        %v3435 = vunpack.c.l.b16 %v3403
        %v3436 = vunpack.c.l.b16 %v3404
        %v3437 = vunpack.c.l.b16 %v3405
        %v3438 = vunpack.c.l.b16 %v3406
        %v3439 = vunpack.c.l.b16 %v3407
        %v3440 = vunpack.c.l.b16 %v3408
        %v3441 = vunpack.c.l.b16 %v3409
        %v3442 = vunpack.c.l.b16 %v3410
        %v3443 = vunpack.c.l.b16 %v3411
        %v3444 = vunpack.c.l.b16 %v3412
        %v3445 = vunpack.c.l.b16 %v3413
        %v3446 = vpack.c.b16 %v3431, %v3430
        %v3447 = vpack.c.b16 %v3433, %v3432
        %v3448 = vpack.c.b16 %v3435, %v3434
        %v3449 = vpack.c.b16 %v3437, %v3436
        %v3450 = vpack.c.b16 %v3439, %v3438
        %v3451 = vpack.c.b16 %v3441, %v3440
        %v3452 = vpack.c.b16 %v3443, %v3442
        %v3453 = vpack.c.b16 %v3445, %v3444
        %3462 = vmatprep.subr.bf16.mxu0 0
        %3463 = vmatpush1.bf16.msra.mxu0 %v3446
        %3464 = vmatprep.subr.bf16.mxu0 0
        %3465 = vmatpush1.bf16.msra.mxu0 %v3447
        %3466 = vmatprep.subr.bf16.mxu0 0
        %3467 = vmatpush1.bf16.msra.mxu0 %v3448
        %3468 = vmatprep.subr.bf16.mxu0 0
        %3469 = vmatpush1.bf16.msra.mxu0 %v3449
        %3470 = vmatprep.subr.bf16.mxu0 0
        %3471 = vmatpush1.bf16.msra.mxu0 %v3450
        %3472 = vmatprep.subr.bf16.mxu0 0
        %3473 = vmatpush1.bf16.msra.mxu0 %v3451
        %3474 = vmatprep.subr.bf16.mxu0 0
        %3475 = vmatpush1.bf16.msra.mxu0 %v3452
        %3476 = vmatprep.subr.bf16.mxu0 0
        %3477 = vmatpush1.bf16.msra.mxu0 %v3453
        %3478 = vmatprep.subr.bf16.mxu0 0
        %3479 = vmatpush1.bf16.msra.mxu0 0
        %3480 = vmatprep.subr.bf16.mxu0 0
        %3481 = vmatpush1.bf16.msra.mxu0 0
        %3482 = vmatprep.subr.bf16.mxu0 0
        %3483 = vmatpush1.bf16.msra.mxu0 0
        %3484 = vmatprep.subr.bf16.mxu0 0
        %3485 = vmatpush1.bf16.msra.mxu0 0
        %3486 = vmatprep.subr.bf16.mxu0 0
        %3487 = vmatpush1.bf16.msra.mxu0 0
        %3488 = vmatprep.subr.bf16.mxu0 0
        %3489 = vmatpush1.bf16.msra.mxu0 0
        %3490 = vmatprep.subr.bf16.mxu0 0
        %3491 = vmatpush1.bf16.msra.mxu0 0
        %3492 = vmatprep.subr.bf16.mxu0 0
        %3493 = vmatpush1.bf16.msra.mxu0 0
        %3494 = vmatprep.mubr.bf16.mxu0 0
        %3495 = vmatmul.mubr.bf16.gmra.mrb[0].mxu0 %v3393
        %v3496 = vpop.f32.mrb[0].mxu0
        %v3497 = vadd.f32 0.0, %v3496
        %v3498 = vpop.f32.mrb[0].mxu0
        %v3499 = vpop.f32.mrb[0].mxu0
        %v3500 = vadd.f32 0.0, %v3499
        %v3501 = vpop.f32.mrb[0].mxu0
        %3502 = vmatprep.mubr.bf16.mxu0 0
        %3503 = vmatmul.mubr.bf16.gmra.mrb[0].mxu0 %v3394
        %v3504 = vpop.f32.mrb[0].mxu0
        %v3505 = vadd.f32 0.0, %v3504
        %v3506 = vpop.f32.mrb[0].mxu0
        %v3507 = vpop.f32.mrb[0].mxu0
        %v3508 = vadd.f32 0.0, %v3507
        %v3509 = vpop.f32.mrb[0].mxu0
        %3510 = vmatprep.mubr.bf16.mxu0 0
        %3511 = vmatmul.mubr.bf16.gmra.mrb[0].mxu0 %v3395
        %v3512 = vpop.f32.mrb[0].mxu0
        %v3513 = vadd.f32 0.0, %v3512
        %v3514 = vpop.f32.mrb[0].mxu0
        %v3515 = vpop.f32.mrb[0].mxu0
        %v3516 = vadd.f32 0.0, %v3515
        %v3517 = vpop.f32.mrb[0].mxu0
        %3518 = vmatprep.mubr.bf16.mxu0 0
        %3519 = vmatmul.mubr.bf16.gmra.mrb[0].mxu0 %v3396
        %v3520 = vpop.f32.mrb[0].mxu0
        %v3521 = vadd.f32 0.0, %v3520
        %v3522 = vpop.f32.mrb[0].mxu0
        %v3523 = vpop.f32.mrb[0].mxu0
        %v3524 = vadd.f32 0.0, %v3523
        %v3525 = vpop.f32.mrb[0].mxu0
        %3526 = vdwg.mxu0
        %v3527 = vadd.f32 %v2484, %v3497
        %v3528 = vadd.f32 %v2487, %v3500
        %v3529 = vadd.f32 %v2492, %v3505
        %v3530 = vadd.f32 %v2495, %v3508
        %v3531 = vadd.f32 %v2500, %v3513
        %v3532 = vadd.f32 %v2503, %v3516
        %v3533 = vadd.f32 %v2508, %v3521
        %v3534 = vadd.f32 %v2511, %v3524
        %v3535 = vld [vmem:[%s5] sm:$0x1]
        %v3537 = vlaneseq
        %v3538 = vshrl.u32 %v3537, 7
        %v3539 = vsub.s32 0, %v3538
        %v3540 = vrot.slane %v3535, %v3539
        %v3542 = vadd.f32 %v3527, %v3540
        %v3543 = vadd.f32 %v3528, %v3540
        %v3544 = vadd.f32 %v3529, %v3540
        %v3545 = vadd.f32 %v3530, %v3540
        %v3546 = vadd.f32 %v3531, %v3540
        %v3547 = vadd.f32 %v3532, %v3540
        %v3548 = vadd.f32 %v3533, %v3540
        %v3549 = vadd.f32 %v3534, %v3540
        %v3550 = vmax.f32 %v3542, 0.0
        %v3551 = vmax.f32 %v3543, 0.0
        %v3552 = vmax.f32 %v3544, 0.0
        %v3553 = vmax.f32 %v3545, 0.0
        %v3554 = vmax.f32 %v3546, 0.0
        %v3555 = vmax.f32 %v3547, 0.0
        %v3556 = vmax.f32 %v3548, 0.0
        %v3557 = vmax.f32 %v3549, 0.0
        %v3558 = vpack.c.bf16 %v3551, %v3550
        %v3559 = vpack.c.bf16 %v3553, %v3552
        %v3560 = vpack.c.bf16 %v3555, %v3554
        %v3561 = vpack.c.bf16 %v3557, %v3556
        %v3566 = vunpack.c.l.b16 %v3558
        %v3567 = vunpack.c.h.b16 %v3558
        %v3568 = vunpack.c.l.b16 %v3559
        %v3569 = vunpack.c.h.b16 %v3559
        %v3570 = vunpack.c.l.b16 %v3560
        %v3571 = vunpack.c.h.b16 %v3560
        %v3572 = vunpack.c.l.b16 %v3561
        %v3573 = vunpack.c.h.b16 %v3561
        %v3574 = vpack.c.b16 %v3566, %v3566
        %v3575 = vpack.c.b16 %v3567, %v3567
        %v3576 = vpack.c.b16 %v3568, %v3568
        %v3577 = vpack.c.b16 %v3569, %v3569
        %v3578 = vpack.c.b16 %v3570, %v3570
        %v3579 = vpack.c.b16 %v3571, %v3571
        %v3580 = vpack.c.b16 %v3572, %v3572
        %v3581 = vpack.c.b16 %v3573, %v3573
        %3590 = vst [vmem:[%s412] sm:$0xf] %v3574
        %3591 = vst [vmem:[%s412 + $0x4] sm:$0xf] %v3575
        %3592 = vst [vmem:[%s412 + $0x8] sm:$0xf] %v3576
        %3593 = vst [vmem:[%s412 + $0xc] sm:$0xf] %v3577
        %3594 = vst [vmem:[%s412 + $0x10] sm:$0xf] %v3578
        %3595 = vst [vmem:[%s412 + $0x14] sm:$0xf] %v3579
        %3596 = vst [vmem:[%s412 + $0x18] sm:$0xf] %v3580
        %3597 = vst [vmem:[%s412 + $0x1c] sm:$0xf] %v3581
        %s3598 = sand.u32 %s238, 1
        %s3599 = scalar_lea.sflag [#allocation4], %s3598
        %s3600 = sand.u32 %s238, 1
        %s3601 = smul.addr %s3600, 32
        %s3602 = scalar_lea.vmem [#allocation10], %s3601
        // Predicated region
        $region73: #{tpu_custom_call.1} parent=55 // pred_check
          %p3603 = pneg %p248
        $region74: #{tpu_custom_call.1} parent=55 // pred_check_branch
          %3605 = sbr.rel (%p3603) target = $region76
        $region75: #{tpu_custom_call.1} parent=55 // pred_region
          %s3606 = smul.u32 8, %s26
          %s3608 = ssub.s32 512, 512
          %3609 = vsyncadd %s3599, %s3608
          %s3610 = smul.addr %s3606, 64
          %s3611 = scalar_lea.hbm %s9, %s3610
          %s3612 = sshll.u32 %s3602, 4
          %s3613 = int_to_ptr.vmem [resolvable:$true] %s3612
          %3618 = dma.vmem_to_hbm [thread:$0]  %s3613, 512, %s3611, %s3599, 64, 64, 4
        $region76: #{tpu_custom_call.1} parent=55 // pred_fallthru
          _
      $region56: #{tpu_custom_call.1} parent=5 // pred_fallthru
        _
      %p3619 = scmp.le.s32.totalorder 2, %s21
      // Predicated region
      $region77: #{tpu_custom_call.1} parent=5 // pred_check
        %p3620 = pneg %p3619
      $region78: #{tpu_custom_call.1} parent=5 // pred_check_branch
        %3622 = sbr.rel (%p3620) target = $region80
      $region79: #{tpu_custom_call.1} parent=5 // pred_region
        %s3623 = ssub.s32 %s21, 2
        // Predicated region
        $region81: #{tpu_custom_call.1} parent=79 // pred_check
          %p3624 = pneg %p254
        $region82: #{tpu_custom_call.1} parent=79 // pred_check_branch
          %3626 = sbr.rel (%p3624) target = $region84
        $region83: #{tpu_custom_call.1} parent=79 // pred_region
          %s3627 = sand.u32 %s239, 1
          %s3628 = scalar_lea.sflag [#allocation4], %s3627
          %s3629 = sand.u32 %s239, 1
          %s3630 = smul.addr %s3629, 32
          %s3631 = scalar_lea.vmem [#allocation10], %s3630
          %3632 = dma.done %s3628, 512
        $region84: #{tpu_custom_call.1} parent=79 // pred_fallthru
          _
      $region80: #{tpu_custom_call.1} parent=5 // pred_fallthru
        _
    $region6: #{tpu_custom_call.1} parent=1 // loop_footer
      %s25 = sadd.s32 1, %s21
    $region7: #{tpu_custom_call.1} parent=1 // loop_footer_branch
      %20 = sbr.rel target = $region3
    $region8: #{tpu_custom_call.1} parent=1 // loop_exit
      _
    %3633 = vsyncpa [#allocation3], 1
    %s3634 = scalar_lea.sflag [#allocation3], 1
    %3635 = vsyncpa %s3634, 1
    %3636 = vsyncpa [#allocation4], 1
    %s3637 = scalar_lea.sflag [#allocation4], 1
    %3638 = vsyncpa %s3637, 1
    %3639 = vsyncpa [#allocation5], 1
    %s3640 = scalar_lea.sflag [#allocation5], 1
    %3641 = vsyncpa %s3640, 1
    %3642 = vsyncpa [#allocation8], 1

</llo_original>
